<compile_context>
chip_gen: v6e
topology: v6e:2x2x1
jax: 0.10.0
libtpu: 0.0.40
codegen_flags: <defaults>
</compile_context>

<pallas_src>
import functools

import jax
import jax.numpy as jnp
import numpy as np
from jax import lax
from jax.experimental import pallas as pl
from jax.experimental.pallas import tpu as pltpu


# ----------------------------------------------------------------------------
# In-kernel depthwise conv pieces on the channel-major lane layout (c*W + w).
# ----------------------------------------------------------------------------
def _lane_rolls(t, p):
    """Lane-rolled copies of t for horizontal read offsets dx in [-p, p]."""
    L = t.shape[1]
    return [t if dx == 0 else pltpu.roll(t, shift=(-dx) % L, axis=1)
            for dx in range(-p, p + 1)]


def _dwconv_rolled(rolled, taps, shifts, k):
    """Depthwise conv, stride 1, 'same' zero padding, lane layout c*W + w.

    rolled: list of 2*pr+1 lane-rolled copies of the input (pr >= k//2),
            entry j holding horizontal read offset dx = j - pr.
    taps:   (k*k, L) per-lane weights; zeros already folded in at lanes whose
            horizontal read position falls outside the image, so the lane
            roll can wrap freely (including across channels) without masking.
    shifts: (5, R, R) block-diagonal row-shift matrices; shifts[2+dy] @ u ==
            u shifted by dy rows with exact zero fill at each image's border
            and no mixing between the folded batch images.
    """
    pr = (len(rolled) - 1) // 2
    p = k // 2
    acc = None
    for iy in range(k):
        dy = iy - p
        u = None
        for ix in range(k):
            r = iy * k + ix
            term = rolled[pr - p + ix] * taps[r:r + 1, :]
            u = term if u is None else u + term
        if dy != 0:
            # Vertical shift with zero fill as a small MXU matmul (no sublane
            # roll / relayout, exact at the image border).
            u = jnp.dot(shifts[dy + 2], u, preferred_element_type=jnp.float32)
        acc = u if acc is None else acc + u
    return acc


# ----------------------------------------------------------------------------
# Kernel body (Bt batch elements per grid step).
# ----------------------------------------------------------------------------
def _feedforward_kernel(Lh, x_ref, win_ref, t3_ref, t5_ref,
                        tA_ref, tB_ref, wout_ref, sh_ref, o_ref):
    shifts = sh_ref[...]
    x = x_ref[...]                                     # (Bt*H, C*W)

    # project_in: block-diagonal (C*W, Hf*W) weight keeps the lane layout.
    y = jnp.dot(x, win_ref[...], preferred_element_type=jnp.float32)

    # First depthwise stage (shared lane rolls) + SimpleGate (the channel
    # halves land exactly on a 128-lane boundary).
    ry = _lane_rolls(y, 2)
    d3 = _dwconv_rolled(ry, t3_ref[...], shifts, 3)
    d5 = _dwconv_rolled(ry, t5_ref[...], shifts, 5)
    g3 = d3[:, :Lh] * d3[:, Lh:]
    g5 = d5[:, :Lh] * d5[:, Lh:]

    # Fused grouped convs + gate: one 25-tap dwconv on [g3|g3] with taps
    # [ue|uo] and one on [g5|g5] with [ve|vo]; z = [ze|zo] in one tensor.
    g3d = jnp.concatenate([g3, g3], axis=1)            # (Bt*H, Hf*W)
    g5d = jnp.concatenate([g5, g5], axis=1)
    a = _dwconv_rolled(_lane_rolls(g3d, 2), tA_ref[...], shifts, 5)
    b = _dwconv_rolled(_lane_rolls(g5d, 2), tB_ref[...], shifts, 5)
    z = a * b                                          # [even z | odd z]

    # project_out: single K = Hf*W matmul (the z concat / channel interleave
    # is folded into the stacked even/odd weight).
    out = jnp.dot(z, wout_ref[...], preferred_element_type=jnp.float32)
    o_ref[...] = out.astype(o_ref.dtype)


# ----------------------------------------------------------------------------
# Host-side weight preparation.
# ----------------------------------------------------------------------------
def _tap_weights(per_channel_k, k, W):
    """(CH, k, k) -> (k*k, CH*W) with horizontal-border zeros folded in."""
    wc = np.asarray(per_channel_k, np.float32)
    p = k // 2
    taps = np.zeros((k * k, wc.shape[0] * W), np.float32)
    for iy in range(k):
        for ix in range(k):
            dx = ix - p
            valid = np.zeros((W,), np.float32)
            valid[max(0, -dx): min(W, W - dx)] = 1.0
            taps[iy * k + ix] = (wc[:, iy, ix][:, None] * valid[None, :]).reshape(-1)
    return taps


def _embed_3_in_5(w3):
    """(CH, 3, 3) -> (CH, 5, 5) with the 3x3 kernel centered (zero border)."""
    out = np.zeros(w3.shape[:-2] + (5, 5), np.float32)
    out[..., 1:4, 1:4] = w3
    return out


def _pick_batch_tile(N, H):
    """Fold images per grid step: amortize per-step overhead and raise matmul
    M, but keep Bt*H <= 32 (vreg pressure from 5 rolled (Bt*H, Hf*W) f32
    copies) and prefer >= 2 grid steps (v7x has 2 TensorCores)."""
    max_bt = max(1, 32 // H)
    for bt in range(max_bt, 0, -1):
        if N % bt == 0 and N // bt >= 2:
            return bt
    for bt in range(max_bt, 0, -1):
        if N % bt == 0:
            return bt
    return 1


def feedforward_pallas(x_nchw, params, batch_tile=None):
    """x_nchw: (N, C, H, W) f32; params in the PyTorch OIHW / depthwise layouts."""
    w_in, w3, w5, w31, w51, w_out = params
    N, C, H, W = x_nchw.shape
    Hf = w_in.shape[0]
    assert Hf % 4 == 0, "hidden_features must be a multiple of 4"
    Hh2, Hh4 = Hf // 2, Hf // 4
    Lh = Hh2 * W

    if batch_tile is None:
        batch_tile = _pick_batch_tile(N, H)
    assert N % batch_tile == 0
    rows = batch_tile * H

    # ---- host-side weight prep (all layout work kept off the TPU) ----
    w_in_np = np.asarray(w_in, np.float32).reshape(Hf, C)
    w3_np = np.asarray(w3, np.float32).reshape(Hf, 3, 3)
    w5_np = np.asarray(w5, np.float32).reshape(Hf, 5, 5)
    w31_np = np.asarray(w31, np.float32).reshape(Hf, 3, 3)
    w51_np = np.asarray(w51, np.float32).reshape(Hf, 5, 5)
    w_out_np = np.asarray(w_out, np.float32).reshape(C, Hf)

    eyeW = np.eye(W, dtype=np.float32)
    # TODO(synk): the Kronecker form inflates K/N by W; replace with a true
    # (rows, C) x (C, Hf) channel contraction before scaling W up (first VMEM
    # hazard on v7x's 64 MiB).
    win_big = np.kron(w_in_np.T, eyeW)                      # (C*W, Hf*W)
    woe_big = np.kron(w_out_np[:, 0::2].T, eyeW)            # (Lh, C*W)
    woo_big = np.kron(w_out_np[:, 1::2].T, eyeW)            # (Lh, C*W)
    wout_big = np.concatenate([woe_big, woo_big], axis=0)   # (Hf*W, C*W)

    taps3 = _tap_weights(w3_np, 3, W)                       # (9,  Hf*W)
    taps5 = _tap_weights(w5_np, 5, W)                       # (25, Hf*W)

    # Grouped conv (out channel o reads in channel o//2) + SimpleGate +
    # cross-concat, split into even / odd z channels:
    #   z[2j]   = dwK(g3[j], wA[2j])   * dwK(g5[j], wB[2j])
    #   z[2j+1] = dwK(g3[j], wA[2j+1]) * dwK(g5[j], wB[2j+1])
    # with K=3 (w31, embedded in the 5x5 tap grid) for j < Hf/4 else K=5 (w51).
    w31e = _embed_3_in_5(w31_np)                            # (Hf, 5, 5)
    ue = np.empty((Hh2, 5, 5), np.float32)
    uo = np.empty((Hh2, 5, 5), np.float32)
    ve = np.empty((Hh2, 5, 5), np.float32)
    vo = np.empty((Hh2, 5, 5), np.float32)
    for j in range(Hh2):
        if j < Hh4:
            ue[j] = w31e[2 * j]
            uo[j] = w31e[2 * j + 1]
            ve[j] = w31e[2 * j + Hh2]
            vo[j] = w31e[2 * j + 1 + Hh2]
        else:
            ue[j] = w51_np[2 * j - Hh2]
            uo[j] = w51_np[2 * j + 1 - Hh2]
            ve[j] = w51_np[2 * j]
            vo[j] = w51_np[2 * j + 1]
    # Fused taps for the lane-duplicated inputs [g3|g3] / [g5|g5].
    taps_a = np.concatenate([_tap_weights(ue, 5, W), _tap_weights(uo, 5, W)], axis=1)
    taps_b = np.concatenate([_tap_weights(ve, 5, W), _tap_weights(vo, 5, W)], axis=1)
    # TODO(synk): channels j < Hf/4 only have 3x3 support; skip their 16 zero
    # taps once Hf/4*W is a multiple of 128 lanes (it is 64 in this test).

    # Block-diagonal row-shift matrices over the Bt folded images.
    shifts = np.stack([
        np.kron(np.eye(batch_tile, dtype=np.float32),
                np.eye(H, k=dy, dtype=np.float32))
        for dy in range(-2, 3)])                            # (5, rows, rows)

    # ---- lane-dense input layout: (N*H, C*W), lane index = c*W + w ----
    x_l = jnp.transpose(x_nchw.astype(jnp.float32), (0, 2, 1, 3)).reshape(N * H, C * W)

    kernel = functools.partial(_feedforward_kernel, Lh)

    def _const(shape):
        nd = len(shape)
        # TODO(synk): on v7x, pipeline_mode=pl.Buffered(1) would single-buffer
        # these grid-invariant weights; negligible at these sizes.
        return pl.BlockSpec(shape, lambda n, _nd=nd: (0,) * _nd)

    out_l = pl.pallas_call(
        kernel,
        out_shape=jax.ShapeDtypeStruct((N * H, C * W), jnp.float32),
        grid=(N // batch_tile,),
        in_specs=[
            pl.BlockSpec((rows, C * W), lambda n: (n, 0)),   # x (lane-dense slab)
            _const((C * W, Hf * W)),                         # project_in (Kron)
            _const((9, Hf * W)),                             # dwconv3x3 taps
            _const((25, Hf * W)),                            # dwconv5x5 taps
            _const((25, Hf * W)),                            # fused grouped taps [ue|uo]
            _const((25, Hf * W)),                            # fused grouped taps [ve|vo]
            _const((Hf * W, C * W)),                         # project_out (stacked even/odd)
            _const((5, rows, rows)),                         # block-diag row-shift mats
        ],
        out_specs=pl.BlockSpec((rows, C * W), lambda n: (n, 0)),
        compiler_params=pltpu.CompilerParams(
            dimension_semantics=("parallel",)),
        # TODO(synk): raise vmem_limit_bytes for production H/W/Hf/Bt.
    )(x_l, jnp.asarray(win_big), jnp.asarray(taps3), jnp.asarray(taps5),
      jnp.asarray(taps_a), jnp.asarray(taps_b), jnp.asarray(wout_big),
      jnp.asarray(shifts))

    return jnp.transpose(out_l.reshape(N, H, C, W), (0, 2, 1, 3))   # back to NCHW


# ----------------------------------------------------------------------------
# Pure-JAX NCHW reference matching the PyTorch FeedForward module exactly.
# ----------------------------------------------------------------------------
def feedforward_ref(x, params):
    w_in, w3, w5, w31, w51, w_out = params
    Hf = w_in.shape[0]
    dn = ("NCHW", "OIHW", "NCHW")

    def conv(t, w, pad, groups):
        return lax.conv_general_dilated(
            t, w, window_strides=(1, 1), padding=[(pad, pad), (pad, pad)],
            dimension_numbers=dn, feature_group_count=groups)

    def gate(t):
        a, b = jnp.split(t, 2, axis=1)
        return a * b

    y = conv(x, w_in, 0, 1)
    g3 = gate(conv(y, w3, 1, Hf))
    g5 = gate(conv(y, w5, 2, Hf))
    x1_3, x2_3 = jnp.split(g3, 2, axis=1)
    x1_5, x2_5 = jnp.split(g5, 2, axis=1)
    x1 = jnp.concatenate([x1_3, x1_5], axis=1)
    x2 = jnp.concatenate([x2_3, x2_5], axis=1)
    y1 = gate(conv(x1, w31, 1, Hf // 2))
    y2 = gate(conv(x2, w51, 2, Hf // 2))
    z = jnp.concatenate([y1, y2], axis=1)
    return conv(z, w_out, 0, 1)


if __name__ == "__main__":
    key = jax.random.PRNGKey(0)
    N, dim, H, W = 4, 8, 16, 16          # N=4 -> Bt=2 per step, grid of 2
    ffn_expansion_factor = 2
    Hf = int(dim * ffn_expansion_factor)

    ks = jax.random.split(key, 7)
    x = jax.random.normal(ks[0], (N, dim, H, W), jnp.float32)
    scale = 0.1
    params = (
        jax.random.normal(ks[1], (Hf, dim, 1, 1), jnp.float32) * scale,  # project_in
        jax.random.normal(ks[2], (Hf, 1, 3, 3), jnp.float32) * scale,    # dwconv3x3
        jax.random.normal(ks[3], (Hf, 1, 5, 5), jnp.float32) * scale,    # dwconv5x5
        jax.random.normal(ks[4], (Hf, 1, 3, 3), jnp.float32) * scale,    # dwconv3x3_1
        jax.random.normal(ks[5], (Hf, 1, 5, 5), jnp.float32) * scale,    # dwconv5x5_1
        jax.random.normal(ks[6], (dim, Hf, 1, 1), jnp.float32) * scale,  # project_out
    )

    out = feedforward_pallas(x, params)
    out = jax.block_until_ready(out)

    ref = feedforward_ref(x, params)
    np.testing.assert_allclose(np.asarray(out), np.asarray(ref),
                               rtol=1e-4, atol=1e-4)
    print("KERNEL_OK")
</pallas_src>

<mosaic_0001>
module attributes {stable_mosaic.version = 11 : i64} {
  func.func @_feedforward_kernel(%arg0: i32, %arg1: memref<32x128xf32, #tpu.memory_space<vmem>>, %arg2: memref<128x256xf32, #tpu.memory_space<vmem>>, %arg3: memref<9x256xf32, #tpu.memory_space<vmem>>, %arg4: memref<25x256xf32, #tpu.memory_space<vmem>>, %arg5: memref<25x256xf32, #tpu.memory_space<vmem>>, %arg6: memref<25x256xf32, #tpu.memory_space<vmem>>, %arg7: memref<256x128xf32, #tpu.memory_space<vmem>>, %arg8: memref<5x32x32xf32, #tpu.memory_space<vmem>>, %arg9: memref<32x128xf32, #tpu.memory_space<vmem>>) attributes {dimension_semantics = [#tpu.dimension_semantics<parallel>], iteration_bounds = array<i64: 2>, scalar_prefetch = 0 : i64, scratch_operands = 0 : i64, tpu.core_type = #tpu.core_type<tc>, window_params = [{transform_indices = @transform_0, window_bounds = array<i64: 32, 128>}, {pipeline_mode = #tpu.pipeline_mode<synchronous>, transform_indices = @transform_1, window_bounds = array<i64: 128, 256>}, {pipeline_mode = #tpu.pipeline_mode<synchronous>, transform_indices = @transform_2, window_bounds = array<i64: 9, 256>}, {pipeline_mode = #tpu.pipeline_mode<synchronous>, transform_indices = @transform_3, window_bounds = array<i64: 25, 256>}, {pipeline_mode = #tpu.pipeline_mode<synchronous>, transform_indices = @transform_4, window_bounds = array<i64: 25, 256>}, {pipeline_mode = #tpu.pipeline_mode<synchronous>, transform_indices = @transform_5, window_bounds = array<i64: 25, 256>}, {pipeline_mode = #tpu.pipeline_mode<synchronous>, transform_indices = @transform_6, window_bounds = array<i64: 256, 128>}, {pipeline_mode = #tpu.pipeline_mode<synchronous>, transform_indices = @transform_7, window_bounds = array<i64: 5, 32, 32>}, {transform_indices = @transform_8, window_bounds = array<i64: 32, 128>}]} {
    %c0 = arith.constant 0 : index
    %c0_0 = arith.constant 0 : index
    %c0_1 = arith.constant 0 : index
    %0 = vector.load %arg8[%c0, %c0_0, %c0_1] : memref<5x32x32xf32, #tpu.memory_space<vmem>>, vector<5x32x32xf32>
    %c0_2 = arith.constant 0 : index
    %c0_3 = arith.constant 0 : index
    %1 = vector.load %arg1[%c0_2, %c0_3] : memref<32x128xf32, #tpu.memory_space<vmem>>, vector<32x128xf32>
    %c0_4 = arith.constant 0 : index
    %c0_5 = arith.constant 0 : index
    %2 = vector.load %arg2[%c0_4, %c0_5] : memref<128x256xf32, #tpu.memory_space<vmem>>, vector<128x256xf32>
    %cst = arith.constant dense<0.000000e+00> : vector<32x256xf32>
    %3 = tpu.matmul %1, %2, %cst {dimension_numbers = #tpu.dot_dimension_numbers<[1], [0], [0], [1], [0, 0, 1, 1], [], []>} : vector<32x128xf32>, vector<128x256xf32>, vector<32x256xf32> -> vector<32x256xf32>
    %c2_i32 = arith.constant 2 : i32
    %4 = tpu.dynamic_rotate %3 by %c2_i32 dim 1 : vector<32x256xf32>, i32 -> vector<32x256xf32>
    %c1_i32 = arith.constant 1 : i32
    %5 = tpu.dynamic_rotate %3 by %c1_i32 dim 1 : vector<32x256xf32>, i32 -> vector<32x256xf32>
    %c255_i32 = arith.constant 255 : i32
    %6 = tpu.dynamic_rotate %3 by %c255_i32 dim 1 : vector<32x256xf32>, i32 -> vector<32x256xf32>
    %c254_i32 = arith.constant 254 : i32
    %7 = tpu.dynamic_rotate %3 by %c254_i32 dim 1 : vector<32x256xf32>, i32 -> vector<32x256xf32>
    %c0_6 = arith.constant 0 : index
    %c0_7 = arith.constant 0 : index
    %8 = vector.load %arg3[%c0_6, %c0_7] : memref<9x256xf32, #tpu.memory_space<vmem>>, vector<9x256xf32>
    %9 = vector.extract_strided_slice %8 {offsets = [0, 0], sizes = [1, 256], strides = [1, 1]} : vector<9x256xf32> to vector<1x256xf32>
    %10 = vector.broadcast %9 : vector<1x256xf32> to vector<32x256xf32>
    %11 = arith.mulf %5, %10 : vector<32x256xf32>
    %12 = vector.extract_strided_slice %8 {offsets = [1, 0], sizes = [1, 256], strides = [1, 1]} : vector<9x256xf32> to vector<1x256xf32>
    %13 = vector.broadcast %12 : vector<1x256xf32> to vector<32x256xf32>
    %14 = arith.mulf %3, %13 : vector<32x256xf32>
    %15 = arith.addf %11, %14 : vector<32x256xf32>
    %16 = vector.extract_strided_slice %8 {offsets = [2, 0], sizes = [1, 256], strides = [1, 1]} : vector<9x256xf32> to vector<1x256xf32>
    %17 = vector.broadcast %16 : vector<1x256xf32> to vector<32x256xf32>
    %18 = arith.mulf %6, %17 : vector<32x256xf32>
    %19 = arith.addf %15, %18 : vector<32x256xf32>
    %20 = vector.extract_strided_slice %0 {offsets = [1, 0, 0], sizes = [1, 32, 32], strides = [1, 1, 1]} : vector<5x32x32xf32> to vector<1x32x32xf32>
    %21 = vector.shape_cast %20 : vector<1x32x32xf32> to vector<32x32xf32>
    %cst_8 = arith.constant dense<0.000000e+00> : vector<32x256xf32>
    %22 = tpu.matmul %21, %19, %cst_8 {dimension_numbers = #tpu.dot_dimension_numbers<[1], [0], [0], [1], [0, 0, 1, 1], [], []>} : vector<32x32xf32>, vector<32x256xf32>, vector<32x256xf32> -> vector<32x256xf32>
    %23 = vector.extract_strided_slice %8 {offsets = [3, 0], sizes = [1, 256], strides = [1, 1]} : vector<9x256xf32> to vector<1x256xf32>
    %24 = vector.broadcast %23 : vector<1x256xf32> to vector<32x256xf32>
    %25 = arith.mulf %5, %24 : vector<32x256xf32>
    %26 = vector.extract_strided_slice %8 {offsets = [4, 0], sizes = [1, 256], strides = [1, 1]} : vector<9x256xf32> to vector<1x256xf32>
    %27 = vector.broadcast %26 : vector<1x256xf32> to vector<32x256xf32>
    %28 = arith.mulf %3, %27 : vector<32x256xf32>
    %29 = arith.addf %25, %28 : vector<32x256xf32>
    %30 = vector.extract_strided_slice %8 {offsets = [5, 0], sizes = [1, 256], strides = [1, 1]} : vector<9x256xf32> to vector<1x256xf32>
    %31 = vector.broadcast %30 : vector<1x256xf32> to vector<32x256xf32>
    %32 = arith.mulf %6, %31 : vector<32x256xf32>
    %33 = arith.addf %29, %32 : vector<32x256xf32>
    %34 = arith.addf %22, %33 : vector<32x256xf32>
    %35 = vector.extract_strided_slice %8 {offsets = [6, 0], sizes = [1, 256], strides = [1, 1]} : vector<9x256xf32> to vector<1x256xf32>
    %36 = vector.broadcast %35 : vector<1x256xf32> to vector<32x256xf32>
    %37 = arith.mulf %5, %36 : vector<32x256xf32>
    %38 = vector.extract_strided_slice %8 {offsets = [7, 0], sizes = [1, 256], strides = [1, 1]} : vector<9x256xf32> to vector<1x256xf32>
    %39 = vector.broadcast %38 : vector<1x256xf32> to vector<32x256xf32>
    %40 = arith.mulf %3, %39 : vector<32x256xf32>
    %41 = arith.addf %37, %40 : vector<32x256xf32>
    %42 = vector.extract_strided_slice %8 {offsets = [8, 0], sizes = [1, 256], strides = [1, 1]} : vector<9x256xf32> to vector<1x256xf32>
    %43 = vector.broadcast %42 : vector<1x256xf32> to vector<32x256xf32>
    %44 = arith.mulf %6, %43 : vector<32x256xf32>
    %45 = arith.addf %41, %44 : vector<32x256xf32>
    %46 = vector.extract_strided_slice %0 {offsets = [3, 0, 0], sizes = [1, 32, 32], strides = [1, 1, 1]} : vector<5x32x32xf32> to vector<1x32x32xf32>
    %47 = vector.shape_cast %46 : vector<1x32x32xf32> to vector<32x32xf32>
    %cst_9 = arith.constant dense<0.000000e+00> : vector<32x256xf32>
    %48 = tpu.matmul %47, %45, %cst_9 {dimension_numbers = #tpu.dot_dimension_numbers<[1], [0], [0], [1], [0, 0, 1, 1], [], []>} : vector<32x32xf32>, vector<32x256xf32>, vector<32x256xf32> -> vector<32x256xf32>
    %49 = arith.addf %34, %48 : vector<32x256xf32>
    %c0_10 = arith.constant 0 : index
    %c0_11 = arith.constant 0 : index
    %50 = vector.load %arg4[%c0_10, %c0_11] : memref<25x256xf32, #tpu.memory_space<vmem>>, vector<25x256xf32>
    %51 = vector.extract_strided_slice %50 {offsets = [0, 0], sizes = [1, 256], strides = [1, 1]} : vector<25x256xf32> to vector<1x256xf32>
    %52 = vector.broadcast %51 : vector<1x256xf32> to vector<32x256xf32>
    %53 = arith.mulf %4, %52 : vector<32x256xf32>
    %54 = vector.extract_strided_slice %50 {offsets = [1, 0], sizes = [1, 256], strides = [1, 1]} : vector<25x256xf32> to vector<1x256xf32>
    %55 = vector.broadcast %54 : vector<1x256xf32> to vector<32x256xf32>
    %56 = arith.mulf %5, %55 : vector<32x256xf32>
    %57 = arith.addf %53, %56 : vector<32x256xf32>
    %58 = vector.extract_strided_slice %50 {offsets = [2, 0], sizes = [1, 256], strides = [1, 1]} : vector<25x256xf32> to vector<1x256xf32>
    %59 = vector.broadcast %58 : vector<1x256xf32> to vector<32x256xf32>
    %60 = arith.mulf %3, %59 : vector<32x256xf32>
    %61 = arith.addf %57, %60 : vector<32x256xf32>
    %62 = vector.extract_strided_slice %50 {offsets = [3, 0], sizes = [1, 256], strides = [1, 1]} : vector<25x256xf32> to vector<1x256xf32>
    %63 = vector.broadcast %62 : vector<1x256xf32> to vector<32x256xf32>
    %64 = arith.mulf %6, %63 : vector<32x256xf32>
    %65 = arith.addf %61, %64 : vector<32x256xf32>
    %66 = vector.extract_strided_slice %50 {offsets = [4, 0], sizes = [1, 256], strides = [1, 1]} : vector<25x256xf32> to vector<1x256xf32>
    %67 = vector.broadcast %66 : vector<1x256xf32> to vector<32x256xf32>
    %68 = arith.mulf %7, %67 : vector<32x256xf32>
    %69 = arith.addf %65, %68 : vector<32x256xf32>
    %70 = vector.extract_strided_slice %0 {offsets = [0, 0, 0], sizes = [1, 32, 32], strides = [1, 1, 1]} : vector<5x32x32xf32> to vector<1x32x32xf32>
    %71 = vector.shape_cast %70 : vector<1x32x32xf32> to vector<32x32xf32>
    %cst_12 = arith.constant dense<0.000000e+00> : vector<32x256xf32>
    %72 = tpu.matmul %71, %69, %cst_12 {dimension_numbers = #tpu.dot_dimension_numbers<[1], [0], [0], [1], [0, 0, 1, 1], [], []>} : vector<32x32xf32>, vector<32x256xf32>, vector<32x256xf32> -> vector<32x256xf32>
    %73 = vector.extract_strided_slice %50 {offsets = [5, 0], sizes = [1, 256], strides = [1, 1]} : vector<25x256xf32> to vector<1x256xf32>
    %74 = vector.broadcast %73 : vector<1x256xf32> to vector<32x256xf32>
    %75 = arith.mulf %4, %74 : vector<32x256xf32>
    %76 = vector.extract_strided_slice %50 {offsets = [6, 0], sizes = [1, 256], strides = [1, 1]} : vector<25x256xf32> to vector<1x256xf32>
    %77 = vector.broadcast %76 : vector<1x256xf32> to vector<32x256xf32>
    %78 = arith.mulf %5, %77 : vector<32x256xf32>
    %79 = arith.addf %75, %78 : vector<32x256xf32>
    %80 = vector.extract_strided_slice %50 {offsets = [7, 0], sizes = [1, 256], strides = [1, 1]} : vector<25x256xf32> to vector<1x256xf32>
    %81 = vector.broadcast %80 : vector<1x256xf32> to vector<32x256xf32>
    %82 = arith.mulf %3, %81 : vector<32x256xf32>
    %83 = arith.addf %79, %82 : vector<32x256xf32>
    %84 = vector.extract_strided_slice %50 {offsets = [8, 0], sizes = [1, 256], strides = [1, 1]} : vector<25x256xf32> to vector<1x256xf32>
    %85 = vector.broadcast %84 : vector<1x256xf32> to vector<32x256xf32>
    %86 = arith.mulf %6, %85 : vector<32x256xf32>
    %87 = arith.addf %83, %86 : vector<32x256xf32>
    %88 = vector.extract_strided_slice %50 {offsets = [9, 0], sizes = [1, 256], strides = [1, 1]} : vector<25x256xf32> to vector<1x256xf32>
    %89 = vector.broadcast %88 : vector<1x256xf32> to vector<32x256xf32>
    %90 = arith.mulf %7, %89 : vector<32x256xf32>
    %91 = arith.addf %87, %90 : vector<32x256xf32>
    %92 = vector.extract_strided_slice %0 {offsets = [1, 0, 0], sizes = [1, 32, 32], strides = [1, 1, 1]} : vector<5x32x32xf32> to vector<1x32x32xf32>
    %93 = vector.shape_cast %92 : vector<1x32x32xf32> to vector<32x32xf32>
    %cst_13 = arith.constant dense<0.000000e+00> : vector<32x256xf32>
    %94 = tpu.matmul %93, %91, %cst_13 {dimension_numbers = #tpu.dot_dimension_numbers<[1], [0], [0], [1], [0, 0, 1, 1], [], []>} : vector<32x32xf32>, vector<32x256xf32>, vector<32x256xf32> -> vector<32x256xf32>
    %95 = arith.addf %72, %94 : vector<32x256xf32>
    %96 = vector.extract_strided_slice %50 {offsets = [10, 0], sizes = [1, 256], strides = [1, 1]} : vector<25x256xf32> to vector<1x256xf32>
    %97 = vector.broadcast %96 : vector<1x256xf32> to vector<32x256xf32>
    %98 = arith.mulf %4, %97 : vector<32x256xf32>
    %99 = vector.extract_strided_slice %50 {offsets = [11, 0], sizes = [1, 256], strides = [1, 1]} : vector<25x256xf32> to vector<1x256xf32>
    %100 = vector.broadcast %99 : vector<1x256xf32> to vector<32x256xf32>
    %101 = arith.mulf %5, %100 : vector<32x256xf32>
    %102 = arith.addf %98, %101 : vector<32x256xf32>
    %103 = vector.extract_strided_slice %50 {offsets = [12, 0], sizes = [1, 256], strides = [1, 1]} : vector<25x256xf32> to vector<1x256xf32>
    %104 = vector.broadcast %103 : vector<1x256xf32> to vector<32x256xf32>
    %105 = arith.mulf %3, %104 : vector<32x256xf32>
    %106 = arith.addf %102, %105 : vector<32x256xf32>
    %107 = vector.extract_strided_slice %50 {offsets = [13, 0], sizes = [1, 256], strides = [1, 1]} : vector<25x256xf32> to vector<1x256xf32>
    %108 = vector.broadcast %107 : vector<1x256xf32> to vector<32x256xf32>
    %109 = arith.mulf %6, %108 : vector<32x256xf32>
    %110 = arith.addf %106, %109 : vector<32x256xf32>
    %111 = vector.extract_strided_slice %50 {offsets = [14, 0], sizes = [1, 256], strides = [1, 1]} : vector<25x256xf32> to vector<1x256xf32>
    %112 = vector.broadcast %111 : vector<1x256xf32> to vector<32x256xf32>
    %113 = arith.mulf %7, %112 : vector<32x256xf32>
    %114 = arith.addf %110, %113 : vector<32x256xf32>
    %115 = arith.addf %95, %114 : vector<32x256xf32>
    %116 = vector.extract_strided_slice %50 {offsets = [15, 0], sizes = [1, 256], strides = [1, 1]} : vector<25x256xf32> to vector<1x256xf32>
    %117 = vector.broadcast %116 : vector<1x256xf32> to vector<32x256xf32>
    %118 = arith.mulf %4, %117 : vector<32x256xf32>
    %119 = vector.extract_strided_slice %50 {offsets = [16, 0], sizes = [1, 256], strides = [1, 1]} : vector<25x256xf32> to vector<1x256xf32>
    %120 = vector.broadcast %119 : vector<1x256xf32> to vector<32x256xf32>
    %121 = arith.mulf %5, %120 : vector<32x256xf32>
    %122 = arith.addf %118, %121 : vector<32x256xf32>
    %123 = vector.extract_strided_slice %50 {offsets = [17, 0], sizes = [1, 256], strides = [1, 1]} : vector<25x256xf32> to vector<1x256xf32>
    %124 = vector.broadcast %123 : vector<1x256xf32> to vector<32x256xf32>
    %125 = arith.mulf %3, %124 : vector<32x256xf32>
    %126 = arith.addf %122, %125 : vector<32x256xf32>
    %127 = vector.extract_strided_slice %50 {offsets = [18, 0], sizes = [1, 256], strides = [1, 1]} : vector<25x256xf32> to vector<1x256xf32>
    %128 = vector.broadcast %127 : vector<1x256xf32> to vector<32x256xf32>
    %129 = arith.mulf %6, %128 : vector<32x256xf32>
    %130 = arith.addf %126, %129 : vector<32x256xf32>
    %131 = vector.extract_strided_slice %50 {offsets = [19, 0], sizes = [1, 256], strides = [1, 1]} : vector<25x256xf32> to vector<1x256xf32>
    %132 = vector.broadcast %131 : vector<1x256xf32> to vector<32x256xf32>
    %133 = arith.mulf %7, %132 : vector<32x256xf32>
    %134 = arith.addf %130, %133 : vector<32x256xf32>
    %135 = vector.extract_strided_slice %0 {offsets = [3, 0, 0], sizes = [1, 32, 32], strides = [1, 1, 1]} : vector<5x32x32xf32> to vector<1x32x32xf32>
    %136 = vector.shape_cast %135 : vector<1x32x32xf32> to vector<32x32xf32>
    %cst_14 = arith.constant dense<0.000000e+00> : vector<32x256xf32>
    %137 = tpu.matmul %136, %134, %cst_14 {dimension_numbers = #tpu.dot_dimension_numbers<[1], [0], [0], [1], [0, 0, 1, 1], [], []>} : vector<32x32xf32>, vector<32x256xf32>, vector<32x256xf32> -> vector<32x256xf32>
    %138 = arith.addf %115, %137 : vector<32x256xf32>
    %139 = vector.extract_strided_slice %50 {offsets = [20, 0], sizes = [1, 256], strides = [1, 1]} : vector<25x256xf32> to vector<1x256xf32>
    %140 = vector.broadcast %139 : vector<1x256xf32> to vector<32x256xf32>
    %141 = arith.mulf %4, %140 : vector<32x256xf32>
    %142 = vector.extract_strided_slice %50 {offsets = [21, 0], sizes = [1, 256], strides = [1, 1]} : vector<25x256xf32> to vector<1x256xf32>
    %143 = vector.broadcast %142 : vector<1x256xf32> to vector<32x256xf32>
    %144 = arith.mulf %5, %143 : vector<32x256xf32>
    %145 = arith.addf %141, %144 : vector<32x256xf32>
    %146 = vector.extract_strided_slice %50 {offsets = [22, 0], sizes = [1, 256], strides = [1, 1]} : vector<25x256xf32> to vector<1x256xf32>
    %147 = vector.broadcast %146 : vector<1x256xf32> to vector<32x256xf32>
    %148 = arith.mulf %3, %147 : vector<32x256xf32>
    %149 = arith.addf %145, %148 : vector<32x256xf32>
    %150 = vector.extract_strided_slice %50 {offsets = [23, 0], sizes = [1, 256], strides = [1, 1]} : vector<25x256xf32> to vector<1x256xf32>
    %151 = vector.broadcast %150 : vector<1x256xf32> to vector<32x256xf32>
    %152 = arith.mulf %6, %151 : vector<32x256xf32>
    %153 = arith.addf %149, %152 : vector<32x256xf32>
    %154 = vector.extract_strided_slice %50 {offsets = [24, 0], sizes = [1, 256], strides = [1, 1]} : vector<25x256xf32> to vector<1x256xf32>
    %155 = vector.broadcast %154 : vector<1x256xf32> to vector<32x256xf32>
    %156 = arith.mulf %7, %155 : vector<32x256xf32>
    %157 = arith.addf %153, %156 : vector<32x256xf32>
    %158 = vector.extract_strided_slice %0 {offsets = [4, 0, 0], sizes = [1, 32, 32], strides = [1, 1, 1]} : vector<5x32x32xf32> to vector<1x32x32xf32>
    %159 = vector.shape_cast %158 : vector<1x32x32xf32> to vector<32x32xf32>
    %cst_15 = arith.constant dense<0.000000e+00> : vector<32x256xf32>
    %160 = tpu.matmul %159, %157, %cst_15 {dimension_numbers = #tpu.dot_dimension_numbers<[1], [0], [0], [1], [0, 0, 1, 1], [], []>} : vector<32x32xf32>, vector<32x256xf32>, vector<32x256xf32> -> vector<32x256xf32>
    %161 = arith.addf %138, %160 : vector<32x256xf32>
    %162 = vector.extract_strided_slice %49 {offsets = [0, 0], sizes = [32, 128], strides = [1, 1]} : vector<32x256xf32> to vector<32x128xf32>
    %163 = vector.extract_strided_slice %49 {offsets = [0, 128], sizes = [32, 128], strides = [1, 1]} : vector<32x256xf32> to vector<32x128xf32>
    %164 = arith.mulf %162, %163 : vector<32x128xf32>
    %165 = vector.extract_strided_slice %161 {offsets = [0, 0], sizes = [32, 128], strides = [1, 1]} : vector<32x256xf32> to vector<32x128xf32>
    %166 = vector.extract_strided_slice %161 {offsets = [0, 128], sizes = [32, 128], strides = [1, 1]} : vector<32x256xf32> to vector<32x128xf32>
    %167 = arith.mulf %165, %166 : vector<32x128xf32>
    %168 = tpu.concatenate %164, %164 in 1 : vector<32x128xf32>, vector<32x128xf32> -> vector<32x256xf32>
    %169 = tpu.concatenate %167, %167 in 1 : vector<32x128xf32>, vector<32x128xf32> -> vector<32x256xf32>
    %c2_i32_16 = arith.constant 2 : i32
    %170 = tpu.dynamic_rotate %168 by %c2_i32_16 dim 1 : vector<32x256xf32>, i32 -> vector<32x256xf32>
    %c1_i32_17 = arith.constant 1 : i32
    %171 = tpu.dynamic_rotate %168 by %c1_i32_17 dim 1 : vector<32x256xf32>, i32 -> vector<32x256xf32>
    %c255_i32_18 = arith.constant 255 : i32
    %172 = tpu.dynamic_rotate %168 by %c255_i32_18 dim 1 : vector<32x256xf32>, i32 -> vector<32x256xf32>
    %c254_i32_19 = arith.constant 254 : i32
    %173 = tpu.dynamic_rotate %168 by %c254_i32_19 dim 1 : vector<32x256xf32>, i32 -> vector<32x256xf32>
    %c0_20 = arith.constant 0 : index
    %c0_21 = arith.constant 0 : index
    %174 = vector.load %arg5[%c0_20, %c0_21] : memref<25x256xf32, #tpu.memory_space<vmem>>, vector<25x256xf32>
    %175 = vector.extract_strided_slice %174 {offsets = [0, 0], sizes = [1, 256], strides = [1, 1]} : vector<25x256xf32> to vector<1x256xf32>
    %176 = vector.broadcast %175 : vector<1x256xf32> to vector<32x256xf32>
    %177 = arith.mulf %170, %176 : vector<32x256xf32>
    %178 = vector.extract_strided_slice %174 {offsets = [1, 0], sizes = [1, 256], strides = [1, 1]} : vector<25x256xf32> to vector<1x256xf32>
    %179 = vector.broadcast %178 : vector<1x256xf32> to vector<32x256xf32>
    %180 = arith.mulf %171, %179 : vector<32x256xf32>
    %181 = arith.addf %177, %180 : vector<32x256xf32>
    %182 = vector.extract_strided_slice %174 {offsets = [2, 0], sizes = [1, 256], strides = [1, 1]} : vector<25x256xf32> to vector<1x256xf32>
    %183 = vector.broadcast %182 : vector<1x256xf32> to vector<32x256xf32>
    %184 = arith.mulf %168, %183 : vector<32x256xf32>
    %185 = arith.addf %181, %184 : vector<32x256xf32>
    %186 = vector.extract_strided_slice %174 {offsets = [3, 0], sizes = [1, 256], strides = [1, 1]} : vector<25x256xf32> to vector<1x256xf32>
    %187 = vector.broadcast %186 : vector<1x256xf32> to vector<32x256xf32>
    %188 = arith.mulf %172, %187 : vector<32x256xf32>
    %189 = arith.addf %185, %188 : vector<32x256xf32>
    %190 = vector.extract_strided_slice %174 {offsets = [4, 0], sizes = [1, 256], strides = [1, 1]} : vector<25x256xf32> to vector<1x256xf32>
    %191 = vector.broadcast %190 : vector<1x256xf32> to vector<32x256xf32>
    %192 = arith.mulf %173, %191 : vector<32x256xf32>
    %193 = arith.addf %189, %192 : vector<32x256xf32>
    %194 = vector.extract_strided_slice %0 {offsets = [0, 0, 0], sizes = [1, 32, 32], strides = [1, 1, 1]} : vector<5x32x32xf32> to vector<1x32x32xf32>
    %195 = vector.shape_cast %194 : vector<1x32x32xf32> to vector<32x32xf32>
    %cst_22 = arith.constant dense<0.000000e+00> : vector<32x256xf32>
    %196 = tpu.matmul %195, %193, %cst_22 {dimension_numbers = #tpu.dot_dimension_numbers<[1], [0], [0], [1], [0, 0, 1, 1], [], []>} : vector<32x32xf32>, vector<32x256xf32>, vector<32x256xf32> -> vector<32x256xf32>
    %197 = vector.extract_strided_slice %174 {offsets = [5, 0], sizes = [1, 256], strides = [1, 1]} : vector<25x256xf32> to vector<1x256xf32>
    %198 = vector.broadcast %197 : vector<1x256xf32> to vector<32x256xf32>
    %199 = arith.mulf %170, %198 : vector<32x256xf32>
    %200 = vector.extract_strided_slice %174 {offsets = [6, 0], sizes = [1, 256], strides = [1, 1]} : vector<25x256xf32> to vector<1x256xf32>
    %201 = vector.broadcast %200 : vector<1x256xf32> to vector<32x256xf32>
    %202 = arith.mulf %171, %201 : vector<32x256xf32>
    %203 = arith.addf %199, %202 : vector<32x256xf32>
    %204 = vector.extract_strided_slice %174 {offsets = [7, 0], sizes = [1, 256], strides = [1, 1]} : vector<25x256xf32> to vector<1x256xf32>
    %205 = vector.broadcast %204 : vector<1x256xf32> to vector<32x256xf32>
    %206 = arith.mulf %168, %205 : vector<32x256xf32>
    %207 = arith.addf %203, %206 : vector<32x256xf32>
    %208 = vector.extract_strided_slice %174 {offsets = [8, 0], sizes = [1, 256], strides = [1, 1]} : vector<25x256xf32> to vector<1x256xf32>
    %209 = vector.broadcast %208 : vector<1x256xf32> to vector<32x256xf32>
    %210 = arith.mulf %172, %209 : vector<32x256xf32>
    %211 = arith.addf %207, %210 : vector<32x256xf32>
    %212 = vector.extract_strided_slice %174 {offsets = [9, 0], sizes = [1, 256], strides = [1, 1]} : vector<25x256xf32> to vector<1x256xf32>
    %213 = vector.broadcast %212 : vector<1x256xf32> to vector<32x256xf32>
    %214 = arith.mulf %173, %213 : vector<32x256xf32>
    %215 = arith.addf %211, %214 : vector<32x256xf32>
    %216 = vector.extract_strided_slice %0 {offsets = [1, 0, 0], sizes = [1, 32, 32], strides = [1, 1, 1]} : vector<5x32x32xf32> to vector<1x32x32xf32>
    %217 = vector.shape_cast %216 : vector<1x32x32xf32> to vector<32x32xf32>
    %cst_23 = arith.constant dense<0.000000e+00> : vector<32x256xf32>
    %218 = tpu.matmul %217, %215, %cst_23 {dimension_numbers = #tpu.dot_dimension_numbers<[1], [0], [0], [1], [0, 0, 1, 1], [], []>} : vector<32x32xf32>, vector<32x256xf32>, vector<32x256xf32> -> vector<32x256xf32>
    %219 = arith.addf %196, %218 : vector<32x256xf32>
    %220 = vector.extract_strided_slice %174 {offsets = [10, 0], sizes = [1, 256], strides = [1, 1]} : vector<25x256xf32> to vector<1x256xf32>
    %221 = vector.broadcast %220 : vector<1x256xf32> to vector<32x256xf32>
    %222 = arith.mulf %170, %221 : vector<32x256xf32>
    %223 = vector.extract_strided_slice %174 {offsets = [11, 0], sizes = [1, 256], strides = [1, 1]} : vector<25x256xf32> to vector<1x256xf32>
    %224 = vector.broadcast %223 : vector<1x256xf32> to vector<32x256xf32>
    %225 = arith.mulf %171, %224 : vector<32x256xf32>
    %226 = arith.addf %222, %225 : vector<32x256xf32>
    %227 = vector.extract_strided_slice %174 {offsets = [12, 0], sizes = [1, 256], strides = [1, 1]} : vector<25x256xf32> to vector<1x256xf32>
    %228 = vector.broadcast %227 : vector<1x256xf32> to vector<32x256xf32>
    %229 = arith.mulf %168, %228 : vector<32x256xf32>
    %230 = arith.addf %226, %229 : vector<32x256xf32>
    %231 = vector.extract_strided_slice %174 {offsets = [13, 0], sizes = [1, 256], strides = [1, 1]} : vector<25x256xf32> to vector<1x256xf32>
    %232 = vector.broadcast %231 : vector<1x256xf32> to vector<32x256xf32>
    %233 = arith.mulf %172, %232 : vector<32x256xf32>
    %234 = arith.addf %230, %233 : vector<32x256xf32>
    %235 = vector.extract_strided_slice %174 {offsets = [14, 0], sizes = [1, 256], strides = [1, 1]} : vector<25x256xf32> to vector<1x256xf32>
    %236 = vector.broadcast %235 : vector<1x256xf32> to vector<32x256xf32>
    %237 = arith.mulf %173, %236 : vector<32x256xf32>
    %238 = arith.addf %234, %237 : vector<32x256xf32>
    %239 = arith.addf %219, %238 : vector<32x256xf32>
    %240 = vector.extract_strided_slice %174 {offsets = [15, 0], sizes = [1, 256], strides = [1, 1]} : vector<25x256xf32> to vector<1x256xf32>
    %241 = vector.broadcast %240 : vector<1x256xf32> to vector<32x256xf32>
    %242 = arith.mulf %170, %241 : vector<32x256xf32>
    %243 = vector.extract_strided_slice %174 {offsets = [16, 0], sizes = [1, 256], strides = [1, 1]} : vector<25x256xf32> to vector<1x256xf32>
    %244 = vector.broadcast %243 : vector<1x256xf32> to vector<32x256xf32>
    %245 = arith.mulf %171, %244 : vector<32x256xf32>
    %246 = arith.addf %242, %245 : vector<32x256xf32>
    %247 = vector.extract_strided_slice %174 {offsets = [17, 0], sizes = [1, 256], strides = [1, 1]} : vector<25x256xf32> to vector<1x256xf32>
    %248 = vector.broadcast %247 : vector<1x256xf32> to vector<32x256xf32>
    %249 = arith.mulf %168, %248 : vector<32x256xf32>
    %250 = arith.addf %246, %249 : vector<32x256xf32>
    %251 = vector.extract_strided_slice %174 {offsets = [18, 0], sizes = [1, 256], strides = [1, 1]} : vector<25x256xf32> to vector<1x256xf32>
    %252 = vector.broadcast %251 : vector<1x256xf32> to vector<32x256xf32>
    %253 = arith.mulf %172, %252 : vector<32x256xf32>
    %254 = arith.addf %250, %253 : vector<32x256xf32>
    %255 = vector.extract_strided_slice %174 {offsets = [19, 0], sizes = [1, 256], strides = [1, 1]} : vector<25x256xf32> to vector<1x256xf32>
    %256 = vector.broadcast %255 : vector<1x256xf32> to vector<32x256xf32>
    %257 = arith.mulf %173, %256 : vector<32x256xf32>
    %258 = arith.addf %254, %257 : vector<32x256xf32>
    %259 = vector.extract_strided_slice %0 {offsets = [3, 0, 0], sizes = [1, 32, 32], strides = [1, 1, 1]} : vector<5x32x32xf32> to vector<1x32x32xf32>
    %260 = vector.shape_cast %259 : vector<1x32x32xf32> to vector<32x32xf32>
    %cst_24 = arith.constant dense<0.000000e+00> : vector<32x256xf32>
    %261 = tpu.matmul %260, %258, %cst_24 {dimension_numbers = #tpu.dot_dimension_numbers<[1], [0], [0], [1], [0, 0, 1, 1], [], []>} : vector<32x32xf32>, vector<32x256xf32>, vector<32x256xf32> -> vector<32x256xf32>
    %262 = arith.addf %239, %261 : vector<32x256xf32>
    %263 = vector.extract_strided_slice %174 {offsets = [20, 0], sizes = [1, 256], strides = [1, 1]} : vector<25x256xf32> to vector<1x256xf32>
    %264 = vector.broadcast %263 : vector<1x256xf32> to vector<32x256xf32>
    %265 = arith.mulf %170, %264 : vector<32x256xf32>
    %266 = vector.extract_strided_slice %174 {offsets = [21, 0], sizes = [1, 256], strides = [1, 1]} : vector<25x256xf32> to vector<1x256xf32>
    %267 = vector.broadcast %266 : vector<1x256xf32> to vector<32x256xf32>
    %268 = arith.mulf %171, %267 : vector<32x256xf32>
    %269 = arith.addf %265, %268 : vector<32x256xf32>
    %270 = vector.extract_strided_slice %174 {offsets = [22, 0], sizes = [1, 256], strides = [1, 1]} : vector<25x256xf32> to vector<1x256xf32>
    %271 = vector.broadcast %270 : vector<1x256xf32> to vector<32x256xf32>
    %272 = arith.mulf %168, %271 : vector<32x256xf32>
    %273 = arith.addf %269, %272 : vector<32x256xf32>
    %274 = vector.extract_strided_slice %174 {offsets = [23, 0], sizes = [1, 256], strides = [1, 1]} : vector<25x256xf32> to vector<1x256xf32>
    %275 = vector.broadcast %274 : vector<1x256xf32> to vector<32x256xf32>
    %276 = arith.mulf %172, %275 : vector<32x256xf32>
    %277 = arith.addf %273, %276 : vector<32x256xf32>
    %278 = vector.extract_strided_slice %174 {offsets = [24, 0], sizes = [1, 256], strides = [1, 1]} : vector<25x256xf32> to vector<1x256xf32>
    %279 = vector.broadcast %278 : vector<1x256xf32> to vector<32x256xf32>
    %280 = arith.mulf %173, %279 : vector<32x256xf32>
    %281 = arith.addf %277, %280 : vector<32x256xf32>
    %282 = vector.extract_strided_slice %0 {offsets = [4, 0, 0], sizes = [1, 32, 32], strides = [1, 1, 1]} : vector<5x32x32xf32> to vector<1x32x32xf32>
    %283 = vector.shape_cast %282 : vector<1x32x32xf32> to vector<32x32xf32>
    %cst_25 = arith.constant dense<0.000000e+00> : vector<32x256xf32>
    %284 = tpu.matmul %283, %281, %cst_25 {dimension_numbers = #tpu.dot_dimension_numbers<[1], [0], [0], [1], [0, 0, 1, 1], [], []>} : vector<32x32xf32>, vector<32x256xf32>, vector<32x256xf32> -> vector<32x256xf32>
    %285 = arith.addf %262, %284 : vector<32x256xf32>
    %c2_i32_26 = arith.constant 2 : i32
    %286 = tpu.dynamic_rotate %169 by %c2_i32_26 dim 1 : vector<32x256xf32>, i32 -> vector<32x256xf32>
    %c1_i32_27 = arith.constant 1 : i32
    %287 = tpu.dynamic_rotate %169 by %c1_i32_27 dim 1 : vector<32x256xf32>, i32 -> vector<32x256xf32>
    %c255_i32_28 = arith.constant 255 : i32
    %288 = tpu.dynamic_rotate %169 by %c255_i32_28 dim 1 : vector<32x256xf32>, i32 -> vector<32x256xf32>
    %c254_i32_29 = arith.constant 254 : i32
    %289 = tpu.dynamic_rotate %169 by %c254_i32_29 dim 1 : vector<32x256xf32>, i32 -> vector<32x256xf32>
    %c0_30 = arith.constant 0 : index
    %c0_31 = arith.constant 0 : index
    %290 = vector.load %arg6[%c0_30, %c0_31] : memref<25x256xf32, #tpu.memory_space<vmem>>, vector<25x256xf32>
    %291 = vector.extract_strided_slice %290 {offsets = [0, 0], sizes = [1, 256], strides = [1, 1]} : vector<25x256xf32> to vector<1x256xf32>
    %292 = vector.broadcast %291 : vector<1x256xf32> to vector<32x256xf32>
    %293 = arith.mulf %286, %292 : vector<32x256xf32>
    %294 = vector.extract_strided_slice %290 {offsets = [1, 0], sizes = [1, 256], strides = [1, 1]} : vector<25x256xf32> to vector<1x256xf32>
    %295 = vector.broadcast %294 : vector<1x256xf32> to vector<32x256xf32>
    %296 = arith.mulf %287, %295 : vector<32x256xf32>
    %297 = arith.addf %293, %296 : vector<32x256xf32>
    %298 = vector.extract_strided_slice %290 {offsets = [2, 0], sizes = [1, 256], strides = [1, 1]} : vector<25x256xf32> to vector<1x256xf32>
    %299 = vector.broadcast %298 : vector<1x256xf32> to vector<32x256xf32>
    %300 = arith.mulf %169, %299 : vector<32x256xf32>
    %301 = arith.addf %297, %300 : vector<32x256xf32>
    %302 = vector.extract_strided_slice %290 {offsets = [3, 0], sizes = [1, 256], strides = [1, 1]} : vector<25x256xf32> to vector<1x256xf32>
    %303 = vector.broadcast %302 : vector<1x256xf32> to vector<32x256xf32>
    %304 = arith.mulf %288, %303 : vector<32x256xf32>
    %305 = arith.addf %301, %304 : vector<32x256xf32>
    %306 = vector.extract_strided_slice %290 {offsets = [4, 0], sizes = [1, 256], strides = [1, 1]} : vector<25x256xf32> to vector<1x256xf32>
    %307 = vector.broadcast %306 : vector<1x256xf32> to vector<32x256xf32>
    %308 = arith.mulf %289, %307 : vector<32x256xf32>
    %309 = arith.addf %305, %308 : vector<32x256xf32>
    %310 = vector.extract_strided_slice %0 {offsets = [0, 0, 0], sizes = [1, 32, 32], strides = [1, 1, 1]} : vector<5x32x32xf32> to vector<1x32x32xf32>
    %311 = vector.shape_cast %310 : vector<1x32x32xf32> to vector<32x32xf32>
    %cst_32 = arith.constant dense<0.000000e+00> : vector<32x256xf32>
    %312 = tpu.matmul %311, %309, %cst_32 {dimension_numbers = #tpu.dot_dimension_numbers<[1], [0], [0], [1], [0, 0, 1, 1], [], []>} : vector<32x32xf32>, vector<32x256xf32>, vector<32x256xf32> -> vector<32x256xf32>
    %313 = vector.extract_strided_slice %290 {offsets = [5, 0], sizes = [1, 256], strides = [1, 1]} : vector<25x256xf32> to vector<1x256xf32>
    %314 = vector.broadcast %313 : vector<1x256xf32> to vector<32x256xf32>
    %315 = arith.mulf %286, %314 : vector<32x256xf32>
    %316 = vector.extract_strided_slice %290 {offsets = [6, 0], sizes = [1, 256], strides = [1, 1]} : vector<25x256xf32> to vector<1x256xf32>
    %317 = vector.broadcast %316 : vector<1x256xf32> to vector<32x256xf32>
    %318 = arith.mulf %287, %317 : vector<32x256xf32>
    %319 = arith.addf %315, %318 : vector<32x256xf32>
    %320 = vector.extract_strided_slice %290 {offsets = [7, 0], sizes = [1, 256], strides = [1, 1]} : vector<25x256xf32> to vector<1x256xf32>
    %321 = vector.broadcast %320 : vector<1x256xf32> to vector<32x256xf32>
    %322 = arith.mulf %169, %321 : vector<32x256xf32>
    %323 = arith.addf %319, %322 : vector<32x256xf32>
    %324 = vector.extract_strided_slice %290 {offsets = [8, 0], sizes = [1, 256], strides = [1, 1]} : vector<25x256xf32> to vector<1x256xf32>
    %325 = vector.broadcast %324 : vector<1x256xf32> to vector<32x256xf32>
    %326 = arith.mulf %288, %325 : vector<32x256xf32>
    %327 = arith.addf %323, %326 : vector<32x256xf32>
    %328 = vector.extract_strided_slice %290 {offsets = [9, 0], sizes = [1, 256], strides = [1, 1]} : vector<25x256xf32> to vector<1x256xf32>
    %329 = vector.broadcast %328 : vector<1x256xf32> to vector<32x256xf32>
    %330 = arith.mulf %289, %329 : vector<32x256xf32>
    %331 = arith.addf %327, %330 : vector<32x256xf32>
    %332 = vector.extract_strided_slice %0 {offsets = [1, 0, 0], sizes = [1, 32, 32], strides = [1, 1, 1]} : vector<5x32x32xf32> to vector<1x32x32xf32>
    %333 = vector.shape_cast %332 : vector<1x32x32xf32> to vector<32x32xf32>
    %cst_33 = arith.constant dense<0.000000e+00> : vector<32x256xf32>
    %334 = tpu.matmul %333, %331, %cst_33 {dimension_numbers = #tpu.dot_dimension_numbers<[1], [0], [0], [1], [0, 0, 1, 1], [], []>} : vector<32x32xf32>, vector<32x256xf32>, vector<32x256xf32> -> vector<32x256xf32>
    %335 = arith.addf %312, %334 : vector<32x256xf32>
    %336 = vector.extract_strided_slice %290 {offsets = [10, 0], sizes = [1, 256], strides = [1, 1]} : vector<25x256xf32> to vector<1x256xf32>
    %337 = vector.broadcast %336 : vector<1x256xf32> to vector<32x256xf32>
    %338 = arith.mulf %286, %337 : vector<32x256xf32>
    %339 = vector.extract_strided_slice %290 {offsets = [11, 0], sizes = [1, 256], strides = [1, 1]} : vector<25x256xf32> to vector<1x256xf32>
    %340 = vector.broadcast %339 : vector<1x256xf32> to vector<32x256xf32>
    %341 = arith.mulf %287, %340 : vector<32x256xf32>
    %342 = arith.addf %338, %341 : vector<32x256xf32>
    %343 = vector.extract_strided_slice %290 {offsets = [12, 0], sizes = [1, 256], strides = [1, 1]} : vector<25x256xf32> to vector<1x256xf32>
    %344 = vector.broadcast %343 : vector<1x256xf32> to vector<32x256xf32>
    %345 = arith.mulf %169, %344 : vector<32x256xf32>
    %346 = arith.addf %342, %345 : vector<32x256xf32>
    %347 = vector.extract_strided_slice %290 {offsets = [13, 0], sizes = [1, 256], strides = [1, 1]} : vector<25x256xf32> to vector<1x256xf32>
    %348 = vector.broadcast %347 : vector<1x256xf32> to vector<32x256xf32>
    %349 = arith.mulf %288, %348 : vector<32x256xf32>
    %350 = arith.addf %346, %349 : vector<32x256xf32>
    %351 = vector.extract_strided_slice %290 {offsets = [14, 0], sizes = [1, 256], strides = [1, 1]} : vector<25x256xf32> to vector<1x256xf32>
    %352 = vector.broadcast %351 : vector<1x256xf32> to vector<32x256xf32>
    %353 = arith.mulf %289, %352 : vector<32x256xf32>
    %354 = arith.addf %350, %353 : vector<32x256xf32>
    %355 = arith.addf %335, %354 : vector<32x256xf32>
    %356 = vector.extract_strided_slice %290 {offsets = [15, 0], sizes = [1, 256], strides = [1, 1]} : vector<25x256xf32> to vector<1x256xf32>
    %357 = vector.broadcast %356 : vector<1x256xf32> to vector<32x256xf32>
    %358 = arith.mulf %286, %357 : vector<32x256xf32>
    %359 = vector.extract_strided_slice %290 {offsets = [16, 0], sizes = [1, 256], strides = [1, 1]} : vector<25x256xf32> to vector<1x256xf32>
    %360 = vector.broadcast %359 : vector<1x256xf32> to vector<32x256xf32>
    %361 = arith.mulf %287, %360 : vector<32x256xf32>
    %362 = arith.addf %358, %361 : vector<32x256xf32>
    %363 = vector.extract_strided_slice %290 {offsets = [17, 0], sizes = [1, 256], strides = [1, 1]} : vector<25x256xf32> to vector<1x256xf32>
    %364 = vector.broadcast %363 : vector<1x256xf32> to vector<32x256xf32>
    %365 = arith.mulf %169, %364 : vector<32x256xf32>
    %366 = arith.addf %362, %365 : vector<32x256xf32>
    %367 = vector.extract_strided_slice %290 {offsets = [18, 0], sizes = [1, 256], strides = [1, 1]} : vector<25x256xf32> to vector<1x256xf32>
    %368 = vector.broadcast %367 : vector<1x256xf32> to vector<32x256xf32>
    %369 = arith.mulf %288, %368 : vector<32x256xf32>
    %370 = arith.addf %366, %369 : vector<32x256xf32>
    %371 = vector.extract_strided_slice %290 {offsets = [19, 0], sizes = [1, 256], strides = [1, 1]} : vector<25x256xf32> to vector<1x256xf32>
    %372 = vector.broadcast %371 : vector<1x256xf32> to vector<32x256xf32>
    %373 = arith.mulf %289, %372 : vector<32x256xf32>
    %374 = arith.addf %370, %373 : vector<32x256xf32>
    %375 = vector.extract_strided_slice %0 {offsets = [3, 0, 0], sizes = [1, 32, 32], strides = [1, 1, 1]} : vector<5x32x32xf32> to vector<1x32x32xf32>
    %376 = vector.shape_cast %375 : vector<1x32x32xf32> to vector<32x32xf32>
    %cst_34 = arith.constant dense<0.000000e+00> : vector<32x256xf32>
    %377 = tpu.matmul %376, %374, %cst_34 {dimension_numbers = #tpu.dot_dimension_numbers<[1], [0], [0], [1], [0, 0, 1, 1], [], []>} : vector<32x32xf32>, vector<32x256xf32>, vector<32x256xf32> -> vector<32x256xf32>
    %378 = arith.addf %355, %377 : vector<32x256xf32>
    %379 = vector.extract_strided_slice %290 {offsets = [20, 0], sizes = [1, 256], strides = [1, 1]} : vector<25x256xf32> to vector<1x256xf32>
    %380 = vector.broadcast %379 : vector<1x256xf32> to vector<32x256xf32>
    %381 = arith.mulf %286, %380 : vector<32x256xf32>
    %382 = vector.extract_strided_slice %290 {offsets = [21, 0], sizes = [1, 256], strides = [1, 1]} : vector<25x256xf32> to vector<1x256xf32>
    %383 = vector.broadcast %382 : vector<1x256xf32> to vector<32x256xf32>
    %384 = arith.mulf %287, %383 : vector<32x256xf32>
    %385 = arith.addf %381, %384 : vector<32x256xf32>
    %386 = vector.extract_strided_slice %290 {offsets = [22, 0], sizes = [1, 256], strides = [1, 1]} : vector<25x256xf32> to vector<1x256xf32>
    %387 = vector.broadcast %386 : vector<1x256xf32> to vector<32x256xf32>
    %388 = arith.mulf %169, %387 : vector<32x256xf32>
    %389 = arith.addf %385, %388 : vector<32x256xf32>
    %390 = vector.extract_strided_slice %290 {offsets = [23, 0], sizes = [1, 256], strides = [1, 1]} : vector<25x256xf32> to vector<1x256xf32>
    %391 = vector.broadcast %390 : vector<1x256xf32> to vector<32x256xf32>
    %392 = arith.mulf %288, %391 : vector<32x256xf32>
    %393 = arith.addf %389, %392 : vector<32x256xf32>
    %394 = vector.extract_strided_slice %290 {offsets = [24, 0], sizes = [1, 256], strides = [1, 1]} : vector<25x256xf32> to vector<1x256xf32>
    %395 = vector.broadcast %394 : vector<1x256xf32> to vector<32x256xf32>
    %396 = arith.mulf %289, %395 : vector<32x256xf32>
    %397 = arith.addf %393, %396 : vector<32x256xf32>
    %398 = vector.extract_strided_slice %0 {offsets = [4, 0, 0], sizes = [1, 32, 32], strides = [1, 1, 1]} : vector<5x32x32xf32> to vector<1x32x32xf32>
    %399 = vector.shape_cast %398 : vector<1x32x32xf32> to vector<32x32xf32>
    %cst_35 = arith.constant dense<0.000000e+00> : vector<32x256xf32>
    %400 = tpu.matmul %399, %397, %cst_35 {dimension_numbers = #tpu.dot_dimension_numbers<[1], [0], [0], [1], [0, 0, 1, 1], [], []>} : vector<32x32xf32>, vector<32x256xf32>, vector<32x256xf32> -> vector<32x256xf32>
    %401 = arith.addf %378, %400 : vector<32x256xf32>
    %402 = arith.mulf %285, %401 : vector<32x256xf32>
    %c0_36 = arith.constant 0 : index
    %c0_37 = arith.constant 0 : index
    %403 = vector.load %arg7[%c0_36, %c0_37] : memref<256x128xf32, #tpu.memory_space<vmem>>, vector<256x128xf32>
    %cst_38 = arith.constant dense<0.000000e+00> : vector<32x128xf32>
    %404 = tpu.matmul %402, %403, %cst_38 {dimension_numbers = #tpu.dot_dimension_numbers<[1], [0], [0], [1], [0, 0, 1, 1], [], []>} : vector<32x256xf32>, vector<256x128xf32>, vector<32x128xf32> -> vector<32x128xf32>
    %c0_39 = arith.constant 0 : index
    %c0_40 = arith.constant 0 : index
    %405 = vector.load %arg9[%c0_39, %c0_40] : memref<32x128xf32, #tpu.memory_space<vmem>>, vector<32x128xf32>
    tpu.vector_store %arg9[%c0_39, %c0_40], %404 {strides = array<i32>} : memref<32x128xf32, #tpu.memory_space<vmem>>, vector<32x128xf32>,
    return
  }
  func.func @transform_0(%arg0: i32) -> (i32, i32) {
    %c0_i32 = arith.constant 0 : i32
    %c0_i32_0 = arith.constant 0 : i32
    return %arg0, %c0_i32 : i32, i32
  }
  func.func @transform_1(%arg0: i32) -> (i32, i32) {
    %c0_i32 = arith.constant 0 : i32
    %c0_i32_0 = arith.constant 0 : i32
    %c0_i32_1 = arith.constant 0 : i32
    return %c0_i32, %c0_i32_0 : i32, i32
  }
  func.func @transform_2(%arg0: i32) -> (i32, i32) {
    %c0_i32 = arith.constant 0 : i32
    %c0_i32_0 = arith.constant 0 : i32
    %c0_i32_1 = arith.constant 0 : i32
    return %c0_i32, %c0_i32_0 : i32, i32
  }
  func.func @transform_3(%arg0: i32) -> (i32, i32) {
    %c0_i32 = arith.constant 0 : i32
    %c0_i32_0 = arith.constant 0 : i32
    %c0_i32_1 = arith.constant 0 : i32
    return %c0_i32, %c0_i32_0 : i32, i32
  }
  func.func @transform_4(%arg0: i32) -> (i32, i32) {
    %c0_i32 = arith.constant 0 : i32
    %c0_i32_0 = arith.constant 0 : i32
    %c0_i32_1 = arith.constant 0 : i32
    return %c0_i32, %c0_i32_0 : i32, i32
  }
  func.func @transform_5(%arg0: i32) -> (i32, i32) {
    %c0_i32 = arith.constant 0 : i32
    %c0_i32_0 = arith.constant 0 : i32
    %c0_i32_1 = arith.constant 0 : i32
    return %c0_i32, %c0_i32_0 : i32, i32
  }
  func.func @transform_6(%arg0: i32) -> (i32, i32) {
    %c0_i32 = arith.constant 0 : i32
    %c0_i32_0 = arith.constant 0 : i32
    %c0_i32_1 = arith.constant 0 : i32
    return %c0_i32, %c0_i32_0 : i32, i32
  }
  func.func @transform_7(%arg0: i32) -> (i32, i32, i32) {
    %c0_i32 = arith.constant 0 : i32
    %c0_i32_0 = arith.constant 0 : i32
    %c0_i32_1 = arith.constant 0 : i32
    %c0_i32_2 = arith.constant 0 : i32
    return %c0_i32, %c0_i32_0, %c0_i32_1 : i32, i32, i32
  }
  func.func @transform_8(%arg0: i32) -> (i32, i32) {
    %c0_i32 = arith.constant 0 : i32
    %c0_i32_0 = arith.constant 0 : i32
    return %arg0, %c0_i32 : i32, i32
  }
}

</mosaic_0001>

<llo_original>
// kernel: tpu_custom_call.1
$region0: #{tpu_custom_call.1}
  #allocation0 [shape = 'u32[]', space=smem, size = 0x4, offset = 0x4, fixed_abs, tag = 'smem constant byte address 0x4 - core index']
  #allocation1 [shape = 'u32[144,128]{1,0:T(1,128)}', space=vmem, size = 0x12000, scoped, tag = 'internal scratch']
  %s0 = inlined_call_operand.hbm [shape: f32[64,128], index: 0, kind: input, shape index: {}]
  %s1 = inlined_call_operand.hbm [shape: f32[128,256], index: 1, kind: input, shape index: {}]
  %s2 = inlined_call_operand.hbm [shape: f32[9,256], index: 2, kind: input, shape index: {}]
  %s3 = inlined_call_operand.hbm [shape: f32[25,256], index: 3, kind: input, shape index: {}]
  %s4 = inlined_call_operand.hbm [shape: f32[25,256], index: 4, kind: input, shape index: {}]
  %s5 = inlined_call_operand.hbm [shape: f32[25,256], index: 5, kind: input, shape index: {}]
  %s6 = inlined_call_operand.hbm [shape: f32[256,128], index: 6, kind: input, shape index: {}]
  %s7 = inlined_call_operand.hbm [shape: f32[5,32,32], index: 7, kind: input, shape index: {}]
  %s8 = inlined_call_operand.hbm [shape: f32[64,128], index: 8, kind: output, shape index: {}]
  %s9 = sld [smem:[#allocation0]]
  $region97: #{tpu_custom_call.1} parent=0
    _
  %s11 = ssub.s32 1, %s9
  %s12 = scalar_select 0, %s11, %s9
  $region1: #{tpu_custom_call.1} parent=0
    #allocation2 [shape = 'u8[32768]{0}', space=vmem, size = 0x8000, scoped, tag = 'input window, operand 0']
    #allocation3 [shape = 's32[2]{0}', space=sflag, size = 0x8, scoped, tag = 'scoped memory for tpu_custom_call.1']
    #allocation4 [shape = 's32[2]{0}', space=sflag, size = 0x8, scoped, tag = 'scoped memory for tpu_custom_call.1']
    #allocation5 [shape = 'u8[131072]{0}', space=vmem, size = 0x20000, scoped, tag = 'input window, operand 1, single buffered']
    #allocation6 [shape = 's32[1]{0}', space=sflag, size = 0x4, scoped, tag = 'scoped memory for tpu_custom_call.1']
    #allocation7 [shape = 'u8[16384]{0}', space=vmem, size = 0x4000, scoped, tag = 'input window, operand 2, single buffered']
    #allocation8 [shape = 'u8[32768]{0}', space=vmem, size = 0x8000, scoped, tag = 'input window, operand 3, single buffered']
    #allocation9 [shape = 's32[1]{0}', space=sflag, size = 0x4, scoped, tag = 'scoped memory for tpu_custom_call.1']
    #allocation10 [shape = 'u8[32768]{0}', space=vmem, size = 0x8000, scoped, tag = 'input window, operand 4, single buffered']
    #allocation11 [shape = 'u8[32768]{0}', space=vmem, size = 0x8000, scoped, tag = 'input window, operand 5, single buffered']
    #allocation12 [shape = 's32[1]{0}', space=sflag, size = 0x4, scoped, tag = 'scoped memory for tpu_custom_call.1']
    #allocation13 [shape = 'u8[131072]{0}', space=vmem, size = 0x20000, scoped, tag = 'input window, operand 6, single buffered']
    #allocation14 [shape = 'u8[81920]{0}', space=vmem, size = 0x14000, scoped, tag = 'input window, operand 7, single buffered']
    #allocation15 [shape = 's32[1]{0}', space=sflag, size = 0x4, scoped, tag = 'scoped memory for tpu_custom_call.1']
    #allocation16 [shape = 'u8[32768]{0}', space=vmem, size = 0x8000, scoped, tag = 'output window, operand 0']
    %13 = vsyncpa [#allocation3], 0
    %s14 = scalar_lea.sflag [#allocation3], 1
    %15 = vsyncpa %s14, 0
    %16 = vsyncpa [#allocation6], 0
    %17 = vsyncpa [#allocation9], 0
    %18 = vsyncpa [#allocation12], 0
    %19 = vsyncpa [#allocation15], 0
    %20 = vsyncpa [#allocation4], 0
    %s21 = scalar_lea.sflag [#allocation4], 1
    %22 = vsyncpa %s21, 0
    loop: start=0, step=1, limit=4
    $region2: #{tpu_custom_call.1} parent=1 // loop_pre_header
      _
    $region3: #{tpu_custom_call.1} parent=1 // loop_header
      %s24 = sphi 0, %s28
      %p25 = scmp.ge.s32.totalorder %s24, 4
      %s34 = sphi 0, %s36
      %s37 = sphi 0, %s34
      %s38 = sphi 0, %s37
      %s54 = sphi 0, %s38
      %s58 = sphi 0, %s58
      %s60 = sphi 0, %s58
      %s61 = sphi 0, %s60
      %s75 = sphi 0, %s61
      %s79 = sphi 0, %s79
      %s81 = sphi 0, %s79
      %s82 = sphi 0, %s81
      %s96 = sphi 0, %s82
      %s100 = sphi 0, %s100
      %s102 = sphi 0, %s100
      %s103 = sphi 0, %s102
      %s117 = sphi 0, %s103
      %s121 = sphi 0, %s121
      %s123 = sphi 0, %s121
      %s124 = sphi 0, %s123
      %s138 = sphi 0, %s124
      %s142 = sphi 0, %s142
      %s144 = sphi 0, %s142
      %s145 = sphi 0, %s144
      %s159 = sphi 0, %s145
      %s163 = sphi 0, %s163
      %s165 = sphi 0, %s163
      %s166 = sphi 0, %s165
      %s180 = sphi 0, %s166
      %s184 = sphi 0, %s184
      %s186 = sphi 0, %s184
      %s187 = sphi 0, %s186
      %s201 = sphi 0, %s187
      %s207 = sphi 0, %s209
      %s210 = sphi 0, %s207
      %s211 = sphi 0, %s210
      %s227 = sphi 0, %s211
    $region4: #{tpu_custom_call.1} parent=1 // loop_header_branch
      %27 = sbr.rel (%p25) target = $region8
    $region5: #{tpu_custom_call.1} parent=1 // loop_body
      %s29 = ssub.s32 %s24, 1
      %s30 = ssub.s32 %s24, 2
      %s31 = sadd.s32 %s24, 1
      %s32 = ssub.s32 %s24, %s31
      %p33 = scmp.eq.s32.totalorder %s32, 0
      %s35 = sadd.s32 %s34, 1
      %s36 = scalar_select %p33, %s34, %s35
      %p39 = pneg %p33
      %p40 = scmp.eq.s32.totalorder %s24, 1
      %p41 = por %p39, %p40
      %p42 = scmp.ne.s32.totalorder %s34, %s37
      %p43 = scmp.eq.s32.totalorder %s24, 0
      %p44 = por %p42, %p43
      %p45 = scmp.ne.s32.totalorder %s34, %s37
      %p46 = scmp.eq.s32.totalorder %s29, 1
      %p47 = por %p45, %p46
      %p48 = scmp.ne.s32.totalorder %s37, %s38
      %p49 = scmp.eq.s32.totalorder %s29, 0
      %p50 = por %p48, %p49
      %p51 = scmp.ne.s32.totalorder %s37, %s38
      %p52 = scmp.eq.s32.totalorder %s30, 1
      %p53 = por %p51, %p52
      %p55 = scmp.ne.s32.totalorder %s38, %s54
      %p56 = scmp.eq.s32.totalorder %s30, 0
      %p57 = por %p55, %p56
      %s59 = sadd.s32 %s58, 1
      %p62 = scmp.eq.s32.totalorder %s24, 1
      %p63 = scmp.ne.s32.totalorder %s58, %s60
      %p64 = scmp.eq.s32.totalorder %s24, 0
      %p65 = por %p63, %p64
      %p66 = scmp.ne.s32.totalorder %s58, %s60
      %p67 = scmp.eq.s32.totalorder %s29, 1
      %p68 = por %p66, %p67
      %p69 = scmp.ne.s32.totalorder %s60, %s61
      %p70 = scmp.eq.s32.totalorder %s29, 0
      %p71 = por %p69, %p70
      %p72 = scmp.ne.s32.totalorder %s60, %s61
      %p73 = scmp.eq.s32.totalorder %s30, 1
      %p74 = por %p72, %p73
      %p76 = scmp.ne.s32.totalorder %s61, %s75
      %p77 = scmp.eq.s32.totalorder %s30, 0
      %p78 = por %p76, %p77
      %s80 = sadd.s32 %s79, 1
      %p83 = scmp.eq.s32.totalorder %s24, 1
      %p84 = scmp.ne.s32.totalorder %s79, %s81
      %p85 = scmp.eq.s32.totalorder %s24, 0
      %p86 = por %p84, %p85
      %p87 = scmp.ne.s32.totalorder %s79, %s81
      %p88 = scmp.eq.s32.totalorder %s29, 1
      %p89 = por %p87, %p88
      %p90 = scmp.ne.s32.totalorder %s81, %s82
      %p91 = scmp.eq.s32.totalorder %s29, 0
      %p92 = por %p90, %p91
      %p93 = scmp.ne.s32.totalorder %s81, %s82
      %p94 = scmp.eq.s32.totalorder %s30, 1
      %p95 = por %p93, %p94
      %p97 = scmp.ne.s32.totalorder %s82, %s96
      %p98 = scmp.eq.s32.totalorder %s30, 0
      %p99 = por %p97, %p98
      %s101 = sadd.s32 %s100, 1
      %p104 = scmp.eq.s32.totalorder %s24, 1
      %p105 = scmp.ne.s32.totalorder %s100, %s102
      %p106 = scmp.eq.s32.totalorder %s24, 0
      %p107 = por %p105, %p106
      %p108 = scmp.ne.s32.totalorder %s100, %s102
      %p109 = scmp.eq.s32.totalorder %s29, 1
      %p110 = por %p108, %p109
      %p111 = scmp.ne.s32.totalorder %s102, %s103
      %p112 = scmp.eq.s32.totalorder %s29, 0
      %p113 = por %p111, %p112
      %p114 = scmp.ne.s32.totalorder %s102, %s103
      %p115 = scmp.eq.s32.totalorder %s30, 1
      %p116 = por %p114, %p115
      %p118 = scmp.ne.s32.totalorder %s103, %s117
      %p119 = scmp.eq.s32.totalorder %s30, 0
      %p120 = por %p118, %p119
      %s122 = sadd.s32 %s121, 1
      %p125 = scmp.eq.s32.totalorder %s24, 1
      %p126 = scmp.ne.s32.totalorder %s121, %s123
      %p127 = scmp.eq.s32.totalorder %s24, 0
      %p128 = por %p126, %p127
      %p129 = scmp.ne.s32.totalorder %s121, %s123
      %p130 = scmp.eq.s32.totalorder %s29, 1
      %p131 = por %p129, %p130
      %p132 = scmp.ne.s32.totalorder %s123, %s124
      %p133 = scmp.eq.s32.totalorder %s29, 0
      %p134 = por %p132, %p133
      %p135 = scmp.ne.s32.totalorder %s123, %s124
      %p136 = scmp.eq.s32.totalorder %s30, 1
      %p137 = por %p135, %p136
      %p139 = scmp.ne.s32.totalorder %s124, %s138
      %p140 = scmp.eq.s32.totalorder %s30, 0
      %p141 = por %p139, %p140
      %s143 = sadd.s32 %s142, 1
      %p146 = scmp.eq.s32.totalorder %s24, 1
      %p147 = scmp.ne.s32.totalorder %s142, %s144
      %p148 = scmp.eq.s32.totalorder %s24, 0
      %p149 = por %p147, %p148
      %p150 = scmp.ne.s32.totalorder %s142, %s144
      %p151 = scmp.eq.s32.totalorder %s29, 1
      %p152 = por %p150, %p151
      %p153 = scmp.ne.s32.totalorder %s144, %s145
      %p154 = scmp.eq.s32.totalorder %s29, 0
      %p155 = por %p153, %p154
      %p156 = scmp.ne.s32.totalorder %s144, %s145
      %p157 = scmp.eq.s32.totalorder %s30, 1
      %p158 = por %p156, %p157
      %p160 = scmp.ne.s32.totalorder %s145, %s159
      %p161 = scmp.eq.s32.totalorder %s30, 0
      %p162 = por %p160, %p161
      %s164 = sadd.s32 %s163, 1
      %p167 = scmp.eq.s32.totalorder %s24, 1
      %p168 = scmp.ne.s32.totalorder %s163, %s165
      %p169 = scmp.eq.s32.totalorder %s24, 0
      %p170 = por %p168, %p169
      %p171 = scmp.ne.s32.totalorder %s163, %s165
      %p172 = scmp.eq.s32.totalorder %s29, 1
      %p173 = por %p171, %p172
      %p174 = scmp.ne.s32.totalorder %s165, %s166
      %p175 = scmp.eq.s32.totalorder %s29, 0
      %p176 = por %p174, %p175
      %p177 = scmp.ne.s32.totalorder %s165, %s166
      %p178 = scmp.eq.s32.totalorder %s30, 1
      %p179 = por %p177, %p178
      %p181 = scmp.ne.s32.totalorder %s166, %s180
      %p182 = scmp.eq.s32.totalorder %s30, 0
      %p183 = por %p181, %p182
      %s185 = sadd.s32 %s184, 1
      %p188 = scmp.eq.s32.totalorder %s24, 1
      %p189 = scmp.ne.s32.totalorder %s184, %s186
      %p190 = scmp.eq.s32.totalorder %s24, 0
      %p191 = por %p189, %p190
      %p192 = scmp.ne.s32.totalorder %s184, %s186
      %p193 = scmp.eq.s32.totalorder %s29, 1
      %p194 = por %p192, %p193
      %p195 = scmp.ne.s32.totalorder %s186, %s187
      %p196 = scmp.eq.s32.totalorder %s29, 0
      %p197 = por %p195, %p196
      %p198 = scmp.ne.s32.totalorder %s186, %s187
      %p199 = scmp.eq.s32.totalorder %s30, 1
      %p200 = por %p198, %p199
      %p202 = scmp.ne.s32.totalorder %s187, %s201
      %p203 = scmp.eq.s32.totalorder %s30, 0
      %p204 = por %p202, %p203
      %s205 = ssub.s32 %s24, %s31
      %p206 = scmp.eq.s32.totalorder %s205, 0
      %s208 = sadd.s32 %s207, 1
      %s209 = scalar_select %p206, %s207, %s208
      %p212 = pneg %p206
      %p213 = scmp.eq.s32.totalorder %s24, 1
      %p214 = por %p212, %p213
      %p215 = scmp.ne.s32.totalorder %s207, %s210
      %p216 = scmp.eq.s32.totalorder %s24, 0
      %p217 = por %p215, %p216
      %p218 = scmp.ne.s32.totalorder %s207, %s210
      %p219 = scmp.eq.s32.totalorder %s29, 1
      %p220 = por %p218, %p219
      %p221 = scmp.ne.s32.totalorder %s210, %s211
      %p222 = scmp.eq.s32.totalorder %s29, 0
      %p223 = por %p221, %p222
      %p224 = scmp.ne.s32.totalorder %s210, %s211
      %p225 = scmp.eq.s32.totalorder %s30, 1
      %p226 = por %p224, %p225
      %p228 = scmp.ne.s32.totalorder %s211, %s227
      %p229 = scmp.eq.s32.totalorder %s30, 0
      %p230 = por %p228, %p229
      %p231 = scmp.le.s32.totalorder 1, %s24
      %p232 = scmp.lt.s32.totalorder %s24, 3
      %p233 = pnand %p231, %p232
      %p234 = pneg %p233
      // Predicated region
      $region9: #{tpu_custom_call.1} parent=5 // pred_check
        _
      $region10: #{tpu_custom_call.1} parent=5 // pred_check_branch
        %236 = sbr.rel (%p233) target = $region12
      $region11: #{tpu_custom_call.1} parent=5 // pred_region
        %s237 = ssub.s32 %s24, 1
        // Predicated region
        $region13: #{tpu_custom_call.1} parent=11 // pred_check
          %p238 = pneg %p71
        $region14: #{tpu_custom_call.1} parent=11 // pred_check_branch
          %240 = sbr.rel (%p238) target = $region16
        $region15: #{tpu_custom_call.1} parent=11 // pred_region
          %s242 = ssub.s32 4096, 4096
          %243 = vsyncadd [#allocation6], %s242
          %s244 = sshll.u32 [#allocation5], 4
          %s245 = int_to_ptr.vmem [resolvable:$true] %s244
          %250 = dma.hbm_to_vmem [thread:$0]  %s1, 4096, %s245, [#allocation6], 256, 256, 16
        $region16: #{tpu_custom_call.1} parent=11 // pred_fallthru
          _
        // Predicated region
        $region17: #{tpu_custom_call.1} parent=11 // pred_check
          %p251 = pneg %p92
        $region18: #{tpu_custom_call.1} parent=11 // pred_check_branch
          %253 = sbr.rel (%p251) target = $region20
        $region19: #{tpu_custom_call.1} parent=11 // pred_region
          %s255 = ssub.s32 512, 512
          %256 = vsyncadd [#allocation6], %s255
          %s257 = sshll.u32 [#allocation7], 4
          %s258 = int_to_ptr.vmem [resolvable:$true] %s257
          %263 = dma.hbm_to_vmem [thread:$0]  %s2, 512, %s258, [#allocation6], 256, 256, 16
        $region20: #{tpu_custom_call.1} parent=11 // pred_fallthru
          _
        // Predicated region
        $region21: #{tpu_custom_call.1} parent=11 // pred_check
          %p264 = pneg %p113
        $region22: #{tpu_custom_call.1} parent=11 // pred_check_branch
          %266 = sbr.rel (%p264) target = $region24
        $region23: #{tpu_custom_call.1} parent=11 // pred_region
          %s268 = ssub.s32 1024, 1024
          %269 = vsyncadd [#allocation9], %s268
          %s270 = sshll.u32 [#allocation8], 4
          %s271 = int_to_ptr.vmem [resolvable:$true] %s270
          %276 = dma.hbm_to_vmem [thread:$0]  %s3, 1024, %s271, [#allocation9], 256, 256, 16
        $region24: #{tpu_custom_call.1} parent=11 // pred_fallthru
          _
        // Predicated region
        $region25: #{tpu_custom_call.1} parent=11 // pred_check
          %p277 = pneg %p134
        $region26: #{tpu_custom_call.1} parent=11 // pred_check_branch
          %279 = sbr.rel (%p277) target = $region28
        $region27: #{tpu_custom_call.1} parent=11 // pred_region
          %s281 = ssub.s32 1024, 1024
          %282 = vsyncadd [#allocation9], %s281
          %s283 = sshll.u32 [#allocation10], 4
          %s284 = int_to_ptr.vmem [resolvable:$true] %s283
          %289 = dma.hbm_to_vmem [thread:$0]  %s4, 1024, %s284, [#allocation9], 256, 256, 16
        $region28: #{tpu_custom_call.1} parent=11 // pred_fallthru
          _
        // Predicated region
        $region29: #{tpu_custom_call.1} parent=11 // pred_check
          %p290 = pneg %p155
        $region30: #{tpu_custom_call.1} parent=11 // pred_check_branch
          %292 = sbr.rel (%p290) target = $region32
        $region31: #{tpu_custom_call.1} parent=11 // pred_region
          %s294 = ssub.s32 1024, 1024
          %295 = vsyncadd [#allocation12], %s294
          %s296 = sshll.u32 [#allocation11], 4
          %s297 = int_to_ptr.vmem [resolvable:$true] %s296
          %302 = dma.hbm_to_vmem [thread:$0]  %s5, 1024, %s297, [#allocation12], 256, 256, 16
        $region32: #{tpu_custom_call.1} parent=11 // pred_fallthru
          _
        // Predicated region
        $region33: #{tpu_custom_call.1} parent=11 // pred_check
          %p303 = pneg %p176
        $region34: #{tpu_custom_call.1} parent=11 // pred_check_branch
          %305 = sbr.rel (%p303) target = $region36
        $region35: #{tpu_custom_call.1} parent=11 // pred_region
          %s307 = ssub.s32 4096, 4096
          %308 = vsyncadd [#allocation12], %s307
          %s309 = sshll.u32 [#allocation13], 4
          %s310 = int_to_ptr.vmem [resolvable:$true] %s309
          %315 = dma.hbm_to_vmem [thread:$0]  %s6, 4096, %s310, [#allocation12], 128, 128, 8
        $region36: #{tpu_custom_call.1} parent=11 // pred_fallthru
          _
        // Predicated region
        $region37: #{tpu_custom_call.1} parent=11 // pred_check
          %p316 = pneg %p197
        $region38: #{tpu_custom_call.1} parent=11 // pred_check_branch
          %318 = sbr.rel (%p316) target = $region40
        $region39: #{tpu_custom_call.1} parent=11 // pred_region
          %s320 = ssub.s32 2560, 2560
          %321 = vsyncadd [#allocation15], %s320
          %s322 = sshll.u32 [#allocation14], 4
          %s323 = int_to_ptr.vmem [resolvable:$true] %s322
          %328 = dma.hbm_to_vmem [thread:$0]  %s7, 2560, %s323, [#allocation15], 128, 128, 8
        $region40: #{tpu_custom_call.1} parent=11 // pred_fallthru
          _
      $region12: #{tpu_custom_call.1} parent=5 // pred_fallthru
        _
      %p329 = scmp.lt.s32.totalorder %s24, 2
      // Predicated region
      $region41: #{tpu_custom_call.1} parent=5 // pred_check
        %p330 = pneg %p329
      $region42: #{tpu_custom_call.1} parent=5 // pred_check_branch
        %332 = sbr.rel (%p330) target = $region44
      $region43: #{tpu_custom_call.1} parent=5 // pred_region
        // Predicated region
        $region45: #{tpu_custom_call.1} parent=43 // pred_check
          %p333 = pneg %p44
        $region46: #{tpu_custom_call.1} parent=43 // pred_check_branch
          %335 = sbr.rel (%p333) target = $region48
        $region47: #{tpu_custom_call.1} parent=43 // pred_region
          %s336 = sand.u32 %s34, 1
          %s337 = scalar_lea.sflag [#allocation3], %s336
          %s338 = sand.u32 %s34, 1
          %s339 = smul.addr %s338, 32
          %s340 = scalar_lea.vmem [#allocation2], %s339
          %s341 = smul.u32 4, %s24
          %s343 = ssub.s32 512, 512
          %344 = vsyncadd %s337, %s343
          %s345 = smul.addr %s341, 128
          %s346 = scalar_lea.hbm %s0, %s345
          %s347 = sshll.u32 %s340, 4
          %s348 = int_to_ptr.vmem [resolvable:$true] %s347
          %353 = dma.hbm_to_vmem [thread:$0]  %s346, 512, %s348, %s337, 128, 128, 8
        $region48: #{tpu_custom_call.1} parent=43 // pred_fallthru
          _
      $region44: #{tpu_custom_call.1} parent=5 // pred_fallthru
        _
      %p354 = scmp.le.s32.totalorder 1, %s24
      %p355 = scmp.lt.s32.totalorder %s24, 3
      %p356 = pnand %p354, %p355
      %p357 = pneg %p356
      // Predicated region
      $region49: #{tpu_custom_call.1} parent=5 // pred_check
        _
      $region50: #{tpu_custom_call.1} parent=5 // pred_check_branch
        %359 = sbr.rel (%p356) target = $region52
      $region51: #{tpu_custom_call.1} parent=5 // pred_region
        %s360 = ssub.s32 %s24, 1
        %s361 = sand.u32 %s37, 1
        %s362 = scalar_lea.sflag [#allocation3], %s361
        %s363 = sand.u32 %s37, 1
        %s364 = smul.addr %s363, 32
        %s365 = scalar_lea.vmem [#allocation2], %s364
        // Predicated region
        $region53: #{tpu_custom_call.1} parent=51 // pred_check
          %p366 = pneg %p50
        $region54: #{tpu_custom_call.1} parent=51 // pred_check_branch
          %368 = sbr.rel (%p366) target = $region56
        $region55: #{tpu_custom_call.1} parent=51 // pred_region
          %369 = dma.done %s362, 512
        $region56: #{tpu_custom_call.1} parent=51 // pred_fallthru
          _
        // Predicated region
        $region57: #{tpu_custom_call.1} parent=51 // pred_check
          %p370 = pneg %p71
        $region58: #{tpu_custom_call.1} parent=51 // pred_check_branch
          %372 = sbr.rel (%p370) target = $region60
        $region59: #{tpu_custom_call.1} parent=51 // pred_region
          %373 = dma.done [#allocation6], 4096
        $region60: #{tpu_custom_call.1} parent=51 // pred_fallthru
          _
        // Predicated region
        $region61: #{tpu_custom_call.1} parent=51 // pred_check
          %p374 = pneg %p92
        $region62: #{tpu_custom_call.1} parent=51 // pred_check_branch
          %376 = sbr.rel (%p374) target = $region64
        $region63: #{tpu_custom_call.1} parent=51 // pred_region
          %377 = dma.done [#allocation6], 512
        $region64: #{tpu_custom_call.1} parent=51 // pred_fallthru
          _
        // Predicated region
        $region65: #{tpu_custom_call.1} parent=51 // pred_check
          %p378 = pneg %p113
        $region66: #{tpu_custom_call.1} parent=51 // pred_check_branch
          %380 = sbr.rel (%p378) target = $region68
        $region67: #{tpu_custom_call.1} parent=51 // pred_region
          %381 = dma.done [#allocation9], 1024
        $region68: #{tpu_custom_call.1} parent=51 // pred_fallthru
          _
        // Predicated region
        $region69: #{tpu_custom_call.1} parent=51 // pred_check
          %p382 = pneg %p134
        $region70: #{tpu_custom_call.1} parent=51 // pred_check_branch
          %384 = sbr.rel (%p382) target = $region72
        $region71: #{tpu_custom_call.1} parent=51 // pred_region
          %385 = dma.done [#allocation9], 1024
        $region72: #{tpu_custom_call.1} parent=51 // pred_fallthru
          _
        // Predicated region
        $region73: #{tpu_custom_call.1} parent=51 // pred_check
          %p386 = pneg %p155
        $region74: #{tpu_custom_call.1} parent=51 // pred_check_branch
          %388 = sbr.rel (%p386) target = $region76
        $region75: #{tpu_custom_call.1} parent=51 // pred_region
          %389 = dma.done [#allocation12], 1024
        $region76: #{tpu_custom_call.1} parent=51 // pred_fallthru
          _
        // Predicated region
        $region77: #{tpu_custom_call.1} parent=51 // pred_check
          %p390 = pneg %p176
        $region78: #{tpu_custom_call.1} parent=51 // pred_check_branch
          %392 = sbr.rel (%p390) target = $region80
        $region79: #{tpu_custom_call.1} parent=51 // pred_region
          %393 = dma.done [#allocation12], 4096
        $region80: #{tpu_custom_call.1} parent=51 // pred_fallthru
          _
        // Predicated region
        $region81: #{tpu_custom_call.1} parent=51 // pred_check
          %p394 = pneg %p197
        $region82: #{tpu_custom_call.1} parent=51 // pred_check_branch
          %396 = sbr.rel (%p394) target = $region84
        $region83: #{tpu_custom_call.1} parent=51 // pred_region
          %397 = dma.done [#allocation15], 2560
        $region84: #{tpu_custom_call.1} parent=51 // pred_fallthru
          _
        %s398 = sand.u32 %s37, 1
        %s399 = scalar_lea.sflag [#allocation3], %s398
        %s400 = sand.u32 %s37, 1
        %s401 = smul.addr %s400, 32
        %s402 = scalar_lea.vmem [#allocation2], %s401
        %p403 = pneg %p50
        %p404 = pneg %p47
        %p405 = pneg %p71
        %p406 = pneg %p68
        %p407 = pneg %p92
        %p408 = pneg %p89
        %p409 = pneg %p113
        %p410 = pneg %p110
        %p411 = pneg %p134
        %p412 = pneg %p131
        %p413 = pneg %p155
        %p414 = pneg %p152
        %p415 = pneg %p176
        %p416 = pneg %p173
        %p417 = pneg %p197
        %p418 = pneg %p194
        %p419 = pneg %p223
        %p420 = pneg %p220
        %s421 = sand.u32 %s210, 1
        %s422 = scalar_lea.sflag [#allocation4], %s421
        %s423 = sand.u32 %s210, 1
        %s424 = smul.addr %s423, 32
        %s425 = scalar_lea.vmem [#allocation16], %s424
        %s426 = smul.u32 4, %s29
        %s427 = smul.u32 4, %s29
        %v428 = vld [vmem:[#allocation14] sm:$0xff]
        %v429 = vld [vmem:[#allocation14 + $0x8] sm:$0xff]
        %v430 = vld [vmem:[#allocation14 + $0x10] sm:$0xff]
        %v431 = vld [vmem:[#allocation14 + $0x18] sm:$0xff]
        %v432 = vld [vmem:[#allocation14 + $0x20] sm:$0xff]
        %v433 = vld [vmem:[#allocation14 + $0x28] sm:$0xff]
        %v434 = vld [vmem:[#allocation14 + $0x30] sm:$0xff]
        %v435 = vld [vmem:[#allocation14 + $0x38] sm:$0xff]
        %v436 = vld [vmem:[#allocation14 + $0x60] sm:$0xff]
        %v437 = vld [vmem:[#allocation14 + $0x68] sm:$0xff]
        %v438 = vld [vmem:[#allocation14 + $0x70] sm:$0xff]
        %v439 = vld [vmem:[#allocation14 + $0x78] sm:$0xff]
        %v440 = vld [vmem:[#allocation14 + $0x80] sm:$0xff]
        %v441 = vld [vmem:[#allocation14 + $0x88] sm:$0xff]
        %v442 = vld [vmem:[#allocation14 + $0x90] sm:$0xff]
        %v443 = vld [vmem:[#allocation14 + $0x98] sm:$0xff]
        %v444 = vld [vmem:[%s365] sm:$0xff]
        %v445 = vld [vmem:[%s365 + $0x8] sm:$0xff]
        %v446 = vld [vmem:[%s365 + $0x10] sm:$0xff]
        %v447 = vld [vmem:[%s365 + $0x18] sm:$0xff]
        %v448 = vld [vmem:[#allocation5] sm:$0xff]
        %v449 = vld [vmem:[#allocation5 + $0x8] sm:$0xff]
        %v450 = vld [vmem:[#allocation5 + $0x10] sm:$0xff]
        %v451 = vld [vmem:[#allocation5 + $0x18] sm:$0xff]
        %v452 = vld [vmem:[#allocation5 + $0x20] sm:$0xff]
        %v453 = vld [vmem:[#allocation5 + $0x28] sm:$0xff]
        %v454 = vld [vmem:[#allocation5 + $0x30] sm:$0xff]
        %v455 = vld [vmem:[#allocation5 + $0x38] sm:$0xff]
        %v456 = vld [vmem:[#allocation5 + $0x40] sm:$0xff]
        %v457 = vld [vmem:[#allocation5 + $0x48] sm:$0xff]
        %v458 = vld [vmem:[#allocation5 + $0x50] sm:$0xff]
        %v459 = vld [vmem:[#allocation5 + $0x58] sm:$0xff]
        %v460 = vld [vmem:[#allocation5 + $0x60] sm:$0xff]
        %v461 = vld [vmem:[#allocation5 + $0x68] sm:$0xff]
        %v462 = vld [vmem:[#allocation5 + $0x70] sm:$0xff]
        %v463 = vld [vmem:[#allocation5 + $0x78] sm:$0xff]
        %v464 = vld [vmem:[#allocation5 + $0x80] sm:$0xff]
        %v465 = vld [vmem:[#allocation5 + $0x88] sm:$0xff]
        %v466 = vld [vmem:[#allocation5 + $0x90] sm:$0xff]
        %v467 = vld [vmem:[#allocation5 + $0x98] sm:$0xff]
        %v468 = vld [vmem:[#allocation5 + $0xa0] sm:$0xff]
        %v469 = vld [vmem:[#allocation5 + $0xa8] sm:$0xff]
        %v470 = vld [vmem:[#allocation5 + $0xb0] sm:$0xff]
        %v471 = vld [vmem:[#allocation5 + $0xb8] sm:$0xff]
        %v472 = vld [vmem:[#allocation5 + $0xc0] sm:$0xff]
        %v473 = vld [vmem:[#allocation5 + $0xc8] sm:$0xff]
        %v474 = vld [vmem:[#allocation5 + $0xd0] sm:$0xff]
        %v475 = vld [vmem:[#allocation5 + $0xd8] sm:$0xff]
        %v476 = vld [vmem:[#allocation5 + $0xe0] sm:$0xff]
        %v477 = vld [vmem:[#allocation5 + $0xe8] sm:$0xff]
        %v478 = vld [vmem:[#allocation5 + $0xf0] sm:$0xff]
        %v479 = vld [vmem:[#allocation5 + $0xf8] sm:$0xff]
        %480 = vmatprep.subr.mxu0 %v479
        %481 = vmatpush1.msra.mxu0 %v478
        %482 = vmatprep.subr.mxu0 %v477
        %483 = vmatpush1.msra.mxu0 %v476
        %484 = vmatprep.subr.mxu0 %v475
        %485 = vmatpush1.msra.mxu0 %v474
        %486 = vmatprep.subr.mxu0 %v473
        %487 = vmatpush1.msra.mxu0 %v472
        %488 = vmatprep.subr.mxu0 %v471
        %489 = vmatpush1.msra.mxu0 %v470
        %490 = vmatprep.subr.mxu0 %v469
        %491 = vmatpush1.msra.mxu0 %v468
        %492 = vmatprep.subr.mxu0 %v467
        %493 = vmatpush1.msra.mxu0 %v466
        %494 = vmatprep.subr.mxu0 %v465
        %495 = vmatpush1.msra.mxu0 %v464
        %496 = vmatprep.subr.mxu0 %v463
        %497 = vmatpush1.msra.mxu0 %v462
        %498 = vmatprep.subr.mxu0 %v461
        %499 = vmatpush1.msra.mxu0 %v460
        %500 = vmatprep.subr.mxu0 %v459
        %501 = vmatpush1.msra.mxu0 %v458
        %502 = vmatprep.subr.mxu0 %v457
        %503 = vmatpush1.msra.mxu0 %v456
        %504 = vmatprep.subr.mxu0 %v455
        %505 = vmatpush1.msra.mxu0 %v454
        %506 = vmatprep.subr.mxu0 %v453
        %507 = vmatpush1.msra.mxu0 %v452
        %508 = vmatprep.subr.mxu0 %v451
        %509 = vmatpush1.msra.mxu0 %v450
        %510 = vmatprep.subr.mxu0 %v449
        %511 = vmatpush1.msra.mxu0 %v448
        %512 = vmatprep.subr.mxu0 0.0
        %513 = vmatpush2.msra.mxu0 0.0
        %514 = vmatprep.subr.mxu0 0.0
        %515 = vmatpush2.msra.mxu0 0.0
        %516 = vmatprep.subr.mxu0 0.0
        %517 = vmatpush2.msra.mxu0 0.0
        %518 = vmatprep.subr.mxu0 0.0
        %519 = vmatpush2.msra.mxu0 0.0
        %520 = vmatprep.subr.mxu0 0.0
        %521 = vmatpush2.msra.mxu0 0.0
        %522 = vmatprep.subr.mxu0 0.0
        %523 = vmatpush2.msra.mxu0 0.0
        %524 = vmatprep.subr.mxu0 0.0
        %525 = vmatpush2.msra.mxu0 0.0
        %526 = vmatprep.subr.mxu0 0.0
        %527 = vmatpush2.msra.mxu0 0.0
        %528 = vmatprep.subr.mxu0 0.0
        %529 = vmatpush2.msra.mxu0 0.0
        %530 = vmatprep.subr.mxu0 0.0
        %531 = vmatpush2.msra.mxu0 0.0
        %532 = vmatprep.subr.mxu0 0.0
        %533 = vmatpush2.msra.mxu0 0.0
        %534 = vmatprep.subr.mxu0 0.0
        %535 = vmatpush2.msra.mxu0 0.0
        %536 = vmatprep.subr.mxu0 0.0
        %537 = vmatpush2.msra.mxu0 0.0
        %538 = vmatprep.subr.mxu0 0.0
        %539 = vmatpush2.msra.mxu0 0.0
        %540 = vmatprep.subr.mxu0 0.0
        %541 = vmatpush2.msra.mxu0 0.0
        %542 = vmatprep.subr.mxu0 0.0
        %543 = vmatpush2.msra.mxu0 0.0
        %544 = vmatprep.mubr.f32.mxu0 0.0
        %545 = vmatmul.mubr.f32.gmra.mxu0 %v444
        %v546 = vpop.f32.mrf.mxu0
        %v547 = vadd.f32 0.0, %v546
        %v548 = vpop.f32.mrf.mxu0
        %v549 = vadd.f32 0.0, %v548
        %550 = vmatprep.mubr.f32.mxu0 0.0
        %551 = vmatmul.mubr.f32.gmra.mxu0 %v445
        %v552 = vpop.f32.mrf.mxu0
        %v553 = vadd.f32 0.0, %v552
        %v554 = vpop.f32.mrf.mxu0
        %v555 = vadd.f32 0.0, %v554
        %556 = vmatprep.mubr.f32.mxu0 0.0
        %557 = vmatmul.mubr.f32.gmra.mxu0 %v446
        %v558 = vpop.f32.mrf.mxu0
        %v559 = vadd.f32 0.0, %v558
        %v560 = vpop.f32.mrf.mxu0
        %v561 = vadd.f32 0.0, %v560
        %562 = vmatprep.mubr.f32.mxu0 0.0
        %563 = vmatmul.mubr.f32.gmra.mxu0 %v447
        %v564 = vpop.f32.mrf.mxu0
        %v565 = vadd.f32 0.0, %v564
        %v566 = vpop.f32.mrf.mxu0
        %v567 = vadd.f32 0.0, %v566
        %568 = vdwg.mxu0
        %569 = vrot.lane.b32.xlu0 %v547, 2
        %v570 = vpop.permute.xlu0 %569
        %571 = vrot.lane.b32.xlu0 %v553, 2
        %v572 = vpop.permute.xlu0 %571
        %573 = vrot.lane.b32.xlu0 %v559, 2
        %v574 = vpop.permute.xlu0 %573
        %575 = vrot.lane.b32.xlu0 %v565, 2
        %v576 = vpop.permute.xlu0 %575
        %577 = vrot.lane.b32.xlu0 %v549, 2
        %v578 = vpop.permute.xlu0 %577
        %579 = vrot.lane.b32.xlu0 %v555, 2
        %v580 = vpop.permute.xlu0 %579
        %581 = vrot.lane.b32.xlu0 %v561, 2
        %v582 = vpop.permute.xlu0 %581
        %583 = vrot.lane.b32.xlu0 %v567, 2
        %v584 = vpop.permute.xlu0 %583
        %v585 = vlaneseq
        %v586 = vand.u32 %v585, 127
        %vm587 = vcmp.lt.s32.totalorder %v586, 2
        %v588 = vsel %vm587, %v570, %v578
        %v589 = vsel %vm587, %v572, %v580
        %v590 = vsel %vm587, %v574, %v582
        %v591 = vsel %vm587, %v576, %v584
        %v592 = vsel %vm587, %v578, %v570
        %v593 = vsel %vm587, %v580, %v572
        %v594 = vsel %vm587, %v582, %v574
        %v595 = vsel %vm587, %v584, %v576
        %596 = vrot.lane.b32.xlu0 %v547, 1
        %v597 = vpop.permute.xlu0 %596
        %598 = vrot.lane.b32.xlu0 %v553, 1
        %v599 = vpop.permute.xlu0 %598
        %600 = vrot.lane.b32.xlu0 %v559, 1
        %v601 = vpop.permute.xlu0 %600
        %602 = vrot.lane.b32.xlu0 %v565, 1
        %v603 = vpop.permute.xlu0 %602
        %604 = vrot.lane.b32.xlu0 %v549, 1
        %v605 = vpop.permute.xlu0 %604
        %606 = vrot.lane.b32.xlu0 %v555, 1
        %v607 = vpop.permute.xlu0 %606
        %608 = vrot.lane.b32.xlu0 %v561, 1
        %v609 = vpop.permute.xlu0 %608
        %610 = vrot.lane.b32.xlu0 %v567, 1
        %v611 = vpop.permute.xlu0 %610
        %vm612 = vcmp.lt.s32.totalorder %v586, 1
        %v613 = vsel %vm612, %v597, %v605
        %v614 = vsel %vm612, %v599, %v607
        %v615 = vsel %vm612, %v601, %v609
        %v616 = vsel %vm612, %v603, %v611
        %v617 = vsel %vm612, %v605, %v597
        %v618 = vsel %vm612, %v607, %v599
        %v619 = vsel %vm612, %v609, %v601
        %v620 = vsel %vm612, %v611, %v603
        %621 = vrot.lane.b32.xlu0 %v547, 127
        %v622 = vpop.permute.xlu0 %621
        %623 = vrot.lane.b32.xlu0 %v553, 127
        %v624 = vpop.permute.xlu0 %623
        %625 = vrot.lane.b32.xlu0 %v559, 127
        %v626 = vpop.permute.xlu0 %625
        %627 = vrot.lane.b32.xlu0 %v565, 127
        %v628 = vpop.permute.xlu0 %627
        %629 = vrot.lane.b32.xlu0 %v549, 127
        %v630 = vpop.permute.xlu0 %629
        %631 = vrot.lane.b32.xlu0 %v555, 127
        %v632 = vpop.permute.xlu0 %631
        %633 = vrot.lane.b32.xlu0 %v561, 127
        %v634 = vpop.permute.xlu0 %633
        %635 = vrot.lane.b32.xlu0 %v567, 127
        %v636 = vpop.permute.xlu0 %635
        %vm637 = vcmp.lt.s32.totalorder %v586, 127
        %v638 = vsel %vm637, %v622, %v630
        %v639 = vsel %vm637, %v624, %v632
        %v640 = vsel %vm637, %v626, %v634
        %v641 = vsel %vm637, %v628, %v636
        %v642 = vsel %vm637, %v630, %v622
        %v643 = vsel %vm637, %v632, %v624
        %v644 = vsel %vm637, %v634, %v626
        %v645 = vsel %vm637, %v636, %v628
        %646 = vrot.lane.b32.xlu0 %v547, 126
        %v647 = vpop.permute.xlu0 %646
        %648 = vrot.lane.b32.xlu0 %v553, 126
        %v649 = vpop.permute.xlu0 %648
        %650 = vrot.lane.b32.xlu0 %v559, 126
        %v651 = vpop.permute.xlu0 %650
        %652 = vrot.lane.b32.xlu0 %v565, 126
        %v653 = vpop.permute.xlu0 %652
        %654 = vrot.lane.b32.xlu0 %v549, 126
        %v655 = vpop.permute.xlu0 %654
        %656 = vrot.lane.b32.xlu0 %v555, 126
        %v657 = vpop.permute.xlu0 %656
        %658 = vrot.lane.b32.xlu0 %v561, 126
        %v659 = vpop.permute.xlu0 %658
        %660 = vrot.lane.b32.xlu0 %v567, 126
        %v661 = vpop.permute.xlu0 %660
        %vm662 = vcmp.lt.s32.totalorder %v586, 126
        %v663 = vsel %vm662, %v647, %v655
        %v664 = vsel %vm662, %v649, %v657
        %v665 = vsel %vm662, %v651, %v659
        %v666 = vsel %vm662, %v653, %v661
        %v667 = vsel %vm662, %v655, %v647
        %v668 = vsel %vm662, %v657, %v649
        %v669 = vsel %vm662, %v659, %v651
        %v670 = vsel %vm662, %v661, %v653
        %v671 = vld [vmem:[#allocation7] sm:$0xff]
        %v672 = vld [vmem:[#allocation7 + $0x8] sm:$0xff]
        %v673 = vld [vmem:[#allocation7 + $0x10] sm:$0x1]
        %v674 = vld [vmem:[#allocation7 + $0x18] sm:$0x1]
        %v675 = vlaneseq
        %v676 = vshrl.u32 %v675, 7
        %v677 = vsub.s32 0, %v676
        %v678 = vrot.slane %v671, %v677
        %v679 = vlaneseq
        %v680 = vshrl.u32 %v679, 7
        %v681 = vsub.s32 0, %v680
        %v682 = vrot.slane %v672, %v681
        %v683 = vmul.f32 %v617, %v678
        %v684 = vmul.f32 %v613, %v682
        %v685 = vmul.f32 %v618, %v678
        %v686 = vmul.f32 %v614, %v682
        %v687 = vmul.f32 %v619, %v678
        %v688 = vmul.f32 %v615, %v682
        %v689 = vmul.f32 %v620, %v678
        %v690 = vmul.f32 %v616, %v682
        %v691 = vlaneseq
        %v692 = vshrl.u32 %v691, 7
        %v693 = vsub.s32 1, %v692
        %v694 = vrot.slane %v671, %v693
        %v695 = vlaneseq
        %v696 = vshrl.u32 %v695, 7
        %v697 = vsub.s32 1, %v696
        %v698 = vrot.slane %v672, %v697
        %v699 = vmul.f32 %v547, %v694
        %v700 = vmul.f32 %v549, %v698
        %v701 = vmul.f32 %v553, %v694
        %v702 = vmul.f32 %v555, %v698
        %v703 = vmul.f32 %v559, %v694
        %v704 = vmul.f32 %v561, %v698
        %v705 = vmul.f32 %v565, %v694
        %v706 = vmul.f32 %v567, %v698
        %v707 = vadd.f32 %v683, %v699
        %v708 = vadd.f32 %v684, %v700
        %v709 = vadd.f32 %v685, %v701
        %v710 = vadd.f32 %v686, %v702
        %v711 = vadd.f32 %v687, %v703
        %v712 = vadd.f32 %v688, %v704
        %v713 = vadd.f32 %v689, %v705
        %v714 = vadd.f32 %v690, %v706
        %v715 = vlaneseq
        %v716 = vshrl.u32 %v715, 7
        %v717 = vsub.s32 2, %v716
        %v718 = vrot.slane %v671, %v717
        %v719 = vlaneseq
        %v720 = vshrl.u32 %v719, 7
        %v721 = vsub.s32 2, %v720
        %v722 = vrot.slane %v672, %v721
        %v723 = vmul.f32 %v638, %v718
        %v724 = vmul.f32 %v642, %v722
        %v725 = vmul.f32 %v639, %v718
        %v726 = vmul.f32 %v643, %v722
        %v727 = vmul.f32 %v640, %v718
        %v728 = vmul.f32 %v644, %v722
        %v729 = vmul.f32 %v641, %v718
        %v730 = vmul.f32 %v645, %v722
        %v731 = vadd.f32 %v707, %v723
        %v732 = vadd.f32 %v708, %v724
        %v733 = vadd.f32 %v709, %v725
        %v734 = vadd.f32 %v710, %v726
        %v735 = vadd.f32 %v711, %v727
        %v736 = vadd.f32 %v712, %v728
        %v737 = vadd.f32 %v713, %v729
        %v738 = vadd.f32 %v714, %v730
        %v739 = vlaneseq
        %v740 = vshrl.u32 %v739, 7
        %v741 = vsub.s32 3, %v740
        %v742 = vrot.slane %v671, %v741
        %v743 = vlaneseq
        %v744 = vshrl.u32 %v743, 7
        %v745 = vsub.s32 3, %v744
        %v746 = vrot.slane %v672, %v745
        %v747 = vmul.f32 %v617, %v742
        %v748 = vmul.f32 %v613, %v746
        %v749 = vmul.f32 %v618, %v742
        %v750 = vmul.f32 %v614, %v746
        %v751 = vmul.f32 %v619, %v742
        %v752 = vmul.f32 %v615, %v746
        %v753 = vmul.f32 %v620, %v742
        %v754 = vmul.f32 %v616, %v746
        %v755 = vlaneseq
        %v756 = vshrl.u32 %v755, 7
        %v757 = vsub.s32 4, %v756
        %v758 = vrot.slane %v671, %v757
        %v759 = vlaneseq
        %v760 = vshrl.u32 %v759, 7
        %v761 = vsub.s32 4, %v760
        %v762 = vrot.slane %v672, %v761
        %v763 = vmul.f32 %v547, %v758
        %v764 = vmul.f32 %v549, %v762
        %v765 = vmul.f32 %v553, %v758
        %v766 = vmul.f32 %v555, %v762
        %v767 = vmul.f32 %v559, %v758
        %v768 = vmul.f32 %v561, %v762
        %v769 = vmul.f32 %v565, %v758
        %v770 = vmul.f32 %v567, %v762
        %v771 = vadd.f32 %v747, %v763
        %v772 = vadd.f32 %v748, %v764
        %v773 = vadd.f32 %v749, %v765
        %v774 = vadd.f32 %v750, %v766
        %v775 = vadd.f32 %v751, %v767
        %v776 = vadd.f32 %v752, %v768
        %v777 = vadd.f32 %v753, %v769
        %v778 = vadd.f32 %v754, %v770
        %v779 = vlaneseq
        %v780 = vshrl.u32 %v779, 7
        %v781 = vsub.s32 5, %v780
        %v782 = vrot.slane %v671, %v781
        %v783 = vlaneseq
        %v784 = vshrl.u32 %v783, 7
        %v785 = vsub.s32 5, %v784
        %v786 = vrot.slane %v672, %v785
        %v787 = vmul.f32 %v638, %v782
        %v788 = vmul.f32 %v642, %v786
        %v789 = vmul.f32 %v639, %v782
        %v790 = vmul.f32 %v643, %v786
        %v791 = vmul.f32 %v640, %v782
        %v792 = vmul.f32 %v644, %v786
        %v793 = vmul.f32 %v641, %v782
        %v794 = vmul.f32 %v645, %v786
        %v795 = vadd.f32 %v771, %v787
        %v796 = vadd.f32 %v772, %v788
        %v797 = vadd.f32 %v773, %v789
        %v798 = vadd.f32 %v774, %v790
        %v799 = vadd.f32 %v775, %v791
        %v800 = vadd.f32 %v776, %v792
        %v801 = vadd.f32 %v777, %v793
        %v802 = vadd.f32 %v778, %v794
        %vm803 = vcmask 261120
        %v805 = vsel %vm803, %v432, 0
        %v808 = vsel %vm803, %v433, 0
        %v811 = vsel %vm803, %v434, 0
        %v814 = vsel %vm803, %v435, 0
        %816 = vmatprep.subr.mxu0 0.0
        %817 = vmatpush1.msra.mxu0 0.0
        %818 = vmatprep.subr.mxu0 0.0
        %819 = vmatpush1.msra.mxu0 0.0
        %820 = vmatprep.subr.mxu0 0.0
        %821 = vmatpush1.msra.mxu0 0.0
        %822 = vmatprep.subr.mxu0 0.0
        %823 = vmatpush1.msra.mxu0 0.0
        %824 = vmatprep.subr.mxu0 0.0
        %825 = vmatpush1.msra.mxu0 0.0
        %826 = vmatprep.subr.mxu0 0.0
        %827 = vmatpush1.msra.mxu0 0.0
        %828 = vmatprep.subr.mxu0 0.0
        %829 = vmatpush1.msra.mxu0 0.0
        %830 = vmatprep.subr.mxu0 0.0
        %831 = vmatpush1.msra.mxu0 0.0
        %832 = vmatprep.subr.mxu0 0.0
        %833 = vmatpush1.msra.mxu0 0.0
        %834 = vmatprep.subr.mxu0 0.0
        %835 = vmatpush1.msra.mxu0 0.0
        %836 = vmatprep.subr.mxu0 0.0
        %837 = vmatpush1.msra.mxu0 0.0
        %838 = vmatprep.subr.mxu0 0.0
        %839 = vmatpush1.msra.mxu0 0.0
        %840 = vmatprep.subr.mxu0 %v738
        %841 = vmatpush1.msra.mxu0 %v737
        %842 = vmatprep.subr.mxu0 %v736
        %843 = vmatpush1.msra.mxu0 %v735
        %844 = vmatprep.subr.mxu0 %v734
        %845 = vmatpush1.msra.mxu0 %v733
        %846 = vmatprep.subr.mxu0 %v732
        %847 = vmatpush1.msra.mxu0 %v731
        %848 = vmatprep.subr.mxu0 0.0
        %849 = vmatpush2.msra.mxu0 0.0
        %850 = vmatprep.subr.mxu0 0.0
        %851 = vmatpush2.msra.mxu0 0.0
        %852 = vmatprep.subr.mxu0 0.0
        %853 = vmatpush2.msra.mxu0 0.0
        %854 = vmatprep.subr.mxu0 0.0
        %855 = vmatpush2.msra.mxu0 0.0
        %856 = vmatprep.subr.mxu0 0.0
        %857 = vmatpush2.msra.mxu0 0.0
        %858 = vmatprep.subr.mxu0 0.0
        %859 = vmatpush2.msra.mxu0 0.0
        %860 = vmatprep.subr.mxu0 0.0
        %861 = vmatpush2.msra.mxu0 0.0
        %862 = vmatprep.subr.mxu0 0.0
        %863 = vmatpush2.msra.mxu0 0.0
        %864 = vmatprep.subr.mxu0 0.0
        %865 = vmatpush2.msra.mxu0 0.0
        %866 = vmatprep.subr.mxu0 0.0
        %867 = vmatpush2.msra.mxu0 0.0
        %868 = vmatprep.subr.mxu0 0.0
        %869 = vmatpush2.msra.mxu0 0.0
        %870 = vmatprep.subr.mxu0 0.0
        %871 = vmatpush2.msra.mxu0 0.0
        %872 = vmatprep.subr.mxu0 0.0
        %873 = vmatpush2.msra.mxu0 0.0
        %874 = vmatprep.subr.mxu0 0.0
        %875 = vmatpush2.msra.mxu0 0.0
        %876 = vmatprep.subr.mxu0 0.0
        %877 = vmatpush2.msra.mxu0 0.0
        %878 = vmatprep.subr.mxu0 0.0
        %879 = vmatpush2.msra.mxu0 0.0
        %880 = vmatprep.mubr.f32.mxu0 0.0
        %881 = vmatmul.mubr.f32.gmra.mxu0 %v805
        %v882 = vpop.f32.mrf.mxu0
        %v883 = vadd.f32 %v795, %v882
        %v884 = vpop.f32.mrf.mxu0
        %v885 = vadd.f32 %v796, %v884
        %886 = vmatprep.mubr.f32.mxu0 0.0
        %887 = vmatmul.mubr.f32.gmra.mxu0 %v808
        %v888 = vpop.f32.mrf.mxu0
        %v889 = vadd.f32 %v797, %v888
        %v890 = vpop.f32.mrf.mxu0
        %v891 = vadd.f32 %v798, %v890
        %892 = vmatprep.mubr.f32.mxu0 0.0
        %893 = vmatmul.mubr.f32.gmra.mxu0 %v811
        %v894 = vpop.f32.mrf.mxu0
        %v895 = vadd.f32 %v799, %v894
        %v896 = vpop.f32.mrf.mxu0
        %v897 = vadd.f32 %v800, %v896
        %898 = vmatprep.mubr.f32.mxu0 0.0
        %899 = vmatmul.mubr.f32.gmra.mxu0 %v814
        %v900 = vpop.f32.mrf.mxu0
        %v901 = vadd.f32 %v801, %v900
        %v902 = vpop.f32.mrf.mxu0
        %v903 = vadd.f32 %v802, %v902
        %904 = vdwg.mxu0
        %v905 = vlaneseq
        %v906 = vshrl.u32 %v905, 7
        %v907 = vsub.s32 6, %v906
        %v908 = vrot.slane %v671, %v907
        %v909 = vlaneseq
        %v910 = vshrl.u32 %v909, 7
        %v911 = vsub.s32 6, %v910
        %v912 = vrot.slane %v672, %v911
        %v913 = vmul.f32 %v617, %v908
        %v914 = vmul.f32 %v613, %v912
        %v915 = vmul.f32 %v618, %v908
        %v916 = vmul.f32 %v614, %v912
        %v917 = vmul.f32 %v619, %v908
        %v918 = vmul.f32 %v615, %v912
        %v919 = vmul.f32 %v620, %v908
        %v920 = vmul.f32 %v616, %v912
        %v921 = vlaneseq
        %v922 = vshrl.u32 %v921, 7
        %v923 = vsub.s32 7, %v922
        %v924 = vrot.slane %v671, %v923
        %v925 = vlaneseq
        %v926 = vshrl.u32 %v925, 7
        %v927 = vsub.s32 7, %v926
        %v928 = vrot.slane %v672, %v927
        %v929 = vmul.f32 %v547, %v924
        %v930 = vmul.f32 %v549, %v928
        %v931 = vmul.f32 %v553, %v924
        %v932 = vmul.f32 %v555, %v928
        %v933 = vmul.f32 %v559, %v924
        %v934 = vmul.f32 %v561, %v928
        %v935 = vmul.f32 %v565, %v924
        %v936 = vmul.f32 %v567, %v928
        %v937 = vadd.f32 %v913, %v929
        %v938 = vadd.f32 %v914, %v930
        %v939 = vadd.f32 %v915, %v931
        %v940 = vadd.f32 %v916, %v932
        %v941 = vadd.f32 %v917, %v933
        %v942 = vadd.f32 %v918, %v934
        %v943 = vadd.f32 %v919, %v935
        %v944 = vadd.f32 %v920, %v936
        %v945 = vlaneseq
        %v946 = vshrl.u32 %v945, 7
        %v947 = vsub.s32 0, %v946
        %v948 = vrot.slane %v673, %v947
        %v949 = vlaneseq
        %v950 = vshrl.u32 %v949, 7
        %v951 = vsub.s32 0, %v950
        %v952 = vrot.slane %v674, %v951
        %v953 = vmul.f32 %v638, %v948
        %v954 = vmul.f32 %v642, %v952
        %v955 = vmul.f32 %v639, %v948
        %v956 = vmul.f32 %v643, %v952
        %v957 = vmul.f32 %v640, %v948
        %v958 = vmul.f32 %v644, %v952
        %v959 = vmul.f32 %v641, %v948
        %v960 = vmul.f32 %v645, %v952
        %v961 = vadd.f32 %v937, %v953
        %v962 = vadd.f32 %v938, %v954
        %v963 = vadd.f32 %v939, %v955
        %v964 = vadd.f32 %v940, %v956
        %v965 = vadd.f32 %v941, %v957
        %v966 = vadd.f32 %v942, %v958
        %v967 = vadd.f32 %v943, %v959
        %v968 = vadd.f32 %v944, %v960
        %v970 = vsel %vm803, %v436, 0
        %v973 = vsel %vm803, %v437, 0
        %v976 = vsel %vm803, %v438, 0
        %v979 = vsel %vm803, %v439, 0
        %981 = vmatprep.subr.mxu0 0.0
        %982 = vmatpush1.msra.mxu0 0.0
        %983 = vmatprep.subr.mxu0 0.0
        %984 = vmatpush1.msra.mxu0 0.0
        %985 = vmatprep.subr.mxu0 0.0
        %986 = vmatpush1.msra.mxu0 0.0
        %987 = vmatprep.subr.mxu0 0.0
        %988 = vmatpush1.msra.mxu0 0.0
        %989 = vmatprep.subr.mxu0 0.0
        %990 = vmatpush1.msra.mxu0 0.0
        %991 = vmatprep.subr.mxu0 0.0
        %992 = vmatpush1.msra.mxu0 0.0
        %993 = vmatprep.subr.mxu0 0.0
        %994 = vmatpush1.msra.mxu0 0.0
        %995 = vmatprep.subr.mxu0 0.0
        %996 = vmatpush1.msra.mxu0 0.0
        %997 = vmatprep.subr.mxu0 0.0
        %998 = vmatpush1.msra.mxu0 0.0
        %999 = vmatprep.subr.mxu0 0.0
        %1000 = vmatpush1.msra.mxu0 0.0
        %1001 = vmatprep.subr.mxu0 0.0
        %1002 = vmatpush1.msra.mxu0 0.0
        %1003 = vmatprep.subr.mxu0 0.0
        %1004 = vmatpush1.msra.mxu0 0.0
        %1005 = vmatprep.subr.mxu0 %v968
        %1006 = vmatpush1.msra.mxu0 %v967
        %1007 = vmatprep.subr.mxu0 %v966
        %1008 = vmatpush1.msra.mxu0 %v965
        %1009 = vmatprep.subr.mxu0 %v964
        %1010 = vmatpush1.msra.mxu0 %v963
        %1011 = vmatprep.subr.mxu0 %v962
        %1012 = vmatpush1.msra.mxu0 %v961
        %1013 = vmatprep.subr.mxu0 0.0
        %1014 = vmatpush2.msra.mxu0 0.0
        %1015 = vmatprep.subr.mxu0 0.0
        %1016 = vmatpush2.msra.mxu0 0.0
        %1017 = vmatprep.subr.mxu0 0.0
        %1018 = vmatpush2.msra.mxu0 0.0
        %1019 = vmatprep.subr.mxu0 0.0
        %1020 = vmatpush2.msra.mxu0 0.0
        %1021 = vmatprep.subr.mxu0 0.0
        %1022 = vmatpush2.msra.mxu0 0.0
        %1023 = vmatprep.subr.mxu0 0.0
        %1024 = vmatpush2.msra.mxu0 0.0
        %1025 = vmatprep.subr.mxu0 0.0
        %1026 = vmatpush2.msra.mxu0 0.0
        %1027 = vmatprep.subr.mxu0 0.0
        %1028 = vmatpush2.msra.mxu0 0.0
        %1029 = vmatprep.subr.mxu0 0.0
        %1030 = vmatpush2.msra.mxu0 0.0
        %1031 = vmatprep.subr.mxu0 0.0
        %1032 = vmatpush2.msra.mxu0 0.0
        %1033 = vmatprep.subr.mxu0 0.0
        %1034 = vmatpush2.msra.mxu0 0.0
        %1035 = vmatprep.subr.mxu0 0.0
        %1036 = vmatpush2.msra.mxu0 0.0
        %1037 = vmatprep.subr.mxu0 0.0
        %1038 = vmatpush2.msra.mxu0 0.0
        %1039 = vmatprep.subr.mxu0 0.0
        %1040 = vmatpush2.msra.mxu0 0.0
        %1041 = vmatprep.subr.mxu0 0.0
        %1042 = vmatpush2.msra.mxu0 0.0
        %1043 = vmatprep.subr.mxu0 0.0
        %1044 = vmatpush2.msra.mxu0 0.0
        %1045 = vmatprep.mubr.f32.mxu0 0.0
        %1046 = vmatmul.mubr.f32.gmra.mxu0 %v970
        %v1047 = vpop.f32.mrf.mxu0
        %v1048 = vadd.f32 0.0, %v1047
        %v1049 = vpop.f32.mrf.mxu0
        %v1050 = vadd.f32 0.0, %v1049
        %1051 = vmatprep.mubr.f32.mxu0 0.0
        %1052 = vmatmul.mubr.f32.gmra.mxu0 %v973
        %v1053 = vpop.f32.mrf.mxu0
        %v1054 = vadd.f32 0.0, %v1053
        %v1055 = vpop.f32.mrf.mxu0
        %v1056 = vadd.f32 0.0, %v1055
        %1057 = vmatprep.mubr.f32.mxu0 0.0
        %1058 = vmatmul.mubr.f32.gmra.mxu0 %v976
        %v1059 = vpop.f32.mrf.mxu0
        %v1060 = vadd.f32 0.0, %v1059
        %v1061 = vpop.f32.mrf.mxu0
        %v1062 = vadd.f32 0.0, %v1061
        %1063 = vmatprep.mubr.f32.mxu0 0.0
        %1064 = vmatmul.mubr.f32.gmra.mxu0 %v979
        %v1065 = vpop.f32.mrf.mxu0
        %v1066 = vadd.f32 0.0, %v1065
        %v1067 = vpop.f32.mrf.mxu0
        %v1068 = vadd.f32 0.0, %v1067
        %1069 = vdwg.mxu0
        %v1070 = vadd.f32 %v883, %v1048
        %v1071 = vadd.f32 %v885, %v1050
        %v1072 = vadd.f32 %v889, %v1054
        %v1073 = vadd.f32 %v891, %v1056
        %v1074 = vadd.f32 %v895, %v1060
        %v1075 = vadd.f32 %v897, %v1062
        %v1076 = vadd.f32 %v901, %v1066
        %v1077 = vadd.f32 %v903, %v1068
        %v1078 = vld [vmem:[#allocation8] sm:$0xff]
        %v1079 = vld [vmem:[#allocation8 + $0x8] sm:$0xff]
        %v1080 = vld [vmem:[#allocation8 + $0x10] sm:$0xff]
        %v1081 = vld [vmem:[#allocation8 + $0x18] sm:$0xff]
        %v1082 = vld [vmem:[#allocation8 + $0x20] sm:$0xff]
        %v1083 = vld [vmem:[#allocation8 + $0x28] sm:$0xff]
        %v1084 = vld [vmem:[#allocation8 + $0x30] sm:$0x1]
        %v1085 = vld [vmem:[#allocation8 + $0x38] sm:$0x1]
        %v1086 = vlaneseq
        %v1087 = vshrl.u32 %v1086, 7
        %v1088 = vsub.s32 0, %v1087
        %v1089 = vrot.slane %v1078, %v1088
        %v1090 = vlaneseq
        %v1091 = vshrl.u32 %v1090, 7
        %v1092 = vsub.s32 0, %v1091
        %v1093 = vrot.slane %v1079, %v1092
        %v1094 = vmul.f32 %v592, %v1089
        %v1095 = vmul.f32 %v588, %v1093
        %v1096 = vmul.f32 %v593, %v1089
        %v1097 = vmul.f32 %v589, %v1093
        %v1098 = vmul.f32 %v594, %v1089
        %v1099 = vmul.f32 %v590, %v1093
        %v1100 = vmul.f32 %v595, %v1089
        %v1101 = vmul.f32 %v591, %v1093
        %v1102 = vlaneseq
        %v1103 = vshrl.u32 %v1102, 7
        %v1104 = vsub.s32 1, %v1103
        %v1105 = vrot.slane %v1078, %v1104
        %v1106 = vlaneseq
        %v1107 = vshrl.u32 %v1106, 7
        %v1108 = vsub.s32 1, %v1107
        %v1109 = vrot.slane %v1079, %v1108
        %v1110 = vmul.f32 %v617, %v1105
        %v1111 = vmul.f32 %v613, %v1109
        %v1112 = vmul.f32 %v618, %v1105
        %v1113 = vmul.f32 %v614, %v1109
        %v1114 = vmul.f32 %v619, %v1105
        %v1115 = vmul.f32 %v615, %v1109
        %v1116 = vmul.f32 %v620, %v1105
        %v1117 = vmul.f32 %v616, %v1109
        %v1118 = vadd.f32 %v1094, %v1110
        %v1119 = vadd.f32 %v1095, %v1111
        %v1120 = vadd.f32 %v1096, %v1112
        %v1121 = vadd.f32 %v1097, %v1113
        %v1122 = vadd.f32 %v1098, %v1114
        %v1123 = vadd.f32 %v1099, %v1115
        %v1124 = vadd.f32 %v1100, %v1116
        %v1125 = vadd.f32 %v1101, %v1117
        %v1126 = vlaneseq
        %v1127 = vshrl.u32 %v1126, 7
        %v1128 = vsub.s32 2, %v1127
        %v1129 = vrot.slane %v1078, %v1128
        %v1130 = vlaneseq
        %v1131 = vshrl.u32 %v1130, 7
        %v1132 = vsub.s32 2, %v1131
        %v1133 = vrot.slane %v1079, %v1132
        %v1134 = vmul.f32 %v547, %v1129
        %v1135 = vmul.f32 %v549, %v1133
        %v1136 = vmul.f32 %v553, %v1129
        %v1137 = vmul.f32 %v555, %v1133
        %v1138 = vmul.f32 %v559, %v1129
        %v1139 = vmul.f32 %v561, %v1133
        %v1140 = vmul.f32 %v565, %v1129
        %v1141 = vmul.f32 %v567, %v1133
        %v1142 = vadd.f32 %v1118, %v1134
        %v1143 = vadd.f32 %v1119, %v1135
        %v1144 = vadd.f32 %v1120, %v1136
        %v1145 = vadd.f32 %v1121, %v1137
        %v1146 = vadd.f32 %v1122, %v1138
        %v1147 = vadd.f32 %v1123, %v1139
        %v1148 = vadd.f32 %v1124, %v1140
        %v1149 = vadd.f32 %v1125, %v1141
        %v1150 = vlaneseq
        %v1151 = vshrl.u32 %v1150, 7
        %v1152 = vsub.s32 3, %v1151
        %v1153 = vrot.slane %v1078, %v1152
        %v1154 = vlaneseq
        %v1155 = vshrl.u32 %v1154, 7
        %v1156 = vsub.s32 3, %v1155
        %v1157 = vrot.slane %v1079, %v1156
        %v1158 = vmul.f32 %v638, %v1153
        %v1159 = vmul.f32 %v642, %v1157
        %v1160 = vmul.f32 %v639, %v1153
        %v1161 = vmul.f32 %v643, %v1157
        %v1162 = vmul.f32 %v640, %v1153
        %v1163 = vmul.f32 %v644, %v1157
        %v1164 = vmul.f32 %v641, %v1153
        %v1165 = vmul.f32 %v645, %v1157
        %v1166 = vadd.f32 %v1142, %v1158
        %v1167 = vadd.f32 %v1143, %v1159
        %v1168 = vadd.f32 %v1144, %v1160
        %v1169 = vadd.f32 %v1145, %v1161
        %v1170 = vadd.f32 %v1146, %v1162
        %v1171 = vadd.f32 %v1147, %v1163
        %v1172 = vadd.f32 %v1148, %v1164
        %v1173 = vadd.f32 %v1149, %v1165
        %v1174 = vlaneseq
        %v1175 = vshrl.u32 %v1174, 7
        %v1176 = vsub.s32 4, %v1175
        %v1177 = vrot.slane %v1078, %v1176
        %v1178 = vlaneseq
        %v1179 = vshrl.u32 %v1178, 7
        %v1180 = vsub.s32 4, %v1179
        %v1181 = vrot.slane %v1079, %v1180
        %v1182 = vmul.f32 %v663, %v1177
        %v1183 = vmul.f32 %v667, %v1181
        %v1184 = vmul.f32 %v664, %v1177
        %v1185 = vmul.f32 %v668, %v1181
        %v1186 = vmul.f32 %v665, %v1177
        %v1187 = vmul.f32 %v669, %v1181
        %v1188 = vmul.f32 %v666, %v1177
        %v1189 = vmul.f32 %v670, %v1181
        %v1190 = vadd.f32 %v1166, %v1182
        %v1191 = vadd.f32 %v1167, %v1183
        %v1192 = vadd.f32 %v1168, %v1184
        %v1193 = vadd.f32 %v1169, %v1185
        %v1194 = vadd.f32 %v1170, %v1186
        %v1195 = vadd.f32 %v1171, %v1187
        %v1196 = vadd.f32 %v1172, %v1188
        %v1197 = vadd.f32 %v1173, %v1189
        %v1198 = vlaneseq
        %v1199 = vshrl.u32 %v1198, 7
        %v1200 = vsub.s32 5, %v1199
        %v1201 = vrot.slane %v1078, %v1200
        %v1202 = vlaneseq
        %v1203 = vshrl.u32 %v1202, 7
        %v1204 = vsub.s32 5, %v1203
        %v1205 = vrot.slane %v1079, %v1204
        %v1206 = vmul.f32 %v592, %v1201
        %v1207 = vmul.f32 %v588, %v1205
        %v1208 = vmul.f32 %v593, %v1201
        %v1209 = vmul.f32 %v589, %v1205
        %v1210 = vmul.f32 %v594, %v1201
        %v1211 = vmul.f32 %v590, %v1205
        %v1212 = vmul.f32 %v595, %v1201
        %v1213 = vmul.f32 %v591, %v1205
        %v1214 = vlaneseq
        %v1215 = vshrl.u32 %v1214, 7
        %v1216 = vsub.s32 6, %v1215
        %v1217 = vrot.slane %v1078, %v1216
        %v1218 = vlaneseq
        %v1219 = vshrl.u32 %v1218, 7
        %v1220 = vsub.s32 6, %v1219
        %v1221 = vrot.slane %v1079, %v1220
        %v1222 = vmul.f32 %v617, %v1217
        %v1223 = vmul.f32 %v613, %v1221
        %v1224 = vmul.f32 %v618, %v1217
        %v1225 = vmul.f32 %v614, %v1221
        %v1226 = vmul.f32 %v619, %v1217
        %v1227 = vmul.f32 %v615, %v1221
        %v1228 = vmul.f32 %v620, %v1217
        %v1229 = vmul.f32 %v616, %v1221
        %v1230 = vadd.f32 %v1206, %v1222
        %v1231 = vadd.f32 %v1207, %v1223
        %v1232 = vadd.f32 %v1208, %v1224
        %v1233 = vadd.f32 %v1209, %v1225
        %v1234 = vadd.f32 %v1210, %v1226
        %v1235 = vadd.f32 %v1211, %v1227
        %v1236 = vadd.f32 %v1212, %v1228
        %v1237 = vadd.f32 %v1213, %v1229
        %v1238 = vlaneseq
        %v1239 = vshrl.u32 %v1238, 7
        %v1240 = vsub.s32 7, %v1239
        %v1241 = vrot.slane %v1078, %v1240
        %v1242 = vlaneseq
        %v1243 = vshrl.u32 %v1242, 7
        %v1244 = vsub.s32 7, %v1243
        %v1245 = vrot.slane %v1079, %v1244
        %v1246 = vmul.f32 %v547, %v1241
        %v1247 = vmul.f32 %v549, %v1245
        %v1248 = vmul.f32 %v553, %v1241
        %v1249 = vmul.f32 %v555, %v1245
        %v1250 = vmul.f32 %v559, %v1241
        %v1251 = vmul.f32 %v561, %v1245
        %v1252 = vmul.f32 %v565, %v1241
        %v1253 = vmul.f32 %v567, %v1245
        %v1254 = vadd.f32 %v1230, %v1246
        %v1255 = vadd.f32 %v1231, %v1247
        %v1256 = vadd.f32 %v1232, %v1248
        %v1257 = vadd.f32 %v1233, %v1249
        %v1258 = vadd.f32 %v1234, %v1250
        %v1259 = vadd.f32 %v1235, %v1251
        %v1260 = vadd.f32 %v1236, %v1252
        %v1261 = vadd.f32 %v1237, %v1253
        %v1262 = vlaneseq
        %v1263 = vshrl.u32 %v1262, 7
        %v1264 = vsub.s32 0, %v1263
        %v1265 = vrot.slane %v1080, %v1264
        %v1266 = vlaneseq
        %v1267 = vshrl.u32 %v1266, 7
        %v1268 = vsub.s32 0, %v1267
        %v1269 = vrot.slane %v1081, %v1268
        %v1270 = vmul.f32 %v638, %v1265
        %v1271 = vmul.f32 %v642, %v1269
        %v1272 = vmul.f32 %v639, %v1265
        %v1273 = vmul.f32 %v643, %v1269
        %v1274 = vmul.f32 %v640, %v1265
        %v1275 = vmul.f32 %v644, %v1269
        %v1276 = vmul.f32 %v641, %v1265
        %v1277 = vmul.f32 %v645, %v1269
        %v1278 = vadd.f32 %v1254, %v1270
        %v1279 = vadd.f32 %v1255, %v1271
        %v1280 = vadd.f32 %v1256, %v1272
        %v1281 = vadd.f32 %v1257, %v1273
        %v1282 = vadd.f32 %v1258, %v1274
        %v1283 = vadd.f32 %v1259, %v1275
        %v1284 = vadd.f32 %v1260, %v1276
        %v1285 = vadd.f32 %v1261, %v1277
        %v1286 = vlaneseq
        %v1287 = vshrl.u32 %v1286, 7
        %v1288 = vsub.s32 1, %v1287
        %v1289 = vrot.slane %v1080, %v1288
        %v1290 = vlaneseq
        %v1291 = vshrl.u32 %v1290, 7
        %v1292 = vsub.s32 1, %v1291
        %v1293 = vrot.slane %v1081, %v1292
        %v1294 = vmul.f32 %v663, %v1289
        %v1295 = vmul.f32 %v667, %v1293
        %v1296 = vmul.f32 %v664, %v1289
        %v1297 = vmul.f32 %v668, %v1293
        %v1298 = vmul.f32 %v665, %v1289
        %v1299 = vmul.f32 %v669, %v1293
        %v1300 = vmul.f32 %v666, %v1289
        %v1301 = vmul.f32 %v670, %v1293
        %v1302 = vadd.f32 %v1278, %v1294
        %v1303 = vadd.f32 %v1279, %v1295
        %v1304 = vadd.f32 %v1280, %v1296
        %v1305 = vadd.f32 %v1281, %v1297
        %v1306 = vadd.f32 %v1282, %v1298
        %v1307 = vadd.f32 %v1283, %v1299
        %v1308 = vadd.f32 %v1284, %v1300
        %v1309 = vadd.f32 %v1285, %v1301
        %1310 = vmatprep.subr.mxu0 0.0
        %1311 = vmatpush1.msra.mxu0 0.0
        %1312 = vmatprep.subr.mxu0 0.0
        %1313 = vmatpush1.msra.mxu0 0.0
        %1314 = vmatprep.subr.mxu0 0.0
        %1315 = vmatpush1.msra.mxu0 0.0
        %1316 = vmatprep.subr.mxu0 0.0
        %1317 = vmatpush1.msra.mxu0 0.0
        %1318 = vmatprep.subr.mxu0 0.0
        %1319 = vmatpush1.msra.mxu0 0.0
        %1320 = vmatprep.subr.mxu0 0.0
        %1321 = vmatpush1.msra.mxu0 0.0
        %1322 = vmatprep.subr.mxu0 0.0
        %1323 = vmatpush1.msra.mxu0 0.0
        %1324 = vmatprep.subr.mxu0 0.0
        %1325 = vmatpush1.msra.mxu0 0.0
        %1326 = vmatprep.subr.mxu0 0.0
        %1327 = vmatpush1.msra.mxu0 0.0
        %1328 = vmatprep.subr.mxu0 0.0
        %1329 = vmatpush1.msra.mxu0 0.0
        %1330 = vmatprep.subr.mxu0 0.0
        %1331 = vmatpush1.msra.mxu0 0.0
        %1332 = vmatprep.subr.mxu0 0.0
        %1333 = vmatpush1.msra.mxu0 0.0
        %1334 = vmatprep.subr.mxu0 %v1309
        %1335 = vmatpush1.msra.mxu0 %v1308
        %1336 = vmatprep.subr.mxu0 %v1307
        %1337 = vmatpush1.msra.mxu0 %v1306
        %1338 = vmatprep.subr.mxu0 %v1305
        %1339 = vmatpush1.msra.mxu0 %v1304
        %1340 = vmatprep.subr.mxu0 %v1303
        %1341 = vmatpush1.msra.mxu0 %v1302
        %1342 = vmatprep.subr.mxu0 0.0
        %1343 = vmatpush2.msra.mxu0 0.0
        %1344 = vmatprep.subr.mxu0 0.0
        %1345 = vmatpush2.msra.mxu0 0.0
        %1346 = vmatprep.subr.mxu0 0.0
        %1347 = vmatpush2.msra.mxu0 0.0
        %1348 = vmatprep.subr.mxu0 0.0
        %1349 = vmatpush2.msra.mxu0 0.0
        %1350 = vmatprep.subr.mxu0 0.0
        %1351 = vmatpush2.msra.mxu0 0.0
        %1352 = vmatprep.subr.mxu0 0.0
        %1353 = vmatpush2.msra.mxu0 0.0
        %1354 = vmatprep.subr.mxu0 0.0
        %1355 = vmatpush2.msra.mxu0 0.0
        %1356 = vmatprep.subr.mxu0 0.0
        %1357 = vmatpush2.msra.mxu0 0.0
        %1358 = vmatprep.subr.mxu0 0.0
        %1359 = vmatpush2.msra.mxu0 0.0
        %1360 = vmatprep.subr.mxu0 0.0
        %1361 = vmatpush2.msra.mxu0 0.0
        %1362 = vmatprep.subr.mxu0 0.0
        %1363 = vmatpush2.msra.mxu0 0.0
        %1364 = vmatprep.subr.mxu0 0.0
        %1365 = vmatpush2.msra.mxu0 0.0
        %1366 = vmatprep.subr.mxu0 0.0
        %1367 = vmatpush2.msra.mxu0 0.0
        %1368 = vmatprep.subr.mxu0 0.0
        %1369 = vmatpush2.msra.mxu0 0.0
        %1370 = vmatprep.subr.mxu0 0.0
        %1371 = vmatpush2.msra.mxu0 0.0
        %1372 = vmatprep.subr.mxu0 0.0
        %1373 = vmatpush2.msra.mxu0 0.0
        %1374 = vmatprep.mubr.f32.mxu0 0.0
        %1375 = vmatmul.mubr.f32.gmra.mxu0 %v805
        %v1376 = vpop.f32.mrf.mxu0
        %v1377 = vadd.f32 0.0, %v1376
        %v1378 = vpop.f32.mrf.mxu0
        %v1379 = vadd.f32 0.0, %v1378
        %1380 = vmatprep.mubr.f32.mxu0 0.0
        %1381 = vmatmul.mubr.f32.gmra.mxu0 %v808
        %v1382 = vpop.f32.mrf.mxu0
        %v1383 = vadd.f32 0.0, %v1382
        %v1384 = vpop.f32.mrf.mxu0
        %v1385 = vadd.f32 0.0, %v1384
        %1386 = vmatprep.mubr.f32.mxu0 0.0
        %1387 = vmatmul.mubr.f32.gmra.mxu0 %v811
        %v1388 = vpop.f32.mrf.mxu0
        %v1389 = vadd.f32 0.0, %v1388
        %v1390 = vpop.f32.mrf.mxu0
        %v1391 = vadd.f32 0.0, %v1390
        %1392 = vmatprep.mubr.f32.mxu0 0.0
        %1393 = vmatmul.mubr.f32.gmra.mxu0 %v814
        %v1394 = vpop.f32.mrf.mxu0
        %v1395 = vadd.f32 0.0, %v1394
        %v1396 = vpop.f32.mrf.mxu0
        %v1397 = vadd.f32 0.0, %v1396
        %1398 = vdwg.mxu0
        %v1400 = vsel %vm803, %v428, 0
        %v1403 = vsel %vm803, %v429, 0
        %v1406 = vsel %vm803, %v430, 0
        %v1409 = vsel %vm803, %v431, 0
        %1411 = vmatprep.subr.mxu0 0.0
        %1412 = vmatpush1.msra.mxu0 0.0
        %1413 = vmatprep.subr.mxu0 0.0
        %1414 = vmatpush1.msra.mxu0 0.0
        %1415 = vmatprep.subr.mxu0 0.0
        %1416 = vmatpush1.msra.mxu0 0.0
        %1417 = vmatprep.subr.mxu0 0.0
        %1418 = vmatpush1.msra.mxu0 0.0
        %1419 = vmatprep.subr.mxu0 0.0
        %1420 = vmatpush1.msra.mxu0 0.0
        %1421 = vmatprep.subr.mxu0 0.0
        %1422 = vmatpush1.msra.mxu0 0.0
        %1423 = vmatprep.subr.mxu0 0.0
        %1424 = vmatpush1.msra.mxu0 0.0
        %1425 = vmatprep.subr.mxu0 0.0
        %1426 = vmatpush1.msra.mxu0 0.0
        %1427 = vmatprep.subr.mxu0 0.0
        %1428 = vmatpush1.msra.mxu0 0.0
        %1429 = vmatprep.subr.mxu0 0.0
        %1430 = vmatpush1.msra.mxu0 0.0
        %1431 = vmatprep.subr.mxu0 0.0
        %1432 = vmatpush1.msra.mxu0 0.0
        %1433 = vmatprep.subr.mxu0 0.0
        %1434 = vmatpush1.msra.mxu0 0.0
        %1435 = vmatprep.subr.mxu0 %v1197
        %1436 = vmatpush1.msra.mxu0 %v1196
        %1437 = vmatprep.subr.mxu0 %v1195
        %1438 = vmatpush1.msra.mxu0 %v1194
        %1439 = vmatprep.subr.mxu0 %v1193
        %1440 = vmatpush1.msra.mxu0 %v1192
        %1441 = vmatprep.subr.mxu0 %v1191
        %1442 = vmatpush1.msra.mxu0 %v1190
        %1443 = vmatprep.subr.mxu0 0.0
        %1444 = vmatpush2.msra.mxu0 0.0
        %1445 = vmatprep.subr.mxu0 0.0
        %1446 = vmatpush2.msra.mxu0 0.0
        %1447 = vmatprep.subr.mxu0 0.0
        %1448 = vmatpush2.msra.mxu0 0.0
        %1449 = vmatprep.subr.mxu0 0.0
        %1450 = vmatpush2.msra.mxu0 0.0
        %1451 = vmatprep.subr.mxu0 0.0
        %1452 = vmatpush2.msra.mxu0 0.0
        %1453 = vmatprep.subr.mxu0 0.0
        %1454 = vmatpush2.msra.mxu0 0.0
        %1455 = vmatprep.subr.mxu0 0.0
        %1456 = vmatpush2.msra.mxu0 0.0
        %1457 = vmatprep.subr.mxu0 0.0
        %1458 = vmatpush2.msra.mxu0 0.0
        %1459 = vmatprep.subr.mxu0 0.0
        %1460 = vmatpush2.msra.mxu0 0.0
        %1461 = vmatprep.subr.mxu0 0.0
        %1462 = vmatpush2.msra.mxu0 0.0
        %1463 = vmatprep.subr.mxu0 0.0
        %1464 = vmatpush2.msra.mxu0 0.0
        %1465 = vmatprep.subr.mxu0 0.0
        %1466 = vmatpush2.msra.mxu0 0.0
        %1467 = vmatprep.subr.mxu0 0.0
        %1468 = vmatpush2.msra.mxu0 0.0
        %1469 = vmatprep.subr.mxu0 0.0
        %1470 = vmatpush2.msra.mxu0 0.0
        %1471 = vmatprep.subr.mxu0 0.0
        %1472 = vmatpush2.msra.mxu0 0.0
        %1473 = vmatprep.subr.mxu0 0.0
        %1474 = vmatpush2.msra.mxu0 0.0
        %1475 = vmatprep.mubr.f32.mxu0 0.0
        %1476 = vmatmul.mubr.f32.gmra.mxu0 %v1400
        %v1477 = vpop.f32.mrf.mxu0
        %v1478 = vadd.f32 %v1377, %v1477
        %v1479 = vpop.f32.mrf.mxu0
        %v1480 = vadd.f32 %v1379, %v1479
        %1481 = vmatprep.mubr.f32.mxu0 0.0
        %1482 = vmatmul.mubr.f32.gmra.mxu0 %v1403
        %v1483 = vpop.f32.mrf.mxu0
        %v1484 = vadd.f32 %v1383, %v1483
        %v1485 = vpop.f32.mrf.mxu0
        %v1486 = vadd.f32 %v1385, %v1485
        %1487 = vmatprep.mubr.f32.mxu0 0.0
        %1488 = vmatmul.mubr.f32.gmra.mxu0 %v1406
        %v1489 = vpop.f32.mrf.mxu0
        %v1490 = vadd.f32 %v1389, %v1489
        %v1491 = vpop.f32.mrf.mxu0
        %v1492 = vadd.f32 %v1391, %v1491
        %1493 = vmatprep.mubr.f32.mxu0 0.0
        %1494 = vmatmul.mubr.f32.gmra.mxu0 %v1409
        %v1495 = vpop.f32.mrf.mxu0
        %v1496 = vadd.f32 %v1395, %v1495
        %v1497 = vpop.f32.mrf.mxu0
        %v1498 = vadd.f32 %v1397, %v1497
        %1499 = vdwg.mxu0
        %v1500 = vlaneseq
        %v1501 = vshrl.u32 %v1500, 7
        %v1502 = vsub.s32 2, %v1501
        %v1503 = vrot.slane %v1080, %v1502
        %v1504 = vlaneseq
        %v1505 = vshrl.u32 %v1504, 7
        %v1506 = vsub.s32 2, %v1505
        %v1507 = vrot.slane %v1081, %v1506
        %v1508 = vmul.f32 %v592, %v1503
        %v1509 = vmul.f32 %v588, %v1507
        %v1510 = vmul.f32 %v593, %v1503
        %v1511 = vmul.f32 %v589, %v1507
        %v1512 = vmul.f32 %v594, %v1503
        %v1513 = vmul.f32 %v590, %v1507
        %v1514 = vmul.f32 %v595, %v1503
        %v1515 = vmul.f32 %v591, %v1507
        %v1516 = vlaneseq
        %v1517 = vshrl.u32 %v1516, 7
        %v1518 = vsub.s32 3, %v1517
        %v1519 = vrot.slane %v1080, %v1518
        %v1520 = vlaneseq
        %v1521 = vshrl.u32 %v1520, 7
        %v1522 = vsub.s32 3, %v1521
        %v1523 = vrot.slane %v1081, %v1522
        %v1524 = vmul.f32 %v617, %v1519
        %v1525 = vmul.f32 %v613, %v1523
        %v1526 = vmul.f32 %v618, %v1519
        %v1527 = vmul.f32 %v614, %v1523
        %v1528 = vmul.f32 %v619, %v1519
        %v1529 = vmul.f32 %v615, %v1523
        %v1530 = vmul.f32 %v620, %v1519
        %v1531 = vmul.f32 %v616, %v1523
        %v1532 = vadd.f32 %v1508, %v1524
        %v1533 = vadd.f32 %v1509, %v1525
        %v1534 = vadd.f32 %v1510, %v1526
        %v1535 = vadd.f32 %v1511, %v1527
        %v1536 = vadd.f32 %v1512, %v1528
        %v1537 = vadd.f32 %v1513, %v1529
        %v1538 = vadd.f32 %v1514, %v1530
        %v1539 = vadd.f32 %v1515, %v1531
        %v1540 = vlaneseq
        %v1541 = vshrl.u32 %v1540, 7
        %v1542 = vsub.s32 4, %v1541
        %v1543 = vrot.slane %v1080, %v1542
        %v1544 = vlaneseq
        %v1545 = vshrl.u32 %v1544, 7
        %v1546 = vsub.s32 4, %v1545
        %v1547 = vrot.slane %v1081, %v1546
        %v1548 = vmul.f32 %v547, %v1543
        %v1549 = vmul.f32 %v549, %v1547
        %v1550 = vmul.f32 %v553, %v1543
        %v1551 = vmul.f32 %v555, %v1547
        %v1552 = vmul.f32 %v559, %v1543
        %v1553 = vmul.f32 %v561, %v1547
        %v1554 = vmul.f32 %v565, %v1543
        %v1555 = vmul.f32 %v567, %v1547
        %v1556 = vadd.f32 %v1532, %v1548
        %v1557 = vadd.f32 %v1533, %v1549
        %v1558 = vadd.f32 %v1534, %v1550
        %v1559 = vadd.f32 %v1535, %v1551
        %v1560 = vadd.f32 %v1536, %v1552
        %v1561 = vadd.f32 %v1537, %v1553
        %v1562 = vadd.f32 %v1538, %v1554
        %v1563 = vadd.f32 %v1539, %v1555
        %v1564 = vlaneseq
        %v1565 = vshrl.u32 %v1564, 7
        %v1566 = vsub.s32 5, %v1565
        %v1567 = vrot.slane %v1080, %v1566
        %v1568 = vlaneseq
        %v1569 = vshrl.u32 %v1568, 7
        %v1570 = vsub.s32 5, %v1569
        %v1571 = vrot.slane %v1081, %v1570
        %v1572 = vmul.f32 %v638, %v1567
        %v1573 = vmul.f32 %v642, %v1571
        %v1574 = vmul.f32 %v639, %v1567
        %v1575 = vmul.f32 %v643, %v1571
        %v1576 = vmul.f32 %v640, %v1567
        %v1577 = vmul.f32 %v644, %v1571
        %v1578 = vmul.f32 %v641, %v1567
        %v1579 = vmul.f32 %v645, %v1571
        %v1580 = vadd.f32 %v1556, %v1572
        %v1581 = vadd.f32 %v1557, %v1573
        %v1582 = vadd.f32 %v1558, %v1574
        %v1583 = vadd.f32 %v1559, %v1575
        %v1584 = vadd.f32 %v1560, %v1576
        %v1585 = vadd.f32 %v1561, %v1577
        %v1586 = vadd.f32 %v1562, %v1578
        %v1587 = vadd.f32 %v1563, %v1579
        %v1588 = vlaneseq
        %v1589 = vshrl.u32 %v1588, 7
        %v1590 = vsub.s32 6, %v1589
        %v1591 = vrot.slane %v1080, %v1590
        %v1592 = vlaneseq
        %v1593 = vshrl.u32 %v1592, 7
        %v1594 = vsub.s32 6, %v1593
        %v1595 = vrot.slane %v1081, %v1594
        %v1596 = vmul.f32 %v663, %v1591
        %v1597 = vmul.f32 %v667, %v1595
        %v1598 = vmul.f32 %v664, %v1591
        %v1599 = vmul.f32 %v668, %v1595
        %v1600 = vmul.f32 %v665, %v1591
        %v1601 = vmul.f32 %v669, %v1595
        %v1602 = vmul.f32 %v666, %v1591
        %v1603 = vmul.f32 %v670, %v1595
        %v1604 = vadd.f32 %v1580, %v1596
        %v1605 = vadd.f32 %v1581, %v1597
        %v1606 = vadd.f32 %v1582, %v1598
        %v1607 = vadd.f32 %v1583, %v1599
        %v1608 = vadd.f32 %v1584, %v1600
        %v1609 = vadd.f32 %v1585, %v1601
        %v1610 = vadd.f32 %v1586, %v1602
        %v1611 = vadd.f32 %v1587, %v1603
        %v1612 = vadd.f32 %v1478, %v1604
        %v1613 = vadd.f32 %v1480, %v1605
        %v1614 = vadd.f32 %v1484, %v1606
        %v1615 = vadd.f32 %v1486, %v1607
        %v1616 = vadd.f32 %v1490, %v1608
        %v1617 = vadd.f32 %v1492, %v1609
        %v1618 = vadd.f32 %v1496, %v1610
        %v1619 = vadd.f32 %v1498, %v1611
        %v1620 = vlaneseq
        %v1621 = vshrl.u32 %v1620, 7
        %v1622 = vsub.s32 7, %v1621
        %v1623 = vrot.slane %v1080, %v1622
        %v1624 = vlaneseq
        %v1625 = vshrl.u32 %v1624, 7
        %v1626 = vsub.s32 7, %v1625
        %v1627 = vrot.slane %v1081, %v1626
        %v1628 = vmul.f32 %v592, %v1623
        %v1629 = vmul.f32 %v588, %v1627
        %v1630 = vmul.f32 %v593, %v1623
        %v1631 = vmul.f32 %v589, %v1627
        %v1632 = vmul.f32 %v594, %v1623
        %v1633 = vmul.f32 %v590, %v1627
        %v1634 = vmul.f32 %v595, %v1623
        %v1635 = vmul.f32 %v591, %v1627
        %v1636 = vlaneseq
        %v1637 = vshrl.u32 %v1636, 7
        %v1638 = vsub.s32 0, %v1637
        %v1639 = vrot.slane %v1082, %v1638
        %v1640 = vlaneseq
        %v1641 = vshrl.u32 %v1640, 7
        %v1642 = vsub.s32 0, %v1641
        %v1643 = vrot.slane %v1083, %v1642
        %v1644 = vmul.f32 %v617, %v1639
        %v1645 = vmul.f32 %v613, %v1643
        %v1646 = vmul.f32 %v618, %v1639
        %v1647 = vmul.f32 %v614, %v1643
        %v1648 = vmul.f32 %v619, %v1639
        %v1649 = vmul.f32 %v615, %v1643
        %v1650 = vmul.f32 %v620, %v1639
        %v1651 = vmul.f32 %v616, %v1643
        %v1652 = vadd.f32 %v1628, %v1644
        %v1653 = vadd.f32 %v1629, %v1645
        %v1654 = vadd.f32 %v1630, %v1646
        %v1655 = vadd.f32 %v1631, %v1647
        %v1656 = vadd.f32 %v1632, %v1648
        %v1657 = vadd.f32 %v1633, %v1649
        %v1658 = vadd.f32 %v1634, %v1650
        %v1659 = vadd.f32 %v1635, %v1651
        %v1660 = vlaneseq
        %v1661 = vshrl.u32 %v1660, 7
        %v1662 = vsub.s32 1, %v1661
        %v1663 = vrot.slane %v1082, %v1662
        %v1664 = vlaneseq
        %v1665 = vshrl.u32 %v1664, 7
        %v1666 = vsub.s32 1, %v1665
        %v1667 = vrot.slane %v1083, %v1666
        %v1668 = vmul.f32 %v547, %v1663
        %v1669 = vmul.f32 %v549, %v1667
        %v1670 = vmul.f32 %v553, %v1663
        %v1671 = vmul.f32 %v555, %v1667
        %v1672 = vmul.f32 %v559, %v1663
        %v1673 = vmul.f32 %v561, %v1667
        %v1674 = vmul.f32 %v565, %v1663
        %v1675 = vmul.f32 %v567, %v1667
        %v1676 = vadd.f32 %v1652, %v1668
        %v1677 = vadd.f32 %v1653, %v1669
        %v1678 = vadd.f32 %v1654, %v1670
        %v1679 = vadd.f32 %v1655, %v1671
        %v1680 = vadd.f32 %v1656, %v1672
        %v1681 = vadd.f32 %v1657, %v1673
        %v1682 = vadd.f32 %v1658, %v1674
        %v1683 = vadd.f32 %v1659, %v1675
        %v1684 = vlaneseq
        %v1685 = vshrl.u32 %v1684, 7
        %v1686 = vsub.s32 2, %v1685
        %v1687 = vrot.slane %v1082, %v1686
        %v1688 = vlaneseq
        %v1689 = vshrl.u32 %v1688, 7
        %v1690 = vsub.s32 2, %v1689
        %v1691 = vrot.slane %v1083, %v1690
        %v1692 = vmul.f32 %v638, %v1687
        %v1693 = vmul.f32 %v642, %v1691
        %v1694 = vmul.f32 %v639, %v1687
        %v1695 = vmul.f32 %v643, %v1691
        %v1696 = vmul.f32 %v640, %v1687
        %v1697 = vmul.f32 %v644, %v1691
        %v1698 = vmul.f32 %v641, %v1687
        %v1699 = vmul.f32 %v645, %v1691
        %v1700 = vadd.f32 %v1676, %v1692
        %v1701 = vadd.f32 %v1677, %v1693
        %v1702 = vadd.f32 %v1678, %v1694
        %v1703 = vadd.f32 %v1679, %v1695
        %v1704 = vadd.f32 %v1680, %v1696
        %v1705 = vadd.f32 %v1681, %v1697
        %v1706 = vadd.f32 %v1682, %v1698
        %v1707 = vadd.f32 %v1683, %v1699
        %v1708 = vlaneseq
        %v1709 = vshrl.u32 %v1708, 7
        %v1710 = vsub.s32 3, %v1709
        %v1711 = vrot.slane %v1082, %v1710
        %v1712 = vlaneseq
        %v1713 = vshrl.u32 %v1712, 7
        %v1714 = vsub.s32 3, %v1713
        %v1715 = vrot.slane %v1083, %v1714
        %v1716 = vmul.f32 %v663, %v1711
        %v1717 = vmul.f32 %v667, %v1715
        %v1718 = vmul.f32 %v664, %v1711
        %v1719 = vmul.f32 %v668, %v1715
        %v1720 = vmul.f32 %v665, %v1711
        %v1721 = vmul.f32 %v669, %v1715
        %v1722 = vmul.f32 %v666, %v1711
        %v1723 = vmul.f32 %v670, %v1715
        %v1724 = vadd.f32 %v1700, %v1716
        %v1725 = vadd.f32 %v1701, %v1717
        %v1726 = vadd.f32 %v1702, %v1718
        %v1727 = vadd.f32 %v1703, %v1719
        %v1728 = vadd.f32 %v1704, %v1720
        %v1729 = vadd.f32 %v1705, %v1721
        %v1730 = vadd.f32 %v1706, %v1722
        %v1731 = vadd.f32 %v1707, %v1723
        %1732 = vmatprep.subr.mxu0 0.0
        %1733 = vmatpush1.msra.mxu0 0.0
        %1734 = vmatprep.subr.mxu0 0.0
        %1735 = vmatpush1.msra.mxu0 0.0
        %1736 = vmatprep.subr.mxu0 0.0
        %1737 = vmatpush1.msra.mxu0 0.0
        %1738 = vmatprep.subr.mxu0 0.0
        %1739 = vmatpush1.msra.mxu0 0.0
        %1740 = vmatprep.subr.mxu0 0.0
        %1741 = vmatpush1.msra.mxu0 0.0
        %1742 = vmatprep.subr.mxu0 0.0
        %1743 = vmatpush1.msra.mxu0 0.0
        %1744 = vmatprep.subr.mxu0 0.0
        %1745 = vmatpush1.msra.mxu0 0.0
        %1746 = vmatprep.subr.mxu0 0.0
        %1747 = vmatpush1.msra.mxu0 0.0
        %1748 = vmatprep.subr.mxu0 0.0
        %1749 = vmatpush1.msra.mxu0 0.0
        %1750 = vmatprep.subr.mxu0 0.0
        %1751 = vmatpush1.msra.mxu0 0.0
        %1752 = vmatprep.subr.mxu0 0.0
        %1753 = vmatpush1.msra.mxu0 0.0
        %1754 = vmatprep.subr.mxu0 0.0
        %1755 = vmatpush1.msra.mxu0 0.0
        %1756 = vmatprep.subr.mxu0 %v1731
        %1757 = vmatpush1.msra.mxu0 %v1730
        %1758 = vmatprep.subr.mxu0 %v1729
        %1759 = vmatpush1.msra.mxu0 %v1728
        %1760 = vmatprep.subr.mxu0 %v1727
        %1761 = vmatpush1.msra.mxu0 %v1726
        %1762 = vmatprep.subr.mxu0 %v1725
        %1763 = vmatpush1.msra.mxu0 %v1724
        %1764 = vmatprep.subr.mxu0 0.0
        %1765 = vmatpush2.msra.mxu0 0.0
        %1766 = vmatprep.subr.mxu0 0.0
        %1767 = vmatpush2.msra.mxu0 0.0
        %1768 = vmatprep.subr.mxu0 0.0
        %1769 = vmatpush2.msra.mxu0 0.0
        %1770 = vmatprep.subr.mxu0 0.0
        %1771 = vmatpush2.msra.mxu0 0.0
        %1772 = vmatprep.subr.mxu0 0.0
        %1773 = vmatpush2.msra.mxu0 0.0
        %1774 = vmatprep.subr.mxu0 0.0
        %1775 = vmatpush2.msra.mxu0 0.0
        %1776 = vmatprep.subr.mxu0 0.0
        %1777 = vmatpush2.msra.mxu0 0.0
        %1778 = vmatprep.subr.mxu0 0.0
        %1779 = vmatpush2.msra.mxu0 0.0
        %1780 = vmatprep.subr.mxu0 0.0
        %1781 = vmatpush2.msra.mxu0 0.0
        %1782 = vmatprep.subr.mxu0 0.0
        %1783 = vmatpush2.msra.mxu0 0.0
        %1784 = vmatprep.subr.mxu0 0.0
        %1785 = vmatpush2.msra.mxu0 0.0
        %1786 = vmatprep.subr.mxu0 0.0
        %1787 = vmatpush2.msra.mxu0 0.0
        %1788 = vmatprep.subr.mxu0 0.0
        %1789 = vmatpush2.msra.mxu0 0.0
        %1790 = vmatprep.subr.mxu0 0.0
        %1791 = vmatpush2.msra.mxu0 0.0
        %1792 = vmatprep.subr.mxu0 0.0
        %1793 = vmatpush2.msra.mxu0 0.0
        %1794 = vmatprep.subr.mxu0 0.0
        %1795 = vmatpush2.msra.mxu0 0.0
        %1796 = vmatprep.mubr.f32.mxu0 0.0
        %1797 = vmatmul.mubr.f32.gmra.mxu0 %v970
        %v1798 = vpop.f32.mrf.mxu0
        %v1799 = vadd.f32 0.0, %v1798
        %v1800 = vpop.f32.mrf.mxu0
        %v1801 = vadd.f32 0.0, %v1800
        %1802 = vmatprep.mubr.f32.mxu0 0.0
        %1803 = vmatmul.mubr.f32.gmra.mxu0 %v973
        %v1804 = vpop.f32.mrf.mxu0
        %v1805 = vadd.f32 0.0, %v1804
        %v1806 = vpop.f32.mrf.mxu0
        %v1807 = vadd.f32 0.0, %v1806
        %1808 = vmatprep.mubr.f32.mxu0 0.0
        %1809 = vmatmul.mubr.f32.gmra.mxu0 %v976
        %v1810 = vpop.f32.mrf.mxu0
        %v1811 = vadd.f32 0.0, %v1810
        %v1812 = vpop.f32.mrf.mxu0
        %v1813 = vadd.f32 0.0, %v1812
        %1814 = vmatprep.mubr.f32.mxu0 0.0
        %1815 = vmatmul.mubr.f32.gmra.mxu0 %v979
        %v1816 = vpop.f32.mrf.mxu0
        %v1817 = vadd.f32 0.0, %v1816
        %v1818 = vpop.f32.mrf.mxu0
        %v1819 = vadd.f32 0.0, %v1818
        %1820 = vdwg.mxu0
        %v1821 = vadd.f32 %v1612, %v1799
        %v1822 = vadd.f32 %v1613, %v1801
        %v1823 = vadd.f32 %v1614, %v1805
        %v1824 = vadd.f32 %v1615, %v1807
        %v1825 = vadd.f32 %v1616, %v1811
        %v1826 = vadd.f32 %v1617, %v1813
        %v1827 = vadd.f32 %v1618, %v1817
        %v1828 = vadd.f32 %v1619, %v1819
        %v1829 = vlaneseq
        %v1830 = vshrl.u32 %v1829, 7
        %v1831 = vsub.s32 4, %v1830
        %v1832 = vrot.slane %v1082, %v1831
        %v1833 = vlaneseq
        %v1834 = vshrl.u32 %v1833, 7
        %v1835 = vsub.s32 4, %v1834
        %v1836 = vrot.slane %v1083, %v1835
        %v1837 = vmul.f32 %v592, %v1832
        %v1838 = vmul.f32 %v588, %v1836
        %v1839 = vmul.f32 %v593, %v1832
        %v1840 = vmul.f32 %v589, %v1836
        %v1841 = vmul.f32 %v594, %v1832
        %v1842 = vmul.f32 %v590, %v1836
        %v1843 = vmul.f32 %v595, %v1832
        %v1844 = vmul.f32 %v591, %v1836
        %v1845 = vlaneseq
        %v1846 = vshrl.u32 %v1845, 7
        %v1847 = vsub.s32 5, %v1846
        %v1848 = vrot.slane %v1082, %v1847
        %v1849 = vlaneseq
        %v1850 = vshrl.u32 %v1849, 7
        %v1851 = vsub.s32 5, %v1850
        %v1852 = vrot.slane %v1083, %v1851
        %v1853 = vmul.f32 %v617, %v1848
        %v1854 = vmul.f32 %v613, %v1852
        %v1855 = vmul.f32 %v618, %v1848
        %v1856 = vmul.f32 %v614, %v1852
        %v1857 = vmul.f32 %v619, %v1848
        %v1858 = vmul.f32 %v615, %v1852
        %v1859 = vmul.f32 %v620, %v1848
        %v1860 = vmul.f32 %v616, %v1852
        %v1861 = vadd.f32 %v1837, %v1853
        %v1862 = vadd.f32 %v1838, %v1854
        %v1863 = vadd.f32 %v1839, %v1855
        %v1864 = vadd.f32 %v1840, %v1856
        %v1865 = vadd.f32 %v1841, %v1857
        %v1866 = vadd.f32 %v1842, %v1858
        %v1867 = vadd.f32 %v1843, %v1859
        %v1868 = vadd.f32 %v1844, %v1860
        %v1869 = vlaneseq
        %v1870 = vshrl.u32 %v1869, 7
        %v1871 = vsub.s32 6, %v1870
        %v1872 = vrot.slane %v1082, %v1871
        %v1873 = vlaneseq
        %v1874 = vshrl.u32 %v1873, 7
        %v1875 = vsub.s32 6, %v1874
        %v1876 = vrot.slane %v1083, %v1875
        %v1877 = vmul.f32 %v547, %v1872
        %v1878 = vmul.f32 %v549, %v1876
        %v1879 = vmul.f32 %v553, %v1872
        %v1880 = vmul.f32 %v555, %v1876
        %v1881 = vmul.f32 %v559, %v1872
        %v1882 = vmul.f32 %v561, %v1876
        %v1883 = vmul.f32 %v565, %v1872
        %v1884 = vmul.f32 %v567, %v1876
        %v1885 = vadd.f32 %v1861, %v1877
        %v1886 = vadd.f32 %v1862, %v1878
        %v1887 = vadd.f32 %v1863, %v1879
        %v1888 = vadd.f32 %v1864, %v1880
        %v1889 = vadd.f32 %v1865, %v1881
        %v1890 = vadd.f32 %v1866, %v1882
        %v1891 = vadd.f32 %v1867, %v1883
        %v1892 = vadd.f32 %v1868, %v1884
        %v1893 = vlaneseq
        %v1894 = vshrl.u32 %v1893, 7
        %v1895 = vsub.s32 7, %v1894
        %v1896 = vrot.slane %v1082, %v1895
        %v1897 = vlaneseq
        %v1898 = vshrl.u32 %v1897, 7
        %v1899 = vsub.s32 7, %v1898
        %v1900 = vrot.slane %v1083, %v1899
        %v1901 = vmul.f32 %v638, %v1896
        %v1902 = vmul.f32 %v642, %v1900
        %v1903 = vmul.f32 %v639, %v1896
        %v1904 = vmul.f32 %v643, %v1900
        %v1905 = vmul.f32 %v640, %v1896
        %v1906 = vmul.f32 %v644, %v1900
        %v1907 = vmul.f32 %v641, %v1896
        %v1908 = vmul.f32 %v645, %v1900
        %v1909 = vadd.f32 %v1885, %v1901
        %v1910 = vadd.f32 %v1886, %v1902
        %v1911 = vadd.f32 %v1887, %v1903
        %v1912 = vadd.f32 %v1888, %v1904
        %v1913 = vadd.f32 %v1889, %v1905
        %v1914 = vadd.f32 %v1890, %v1906
        %v1915 = vadd.f32 %v1891, %v1907
        %v1916 = vadd.f32 %v1892, %v1908
        %v1917 = vlaneseq
        %v1918 = vshrl.u32 %v1917, 7
        %v1919 = vsub.s32 0, %v1918
        %v1920 = vrot.slane %v1084, %v1919
        %v1921 = vlaneseq
        %v1922 = vshrl.u32 %v1921, 7
        %v1923 = vsub.s32 0, %v1922
        %v1924 = vrot.slane %v1085, %v1923
        %v1925 = vmul.f32 %v663, %v1920
        %v1926 = vmul.f32 %v667, %v1924
        %v1927 = vmul.f32 %v664, %v1920
        %v1928 = vmul.f32 %v668, %v1924
        %v1929 = vmul.f32 %v665, %v1920
        %v1930 = vmul.f32 %v669, %v1924
        %v1931 = vmul.f32 %v666, %v1920
        %v1932 = vmul.f32 %v670, %v1924
        %v1933 = vadd.f32 %v1909, %v1925
        %v1934 = vadd.f32 %v1910, %v1926
        %v1935 = vadd.f32 %v1911, %v1927
        %v1936 = vadd.f32 %v1912, %v1928
        %v1937 = vadd.f32 %v1913, %v1929
        %v1938 = vadd.f32 %v1914, %v1930
        %v1939 = vadd.f32 %v1915, %v1931
        %v1940 = vadd.f32 %v1916, %v1932
        %v1942 = vsel %vm803, %v440, 0
        %v1945 = vsel %vm803, %v441, 0
        %v1948 = vsel %vm803, %v442, 0
        %v1951 = vsel %vm803, %v443, 0
        %1953 = vmatprep.subr.mxu0 0.0
        %1954 = vmatpush1.msra.mxu0 0.0
        %1955 = vmatprep.subr.mxu0 0.0
        %1956 = vmatpush1.msra.mxu0 0.0
        %1957 = vmatprep.subr.mxu0 0.0
        %1958 = vmatpush1.msra.mxu0 0.0
        %1959 = vmatprep.subr.mxu0 0.0
        %1960 = vmatpush1.msra.mxu0 0.0
        %1961 = vmatprep.subr.mxu0 0.0
        %1962 = vmatpush1.msra.mxu0 0.0
        %1963 = vmatprep.subr.mxu0 0.0
        %1964 = vmatpush1.msra.mxu0 0.0
        %1965 = vmatprep.subr.mxu0 0.0
        %1966 = vmatpush1.msra.mxu0 0.0
        %1967 = vmatprep.subr.mxu0 0.0
        %1968 = vmatpush1.msra.mxu0 0.0
        %1969 = vmatprep.subr.mxu0 0.0
        %1970 = vmatpush1.msra.mxu0 0.0
        %1971 = vmatprep.subr.mxu0 0.0
        %1972 = vmatpush1.msra.mxu0 0.0
        %1973 = vmatprep.subr.mxu0 0.0
        %1974 = vmatpush1.msra.mxu0 0.0
        %1975 = vmatprep.subr.mxu0 0.0
        %1976 = vmatpush1.msra.mxu0 0.0
        %1977 = vmatprep.subr.mxu0 %v1940
        %1978 = vmatpush1.msra.mxu0 %v1939
        %1979 = vmatprep.subr.mxu0 %v1938
        %1980 = vmatpush1.msra.mxu0 %v1937
        %1981 = vmatprep.subr.mxu0 %v1936
        %1982 = vmatpush1.msra.mxu0 %v1935
        %1983 = vmatprep.subr.mxu0 %v1934
        %1984 = vmatpush1.msra.mxu0 %v1933
        %1985 = vmatprep.subr.mxu0 0.0
        %1986 = vmatpush2.msra.mxu0 0.0
        %1987 = vmatprep.subr.mxu0 0.0
        %1988 = vmatpush2.msra.mxu0 0.0
        %1989 = vmatprep.subr.mxu0 0.0
        %1990 = vmatpush2.msra.mxu0 0.0
        %1991 = vmatprep.subr.mxu0 0.0
        %1992 = vmatpush2.msra.mxu0 0.0
        %1993 = vmatprep.subr.mxu0 0.0
        %1994 = vmatpush2.msra.mxu0 0.0
        %1995 = vmatprep.subr.mxu0 0.0
        %1996 = vmatpush2.msra.mxu0 0.0
        %1997 = vmatprep.subr.mxu0 0.0
        %1998 = vmatpush2.msra.mxu0 0.0
        %1999 = vmatprep.subr.mxu0 0.0
        %2000 = vmatpush2.msra.mxu0 0.0
        %2001 = vmatprep.subr.mxu0 0.0
        %2002 = vmatpush2.msra.mxu0 0.0
        %2003 = vmatprep.subr.mxu0 0.0
        %2004 = vmatpush2.msra.mxu0 0.0
        %2005 = vmatprep.subr.mxu0 0.0
        %2006 = vmatpush2.msra.mxu0 0.0
        %2007 = vmatprep.subr.mxu0 0.0
        %2008 = vmatpush2.msra.mxu0 0.0
        %2009 = vmatprep.subr.mxu0 0.0
        %2010 = vmatpush2.msra.mxu0 0.0
        %2011 = vmatprep.subr.mxu0 0.0
        %2012 = vmatpush2.msra.mxu0 0.0
        %2013 = vmatprep.subr.mxu0 0.0
        %2014 = vmatpush2.msra.mxu0 0.0
        %2015 = vmatprep.subr.mxu0 0.0
        %2016 = vmatpush2.msra.mxu0 0.0
        %2017 = vmatprep.mubr.f32.mxu0 0.0
        %2018 = vmatmul.mubr.f32.gmra.mxu0 %v1942
        %v2019 = vpop.f32.mrf.mxu0
        %v2020 = vadd.f32 0.0, %v2019
        %v2021 = vpop.f32.mrf.mxu0
        %v2022 = vadd.f32 0.0, %v2021
        %2023 = vmatprep.mubr.f32.mxu0 0.0
        %2024 = vmatmul.mubr.f32.gmra.mxu0 %v1945
        %v2025 = vpop.f32.mrf.mxu0
        %v2026 = vadd.f32 0.0, %v2025
        %v2027 = vpop.f32.mrf.mxu0
        %v2028 = vadd.f32 0.0, %v2027
        %2029 = vmatprep.mubr.f32.mxu0 0.0
        %2030 = vmatmul.mubr.f32.gmra.mxu0 %v1948
        %v2031 = vpop.f32.mrf.mxu0
        %v2032 = vadd.f32 0.0, %v2031
        %v2033 = vpop.f32.mrf.mxu0
        %v2034 = vadd.f32 0.0, %v2033
        %2035 = vmatprep.mubr.f32.mxu0 0.0
        %2036 = vmatmul.mubr.f32.gmra.mxu0 %v1951
        %v2037 = vpop.f32.mrf.mxu0
        %v2038 = vadd.f32 0.0, %v2037
        %v2039 = vpop.f32.mrf.mxu0
        %v2040 = vadd.f32 0.0, %v2039
        %2041 = vdwg.mxu0
        %v2042 = vadd.f32 %v1821, %v2020
        %v2043 = vadd.f32 %v1822, %v2022
        %v2044 = vadd.f32 %v1823, %v2026
        %v2045 = vadd.f32 %v1824, %v2028
        %v2046 = vadd.f32 %v1825, %v2032
        %v2047 = vadd.f32 %v1826, %v2034
        %v2048 = vadd.f32 %v1827, %v2038
        %v2049 = vadd.f32 %v1828, %v2040
        %v2050 = vmul.f32 %v1070, %v1071
        %v2051 = vmul.f32 %v1072, %v1073
        %v2052 = vmul.f32 %v1074, %v1075
        %v2053 = vmul.f32 %v1076, %v1077
        %v2054 = vmul.f32 %v2042, %v2043
        %v2055 = vmul.f32 %v2044, %v2045
        %v2056 = vmul.f32 %v2046, %v2047
        %v2057 = vmul.f32 %v2048, %v2049
        %2058 = vrot.lane.b32.xlu0 %v2050, 2
        %v2059 = vpop.permute.xlu0 %2058
        %2060 = vrot.lane.b32.xlu0 %v2051, 2
        %v2061 = vpop.permute.xlu0 %2060
        %2062 = vrot.lane.b32.xlu0 %v2052, 2
        %v2063 = vpop.permute.xlu0 %2062
        %2064 = vrot.lane.b32.xlu0 %v2053, 2
        %v2065 = vpop.permute.xlu0 %2064
        %2066 = vrot.lane.b32.xlu0 %v2050, 1
        %v2067 = vpop.permute.xlu0 %2066
        %2068 = vrot.lane.b32.xlu0 %v2051, 1
        %v2069 = vpop.permute.xlu0 %2068
        %2070 = vrot.lane.b32.xlu0 %v2052, 1
        %v2071 = vpop.permute.xlu0 %2070
        %2072 = vrot.lane.b32.xlu0 %v2053, 1
        %v2073 = vpop.permute.xlu0 %2072
        %2074 = vrot.lane.b32.xlu0 %v2050, 127
        %v2075 = vpop.permute.xlu0 %2074
        %2076 = vrot.lane.b32.xlu0 %v2051, 127
        %v2077 = vpop.permute.xlu0 %2076
        %2078 = vrot.lane.b32.xlu0 %v2052, 127
        %v2079 = vpop.permute.xlu0 %2078
        %2080 = vrot.lane.b32.xlu0 %v2053, 127
        %v2081 = vpop.permute.xlu0 %2080
        %2082 = vrot.lane.b32.xlu0 %v2050, 126
        %v2083 = vpop.permute.xlu0 %2082
        %2084 = vrot.lane.b32.xlu0 %v2051, 126
        %v2085 = vpop.permute.xlu0 %2084
        %2086 = vrot.lane.b32.xlu0 %v2052, 126
        %v2087 = vpop.permute.xlu0 %2086
        %2088 = vrot.lane.b32.xlu0 %v2053, 126
        %v2089 = vpop.permute.xlu0 %2088
        %v2090 = vld [vmem:[#allocation10] sm:$0xff]
        %v2091 = vld [vmem:[#allocation10 + $0x8] sm:$0xff]
        %v2092 = vld [vmem:[#allocation10 + $0x10] sm:$0xff]
        %v2093 = vld [vmem:[#allocation10 + $0x18] sm:$0xff]
        %v2094 = vld [vmem:[#allocation10 + $0x20] sm:$0xff]
        %v2095 = vld [vmem:[#allocation10 + $0x28] sm:$0xff]
        %v2096 = vld [vmem:[#allocation10 + $0x30] sm:$0x1]
        %v2097 = vld [vmem:[#allocation10 + $0x38] sm:$0x1]
        %v2098 = vlaneseq
        %v2099 = vshrl.u32 %v2098, 7
        %v2100 = vsub.s32 0, %v2099
        %v2101 = vrot.slane %v2090, %v2100
        %v2102 = vlaneseq
        %v2103 = vshrl.u32 %v2102, 7
        %v2104 = vsub.s32 0, %v2103
        %v2105 = vrot.slane %v2091, %v2104
        %v2106 = vmul.f32 %v2059, %v2101
        %v2107 = vmul.f32 %v2059, %v2105
        %v2108 = vmul.f32 %v2061, %v2101
        %v2109 = vmul.f32 %v2061, %v2105
        %v2110 = vmul.f32 %v2063, %v2101
        %v2111 = vmul.f32 %v2063, %v2105
        %v2112 = vmul.f32 %v2065, %v2101
        %v2113 = vmul.f32 %v2065, %v2105
        %v2114 = vlaneseq
        %v2115 = vshrl.u32 %v2114, 7
        %v2116 = vsub.s32 1, %v2115
        %v2117 = vrot.slane %v2090, %v2116
        %v2118 = vlaneseq
        %v2119 = vshrl.u32 %v2118, 7
        %v2120 = vsub.s32 1, %v2119
        %v2121 = vrot.slane %v2091, %v2120
        %v2122 = vmul.f32 %v2067, %v2117
        %v2123 = vmul.f32 %v2067, %v2121
        %v2124 = vmul.f32 %v2069, %v2117
        %v2125 = vmul.f32 %v2069, %v2121
        %v2126 = vmul.f32 %v2071, %v2117
        %v2127 = vmul.f32 %v2071, %v2121
        %v2128 = vmul.f32 %v2073, %v2117
        %v2129 = vmul.f32 %v2073, %v2121
        %v2130 = vadd.f32 %v2106, %v2122
        %v2131 = vadd.f32 %v2107, %v2123
        %v2132 = vadd.f32 %v2108, %v2124
        %v2133 = vadd.f32 %v2109, %v2125
        %v2134 = vadd.f32 %v2110, %v2126
        %v2135 = vadd.f32 %v2111, %v2127
        %v2136 = vadd.f32 %v2112, %v2128
        %v2137 = vadd.f32 %v2113, %v2129
        %v2138 = vlaneseq
        %v2139 = vshrl.u32 %v2138, 7
        %v2140 = vsub.s32 2, %v2139
        %v2141 = vrot.slane %v2090, %v2140
        %v2142 = vlaneseq
        %v2143 = vshrl.u32 %v2142, 7
        %v2144 = vsub.s32 2, %v2143
        %v2145 = vrot.slane %v2091, %v2144
        %v2146 = vmul.f32 %v2050, %v2141
        %v2147 = vmul.f32 %v2050, %v2145
        %v2148 = vmul.f32 %v2051, %v2141
        %v2149 = vmul.f32 %v2051, %v2145
        %v2150 = vmul.f32 %v2052, %v2141
        %v2151 = vmul.f32 %v2052, %v2145
        %v2152 = vmul.f32 %v2053, %v2141
        %v2153 = vmul.f32 %v2053, %v2145
        %v2154 = vadd.f32 %v2130, %v2146
        %v2155 = vadd.f32 %v2131, %v2147
        %v2156 = vadd.f32 %v2132, %v2148
        %v2157 = vadd.f32 %v2133, %v2149
        %v2158 = vadd.f32 %v2134, %v2150
        %v2159 = vadd.f32 %v2135, %v2151
        %v2160 = vadd.f32 %v2136, %v2152
        %v2161 = vadd.f32 %v2137, %v2153
        %v2162 = vlaneseq
        %v2163 = vshrl.u32 %v2162, 7
        %v2164 = vsub.s32 3, %v2163
        %v2165 = vrot.slane %v2090, %v2164
        %v2166 = vlaneseq
        %v2167 = vshrl.u32 %v2166, 7
        %v2168 = vsub.s32 3, %v2167
        %v2169 = vrot.slane %v2091, %v2168
        %v2170 = vmul.f32 %v2075, %v2165
        %v2171 = vmul.f32 %v2075, %v2169
        %v2172 = vmul.f32 %v2077, %v2165
        %v2173 = vmul.f32 %v2077, %v2169
        %v2174 = vmul.f32 %v2079, %v2165
        %v2175 = vmul.f32 %v2079, %v2169
        %v2176 = vmul.f32 %v2081, %v2165
        %v2177 = vmul.f32 %v2081, %v2169
        %v2178 = vadd.f32 %v2154, %v2170
        %v2179 = vadd.f32 %v2155, %v2171
        %v2180 = vadd.f32 %v2156, %v2172
        %v2181 = vadd.f32 %v2157, %v2173
        %v2182 = vadd.f32 %v2158, %v2174
        %v2183 = vadd.f32 %v2159, %v2175
        %v2184 = vadd.f32 %v2160, %v2176
        %v2185 = vadd.f32 %v2161, %v2177
        %v2186 = vlaneseq
        %v2187 = vshrl.u32 %v2186, 7
        %v2188 = vsub.s32 4, %v2187
        %v2189 = vrot.slane %v2090, %v2188
        %v2190 = vlaneseq
        %v2191 = vshrl.u32 %v2190, 7
        %v2192 = vsub.s32 4, %v2191
        %v2193 = vrot.slane %v2091, %v2192
        %v2194 = vmul.f32 %v2083, %v2189
        %v2195 = vmul.f32 %v2083, %v2193
        %v2196 = vmul.f32 %v2085, %v2189
        %v2197 = vmul.f32 %v2085, %v2193
        %v2198 = vmul.f32 %v2087, %v2189
        %v2199 = vmul.f32 %v2087, %v2193
        %v2200 = vmul.f32 %v2089, %v2189
        %v2201 = vmul.f32 %v2089, %v2193
        %v2202 = vadd.f32 %v2178, %v2194
        %v2203 = vadd.f32 %v2179, %v2195
        %v2204 = vadd.f32 %v2180, %v2196
        %v2205 = vadd.f32 %v2181, %v2197
        %v2206 = vadd.f32 %v2182, %v2198
        %v2207 = vadd.f32 %v2183, %v2199
        %v2208 = vadd.f32 %v2184, %v2200
        %v2209 = vadd.f32 %v2185, %v2201
        %v2210 = vlaneseq
        %v2211 = vshrl.u32 %v2210, 7
        %v2212 = vsub.s32 5, %v2211
        %v2213 = vrot.slane %v2090, %v2212
        %v2214 = vlaneseq
        %v2215 = vshrl.u32 %v2214, 7
        %v2216 = vsub.s32 5, %v2215
        %v2217 = vrot.slane %v2091, %v2216
        %v2218 = vmul.f32 %v2059, %v2213
        %v2219 = vmul.f32 %v2059, %v2217
        %v2220 = vmul.f32 %v2061, %v2213
        %v2221 = vmul.f32 %v2061, %v2217
        %v2222 = vmul.f32 %v2063, %v2213
        %v2223 = vmul.f32 %v2063, %v2217
        %v2224 = vmul.f32 %v2065, %v2213
        %v2225 = vmul.f32 %v2065, %v2217
        %v2226 = vlaneseq
        %v2227 = vshrl.u32 %v2226, 7
        %v2228 = vsub.s32 6, %v2227
        %v2229 = vrot.slane %v2090, %v2228
        %v2230 = vlaneseq
        %v2231 = vshrl.u32 %v2230, 7
        %v2232 = vsub.s32 6, %v2231
        %v2233 = vrot.slane %v2091, %v2232
        %v2234 = vmul.f32 %v2067, %v2229
        %v2235 = vmul.f32 %v2067, %v2233
        %v2236 = vmul.f32 %v2069, %v2229
        %v2237 = vmul.f32 %v2069, %v2233
        %v2238 = vmul.f32 %v2071, %v2229
        %v2239 = vmul.f32 %v2071, %v2233
        %v2240 = vmul.f32 %v2073, %v2229
        %v2241 = vmul.f32 %v2073, %v2233
        %v2242 = vadd.f32 %v2218, %v2234
        %v2243 = vadd.f32 %v2219, %v2235
        %v2244 = vadd.f32 %v2220, %v2236
        %v2245 = vadd.f32 %v2221, %v2237
        %v2246 = vadd.f32 %v2222, %v2238
        %v2247 = vadd.f32 %v2223, %v2239
        %v2248 = vadd.f32 %v2224, %v2240
        %v2249 = vadd.f32 %v2225, %v2241
        %v2250 = vlaneseq
        %v2251 = vshrl.u32 %v2250, 7
        %v2252 = vsub.s32 7, %v2251
        %v2253 = vrot.slane %v2090, %v2252
        %v2254 = vlaneseq
        %v2255 = vshrl.u32 %v2254, 7
        %v2256 = vsub.s32 7, %v2255
        %v2257 = vrot.slane %v2091, %v2256
        %v2258 = vmul.f32 %v2050, %v2253
        %v2259 = vmul.f32 %v2050, %v2257
        %v2260 = vmul.f32 %v2051, %v2253
        %v2261 = vmul.f32 %v2051, %v2257
        %v2262 = vmul.f32 %v2052, %v2253
        %v2263 = vmul.f32 %v2052, %v2257
        %v2264 = vmul.f32 %v2053, %v2253
        %v2265 = vmul.f32 %v2053, %v2257
        %v2266 = vadd.f32 %v2242, %v2258
        %v2267 = vadd.f32 %v2243, %v2259
        %v2268 = vadd.f32 %v2244, %v2260
        %v2269 = vadd.f32 %v2245, %v2261
        %v2270 = vadd.f32 %v2246, %v2262
        %v2271 = vadd.f32 %v2247, %v2263
        %v2272 = vadd.f32 %v2248, %v2264
        %v2273 = vadd.f32 %v2249, %v2265
        %v2274 = vlaneseq
        %v2275 = vshrl.u32 %v2274, 7
        %v2276 = vsub.s32 0, %v2275
        %v2277 = vrot.slane %v2092, %v2276
        %v2278 = vlaneseq
        %v2279 = vshrl.u32 %v2278, 7
        %v2280 = vsub.s32 0, %v2279
        %v2281 = vrot.slane %v2093, %v2280
        %v2282 = vmul.f32 %v2075, %v2277
        %v2283 = vmul.f32 %v2075, %v2281
        %v2284 = vmul.f32 %v2077, %v2277
        %v2285 = vmul.f32 %v2077, %v2281
        %v2286 = vmul.f32 %v2079, %v2277
        %v2287 = vmul.f32 %v2079, %v2281
        %v2288 = vmul.f32 %v2081, %v2277
        %v2289 = vmul.f32 %v2081, %v2281
        %v2290 = vadd.f32 %v2266, %v2282
        %v2291 = vadd.f32 %v2267, %v2283
        %v2292 = vadd.f32 %v2268, %v2284
        %v2293 = vadd.f32 %v2269, %v2285
        %v2294 = vadd.f32 %v2270, %v2286
        %v2295 = vadd.f32 %v2271, %v2287
        %v2296 = vadd.f32 %v2272, %v2288
        %v2297 = vadd.f32 %v2273, %v2289
        %v2298 = vlaneseq
        %v2299 = vshrl.u32 %v2298, 7
        %v2300 = vsub.s32 1, %v2299
        %v2301 = vrot.slane %v2092, %v2300
        %v2302 = vlaneseq
        %v2303 = vshrl.u32 %v2302, 7
        %v2304 = vsub.s32 1, %v2303
        %v2305 = vrot.slane %v2093, %v2304
        %v2306 = vmul.f32 %v2083, %v2301
        %v2307 = vmul.f32 %v2083, %v2305
        %v2308 = vmul.f32 %v2085, %v2301
        %v2309 = vmul.f32 %v2085, %v2305
        %v2310 = vmul.f32 %v2087, %v2301
        %v2311 = vmul.f32 %v2087, %v2305
        %v2312 = vmul.f32 %v2089, %v2301
        %v2313 = vmul.f32 %v2089, %v2305
        %v2314 = vadd.f32 %v2290, %v2306
        %v2315 = vadd.f32 %v2291, %v2307
        %v2316 = vadd.f32 %v2292, %v2308
        %v2317 = vadd.f32 %v2293, %v2309
        %v2318 = vadd.f32 %v2294, %v2310
        %v2319 = vadd.f32 %v2295, %v2311
        %v2320 = vadd.f32 %v2296, %v2312
        %v2321 = vadd.f32 %v2297, %v2313
        %2322 = vmatprep.subr.mxu0 0.0
        %2323 = vmatpush1.msra.mxu0 0.0
        %2324 = vmatprep.subr.mxu0 0.0
        %2325 = vmatpush1.msra.mxu0 0.0
        %2326 = vmatprep.subr.mxu0 0.0
        %2327 = vmatpush1.msra.mxu0 0.0
        %2328 = vmatprep.subr.mxu0 0.0
        %2329 = vmatpush1.msra.mxu0 0.0
        %2330 = vmatprep.subr.mxu0 0.0
        %2331 = vmatpush1.msra.mxu0 0.0
        %2332 = vmatprep.subr.mxu0 0.0
        %2333 = vmatpush1.msra.mxu0 0.0
        %2334 = vmatprep.subr.mxu0 0.0
        %2335 = vmatpush1.msra.mxu0 0.0
        %2336 = vmatprep.subr.mxu0 0.0
        %2337 = vmatpush1.msra.mxu0 0.0
        %2338 = vmatprep.subr.mxu0 0.0
        %2339 = vmatpush1.msra.mxu0 0.0
        %2340 = vmatprep.subr.mxu0 0.0
        %2341 = vmatpush1.msra.mxu0 0.0
        %2342 = vmatprep.subr.mxu0 0.0
        %2343 = vmatpush1.msra.mxu0 0.0
        %2344 = vmatprep.subr.mxu0 0.0
        %2345 = vmatpush1.msra.mxu0 0.0
        %2346 = vmatprep.subr.mxu0 %v2321
        %2347 = vmatpush1.msra.mxu0 %v2320
        %2348 = vmatprep.subr.mxu0 %v2319
        %2349 = vmatpush1.msra.mxu0 %v2318
        %2350 = vmatprep.subr.mxu0 %v2317
        %2351 = vmatpush1.msra.mxu0 %v2316
        %2352 = vmatprep.subr.mxu0 %v2315
        %2353 = vmatpush1.msra.mxu0 %v2314
        %2354 = vmatprep.subr.mxu0 0.0
        %2355 = vmatpush2.msra.mxu0 0.0
        %2356 = vmatprep.subr.mxu0 0.0
        %2357 = vmatpush2.msra.mxu0 0.0
        %2358 = vmatprep.subr.mxu0 0.0
        %2359 = vmatpush2.msra.mxu0 0.0
        %2360 = vmatprep.subr.mxu0 0.0
        %2361 = vmatpush2.msra.mxu0 0.0
        %2362 = vmatprep.subr.mxu0 0.0
        %2363 = vmatpush2.msra.mxu0 0.0
        %2364 = vmatprep.subr.mxu0 0.0
        %2365 = vmatpush2.msra.mxu0 0.0
        %2366 = vmatprep.subr.mxu0 0.0
        %2367 = vmatpush2.msra.mxu0 0.0
        %2368 = vmatprep.subr.mxu0 0.0
        %2369 = vmatpush2.msra.mxu0 0.0
        %2370 = vmatprep.subr.mxu0 0.0
        %2371 = vmatpush2.msra.mxu0 0.0
        %2372 = vmatprep.subr.mxu0 0.0
        %2373 = vmatpush2.msra.mxu0 0.0
        %2374 = vmatprep.subr.mxu0 0.0
        %2375 = vmatpush2.msra.mxu0 0.0
        %2376 = vmatprep.subr.mxu0 0.0
        %2377 = vmatpush2.msra.mxu0 0.0
        %2378 = vmatprep.subr.mxu0 0.0
        %2379 = vmatpush2.msra.mxu0 0.0
        %2380 = vmatprep.subr.mxu0 0.0
        %2381 = vmatpush2.msra.mxu0 0.0
        %2382 = vmatprep.subr.mxu0 0.0
        %2383 = vmatpush2.msra.mxu0 0.0
        %2384 = vmatprep.subr.mxu0 0.0
        %2385 = vmatpush2.msra.mxu0 0.0
        %2386 = vmatprep.mubr.f32.mxu0 0.0
        %2387 = vmatmul.mubr.f32.gmra.mxu0 %v805
        %v2388 = vpop.f32.mrf.mxu0
        %v2389 = vadd.f32 0.0, %v2388
        %v2390 = vpop.f32.mrf.mxu0
        %v2391 = vadd.f32 0.0, %v2390
        %2392 = vmatprep.mubr.f32.mxu0 0.0
        %2393 = vmatmul.mubr.f32.gmra.mxu0 %v808
        %v2394 = vpop.f32.mrf.mxu0
        %v2395 = vadd.f32 0.0, %v2394
        %v2396 = vpop.f32.mrf.mxu0
        %v2397 = vadd.f32 0.0, %v2396
        %2398 = vmatprep.mubr.f32.mxu0 0.0
        %2399 = vmatmul.mubr.f32.gmra.mxu0 %v811
        %v2400 = vpop.f32.mrf.mxu0
        %v2401 = vadd.f32 0.0, %v2400
        %v2402 = vpop.f32.mrf.mxu0
        %v2403 = vadd.f32 0.0, %v2402
        %2404 = vmatprep.mubr.f32.mxu0 0.0
        %2405 = vmatmul.mubr.f32.gmra.mxu0 %v814
        %v2406 = vpop.f32.mrf.mxu0
        %v2407 = vadd.f32 0.0, %v2406
        %v2408 = vpop.f32.mrf.mxu0
        %v2409 = vadd.f32 0.0, %v2408
        %2410 = vdwg.mxu0
        %2411 = vmatprep.subr.mxu0 0.0
        %2412 = vmatpush1.msra.mxu0 0.0
        %2413 = vmatprep.subr.mxu0 0.0
        %2414 = vmatpush1.msra.mxu0 0.0
        %2415 = vmatprep.subr.mxu0 0.0
        %2416 = vmatpush1.msra.mxu0 0.0
        %2417 = vmatprep.subr.mxu0 0.0
        %2418 = vmatpush1.msra.mxu0 0.0
        %2419 = vmatprep.subr.mxu0 0.0
        %2420 = vmatpush1.msra.mxu0 0.0
        %2421 = vmatprep.subr.mxu0 0.0
        %2422 = vmatpush1.msra.mxu0 0.0
        %2423 = vmatprep.subr.mxu0 0.0
        %2424 = vmatpush1.msra.mxu0 0.0
        %2425 = vmatprep.subr.mxu0 0.0
        %2426 = vmatpush1.msra.mxu0 0.0
        %2427 = vmatprep.subr.mxu0 0.0
        %2428 = vmatpush1.msra.mxu0 0.0
        %2429 = vmatprep.subr.mxu0 0.0
        %2430 = vmatpush1.msra.mxu0 0.0
        %2431 = vmatprep.subr.mxu0 0.0
        %2432 = vmatpush1.msra.mxu0 0.0
        %2433 = vmatprep.subr.mxu0 0.0
        %2434 = vmatpush1.msra.mxu0 0.0
        %2435 = vmatprep.subr.mxu0 %v2209
        %2436 = vmatpush1.msra.mxu0 %v2208
        %2437 = vmatprep.subr.mxu0 %v2207
        %2438 = vmatpush1.msra.mxu0 %v2206
        %2439 = vmatprep.subr.mxu0 %v2205
        %2440 = vmatpush1.msra.mxu0 %v2204
        %2441 = vmatprep.subr.mxu0 %v2203
        %2442 = vmatpush1.msra.mxu0 %v2202
        %2443 = vmatprep.subr.mxu0 0.0
        %2444 = vmatpush2.msra.mxu0 0.0
        %2445 = vmatprep.subr.mxu0 0.0
        %2446 = vmatpush2.msra.mxu0 0.0
        %2447 = vmatprep.subr.mxu0 0.0
        %2448 = vmatpush2.msra.mxu0 0.0
        %2449 = vmatprep.subr.mxu0 0.0
        %2450 = vmatpush2.msra.mxu0 0.0
        %2451 = vmatprep.subr.mxu0 0.0
        %2452 = vmatpush2.msra.mxu0 0.0
        %2453 = vmatprep.subr.mxu0 0.0
        %2454 = vmatpush2.msra.mxu0 0.0
        %2455 = vmatprep.subr.mxu0 0.0
        %2456 = vmatpush2.msra.mxu0 0.0
        %2457 = vmatprep.subr.mxu0 0.0
        %2458 = vmatpush2.msra.mxu0 0.0
        %2459 = vmatprep.subr.mxu0 0.0
        %2460 = vmatpush2.msra.mxu0 0.0
        %2461 = vmatprep.subr.mxu0 0.0
        %2462 = vmatpush2.msra.mxu0 0.0
        %2463 = vmatprep.subr.mxu0 0.0
        %2464 = vmatpush2.msra.mxu0 0.0
        %2465 = vmatprep.subr.mxu0 0.0
        %2466 = vmatpush2.msra.mxu0 0.0
        %2467 = vmatprep.subr.mxu0 0.0
        %2468 = vmatpush2.msra.mxu0 0.0
        %2469 = vmatprep.subr.mxu0 0.0
        %2470 = vmatpush2.msra.mxu0 0.0
        %2471 = vmatprep.subr.mxu0 0.0
        %2472 = vmatpush2.msra.mxu0 0.0
        %2473 = vmatprep.subr.mxu0 0.0
        %2474 = vmatpush2.msra.mxu0 0.0
        %2475 = vmatprep.mubr.f32.mxu0 0.0
        %2476 = vmatmul.mubr.f32.gmra.mxu0 %v1400
        %v2477 = vpop.f32.mrf.mxu0
        %v2478 = vadd.f32 %v2389, %v2477
        %v2479 = vpop.f32.mrf.mxu0
        %v2480 = vadd.f32 %v2391, %v2479
        %2481 = vmatprep.mubr.f32.mxu0 0.0
        %2482 = vmatmul.mubr.f32.gmra.mxu0 %v1403
        %v2483 = vpop.f32.mrf.mxu0
        %v2484 = vadd.f32 %v2395, %v2483
        %v2485 = vpop.f32.mrf.mxu0
        %v2486 = vadd.f32 %v2397, %v2485
        %2487 = vmatprep.mubr.f32.mxu0 0.0
        %2488 = vmatmul.mubr.f32.gmra.mxu0 %v1406
        %v2489 = vpop.f32.mrf.mxu0
        %v2490 = vadd.f32 %v2401, %v2489
        %v2491 = vpop.f32.mrf.mxu0
        %v2492 = vadd.f32 %v2403, %v2491
        %2493 = vmatprep.mubr.f32.mxu0 0.0
        %2494 = vmatmul.mubr.f32.gmra.mxu0 %v1409
        %v2495 = vpop.f32.mrf.mxu0
        %v2496 = vadd.f32 %v2407, %v2495
        %v2497 = vpop.f32.mrf.mxu0
        %v2498 = vadd.f32 %v2409, %v2497
        %2499 = vdwg.mxu0
        %v2500 = vlaneseq
        %v2501 = vshrl.u32 %v2500, 7
        %v2502 = vsub.s32 2, %v2501
        %v2503 = vrot.slane %v2092, %v2502
        %v2504 = vlaneseq
        %v2505 = vshrl.u32 %v2504, 7
        %v2506 = vsub.s32 2, %v2505
        %v2507 = vrot.slane %v2093, %v2506
        %v2508 = vmul.f32 %v2059, %v2503
        %v2509 = vmul.f32 %v2059, %v2507
        %v2510 = vmul.f32 %v2061, %v2503
        %v2511 = vmul.f32 %v2061, %v2507
        %v2512 = vmul.f32 %v2063, %v2503
        %v2513 = vmul.f32 %v2063, %v2507
        %v2514 = vmul.f32 %v2065, %v2503
        %v2515 = vmul.f32 %v2065, %v2507
        %v2516 = vlaneseq
        %v2517 = vshrl.u32 %v2516, 7
        %v2518 = vsub.s32 3, %v2517
        %v2519 = vrot.slane %v2092, %v2518
        %v2520 = vlaneseq
        %v2521 = vshrl.u32 %v2520, 7
        %v2522 = vsub.s32 3, %v2521
        %v2523 = vrot.slane %v2093, %v2522
        %v2524 = vmul.f32 %v2067, %v2519
        %v2525 = vmul.f32 %v2067, %v2523
        %v2526 = vmul.f32 %v2069, %v2519
        %v2527 = vmul.f32 %v2069, %v2523
        %v2528 = vmul.f32 %v2071, %v2519
        %v2529 = vmul.f32 %v2071, %v2523
        %v2530 = vmul.f32 %v2073, %v2519
        %v2531 = vmul.f32 %v2073, %v2523
        %v2532 = vadd.f32 %v2508, %v2524
        %v2533 = vadd.f32 %v2509, %v2525
        %v2534 = vadd.f32 %v2510, %v2526
        %v2535 = vadd.f32 %v2511, %v2527
        %v2536 = vadd.f32 %v2512, %v2528
        %v2537 = vadd.f32 %v2513, %v2529
        %v2538 = vadd.f32 %v2514, %v2530
        %v2539 = vadd.f32 %v2515, %v2531
        %v2540 = vlaneseq
        %v2541 = vshrl.u32 %v2540, 7
        %v2542 = vsub.s32 4, %v2541
        %v2543 = vrot.slane %v2092, %v2542
        %v2544 = vlaneseq
        %v2545 = vshrl.u32 %v2544, 7
        %v2546 = vsub.s32 4, %v2545
        %v2547 = vrot.slane %v2093, %v2546
        %v2548 = vmul.f32 %v2050, %v2543
        %v2549 = vmul.f32 %v2050, %v2547
        %v2550 = vmul.f32 %v2051, %v2543
        %v2551 = vmul.f32 %v2051, %v2547
        %v2552 = vmul.f32 %v2052, %v2543
        %v2553 = vmul.f32 %v2052, %v2547
        %v2554 = vmul.f32 %v2053, %v2543
        %v2555 = vmul.f32 %v2053, %v2547
        %v2556 = vadd.f32 %v2532, %v2548
        %v2557 = vadd.f32 %v2533, %v2549
        %v2558 = vadd.f32 %v2534, %v2550
        %v2559 = vadd.f32 %v2535, %v2551
        %v2560 = vadd.f32 %v2536, %v2552
        %v2561 = vadd.f32 %v2537, %v2553
        %v2562 = vadd.f32 %v2538, %v2554
        %v2563 = vadd.f32 %v2539, %v2555
        %v2564 = vlaneseq
        %v2565 = vshrl.u32 %v2564, 7
        %v2566 = vsub.s32 5, %v2565
        %v2567 = vrot.slane %v2092, %v2566
        %v2568 = vlaneseq
        %v2569 = vshrl.u32 %v2568, 7
        %v2570 = vsub.s32 5, %v2569
        %v2571 = vrot.slane %v2093, %v2570
        %v2572 = vmul.f32 %v2075, %v2567
        %v2573 = vmul.f32 %v2075, %v2571
        %v2574 = vmul.f32 %v2077, %v2567
        %v2575 = vmul.f32 %v2077, %v2571
        %v2576 = vmul.f32 %v2079, %v2567
        %v2577 = vmul.f32 %v2079, %v2571
        %v2578 = vmul.f32 %v2081, %v2567
        %v2579 = vmul.f32 %v2081, %v2571
        %v2580 = vadd.f32 %v2556, %v2572
        %v2581 = vadd.f32 %v2557, %v2573
        %v2582 = vadd.f32 %v2558, %v2574
        %v2583 = vadd.f32 %v2559, %v2575
        %v2584 = vadd.f32 %v2560, %v2576
        %v2585 = vadd.f32 %v2561, %v2577
        %v2586 = vadd.f32 %v2562, %v2578
        %v2587 = vadd.f32 %v2563, %v2579
        %v2588 = vlaneseq
        %v2589 = vshrl.u32 %v2588, 7
        %v2590 = vsub.s32 6, %v2589
        %v2591 = vrot.slane %v2092, %v2590
        %v2592 = vlaneseq
        %v2593 = vshrl.u32 %v2592, 7
        %v2594 = vsub.s32 6, %v2593
        %v2595 = vrot.slane %v2093, %v2594
        %v2596 = vmul.f32 %v2083, %v2591
        %v2597 = vmul.f32 %v2083, %v2595
        %v2598 = vmul.f32 %v2085, %v2591
        %v2599 = vmul.f32 %v2085, %v2595
        %v2600 = vmul.f32 %v2087, %v2591
        %v2601 = vmul.f32 %v2087, %v2595
        %v2602 = vmul.f32 %v2089, %v2591
        %v2603 = vmul.f32 %v2089, %v2595
        %v2604 = vadd.f32 %v2580, %v2596
        %v2605 = vadd.f32 %v2581, %v2597
        %v2606 = vadd.f32 %v2582, %v2598
        %v2607 = vadd.f32 %v2583, %v2599
        %v2608 = vadd.f32 %v2584, %v2600
        %v2609 = vadd.f32 %v2585, %v2601
        %v2610 = vadd.f32 %v2586, %v2602
        %v2611 = vadd.f32 %v2587, %v2603
        %v2612 = vadd.f32 %v2478, %v2604
        %v2613 = vadd.f32 %v2480, %v2605
        %v2614 = vadd.f32 %v2484, %v2606
        %v2615 = vadd.f32 %v2486, %v2607
        %v2616 = vadd.f32 %v2490, %v2608
        %v2617 = vadd.f32 %v2492, %v2609
        %v2618 = vadd.f32 %v2496, %v2610
        %v2619 = vadd.f32 %v2498, %v2611
        %v2620 = vlaneseq
        %v2621 = vshrl.u32 %v2620, 7
        %v2622 = vsub.s32 7, %v2621
        %v2623 = vrot.slane %v2092, %v2622
        %v2624 = vlaneseq
        %v2625 = vshrl.u32 %v2624, 7
        %v2626 = vsub.s32 7, %v2625
        %v2627 = vrot.slane %v2093, %v2626
        %v2628 = vmul.f32 %v2059, %v2623
        %v2629 = vmul.f32 %v2059, %v2627
        %v2630 = vmul.f32 %v2061, %v2623
        %v2631 = vmul.f32 %v2061, %v2627
        %v2632 = vmul.f32 %v2063, %v2623
        %v2633 = vmul.f32 %v2063, %v2627
        %v2634 = vmul.f32 %v2065, %v2623
        %v2635 = vmul.f32 %v2065, %v2627
        %v2636 = vlaneseq
        %v2637 = vshrl.u32 %v2636, 7
        %v2638 = vsub.s32 0, %v2637
        %v2639 = vrot.slane %v2094, %v2638
        %v2640 = vlaneseq
        %v2641 = vshrl.u32 %v2640, 7
        %v2642 = vsub.s32 0, %v2641
        %v2643 = vrot.slane %v2095, %v2642
        %v2644 = vmul.f32 %v2067, %v2639
        %v2645 = vmul.f32 %v2067, %v2643
        %v2646 = vmul.f32 %v2069, %v2639
        %v2647 = vmul.f32 %v2069, %v2643
        %v2648 = vmul.f32 %v2071, %v2639
        %v2649 = vmul.f32 %v2071, %v2643
        %v2650 = vmul.f32 %v2073, %v2639
        %v2651 = vmul.f32 %v2073, %v2643
        %v2652 = vadd.f32 %v2628, %v2644
        %v2653 = vadd.f32 %v2629, %v2645
        %v2654 = vadd.f32 %v2630, %v2646
        %v2655 = vadd.f32 %v2631, %v2647
        %v2656 = vadd.f32 %v2632, %v2648
        %v2657 = vadd.f32 %v2633, %v2649
        %v2658 = vadd.f32 %v2634, %v2650
        %v2659 = vadd.f32 %v2635, %v2651
        %v2660 = vlaneseq
        %v2661 = vshrl.u32 %v2660, 7
        %v2662 = vsub.s32 1, %v2661
        %v2663 = vrot.slane %v2094, %v2662
        %v2664 = vlaneseq
        %v2665 = vshrl.u32 %v2664, 7
        %v2666 = vsub.s32 1, %v2665
        %v2667 = vrot.slane %v2095, %v2666
        %v2668 = vmul.f32 %v2050, %v2663
        %v2669 = vmul.f32 %v2050, %v2667
        %v2670 = vmul.f32 %v2051, %v2663
        %v2671 = vmul.f32 %v2051, %v2667
        %v2672 = vmul.f32 %v2052, %v2663
        %v2673 = vmul.f32 %v2052, %v2667
        %v2674 = vmul.f32 %v2053, %v2663
        %v2675 = vmul.f32 %v2053, %v2667
        %v2676 = vadd.f32 %v2652, %v2668
        %v2677 = vadd.f32 %v2653, %v2669
        %v2678 = vadd.f32 %v2654, %v2670
        %v2679 = vadd.f32 %v2655, %v2671
        %v2680 = vadd.f32 %v2656, %v2672
        %v2681 = vadd.f32 %v2657, %v2673
        %v2682 = vadd.f32 %v2658, %v2674
        %v2683 = vadd.f32 %v2659, %v2675
        %v2684 = vlaneseq
        %v2685 = vshrl.u32 %v2684, 7
        %v2686 = vsub.s32 2, %v2685
        %v2687 = vrot.slane %v2094, %v2686
        %v2688 = vlaneseq
        %v2689 = vshrl.u32 %v2688, 7
        %v2690 = vsub.s32 2, %v2689
        %v2691 = vrot.slane %v2095, %v2690
        %v2692 = vmul.f32 %v2075, %v2687
        %v2693 = vmul.f32 %v2075, %v2691
        %v2694 = vmul.f32 %v2077, %v2687
        %v2695 = vmul.f32 %v2077, %v2691
        %v2696 = vmul.f32 %v2079, %v2687
        %v2697 = vmul.f32 %v2079, %v2691
        %v2698 = vmul.f32 %v2081, %v2687
        %v2699 = vmul.f32 %v2081, %v2691
        %v2700 = vadd.f32 %v2676, %v2692
        %v2701 = vadd.f32 %v2677, %v2693
        %v2702 = vadd.f32 %v2678, %v2694
        %v2703 = vadd.f32 %v2679, %v2695
        %v2704 = vadd.f32 %v2680, %v2696
        %v2705 = vadd.f32 %v2681, %v2697
        %v2706 = vadd.f32 %v2682, %v2698
        %v2707 = vadd.f32 %v2683, %v2699
        %v2708 = vlaneseq
        %v2709 = vshrl.u32 %v2708, 7
        %v2710 = vsub.s32 3, %v2709
        %v2711 = vrot.slane %v2094, %v2710
        %v2712 = vlaneseq
        %v2713 = vshrl.u32 %v2712, 7
        %v2714 = vsub.s32 3, %v2713
        %v2715 = vrot.slane %v2095, %v2714
        %v2716 = vmul.f32 %v2083, %v2711
        %v2717 = vmul.f32 %v2083, %v2715
        %v2718 = vmul.f32 %v2085, %v2711
        %v2719 = vmul.f32 %v2085, %v2715
        %v2720 = vmul.f32 %v2087, %v2711
        %v2721 = vmul.f32 %v2087, %v2715
        %v2722 = vmul.f32 %v2089, %v2711
        %v2723 = vmul.f32 %v2089, %v2715
        %v2724 = vadd.f32 %v2700, %v2716
        %v2725 = vadd.f32 %v2701, %v2717
        %v2726 = vadd.f32 %v2702, %v2718
        %v2727 = vadd.f32 %v2703, %v2719
        %v2728 = vadd.f32 %v2704, %v2720
        %v2729 = vadd.f32 %v2705, %v2721
        %v2730 = vadd.f32 %v2706, %v2722
        %v2731 = vadd.f32 %v2707, %v2723
        %2732 = vmatprep.subr.mxu0 0.0
        %2733 = vmatpush1.msra.mxu0 0.0
        %2734 = vmatprep.subr.mxu0 0.0
        %2735 = vmatpush1.msra.mxu0 0.0
        %2736 = vmatprep.subr.mxu0 0.0
        %2737 = vmatpush1.msra.mxu0 0.0
        %2738 = vmatprep.subr.mxu0 0.0
        %2739 = vmatpush1.msra.mxu0 0.0
        %2740 = vmatprep.subr.mxu0 0.0
        %2741 = vmatpush1.msra.mxu0 0.0
        %2742 = vmatprep.subr.mxu0 0.0
        %2743 = vmatpush1.msra.mxu0 0.0
        %2744 = vmatprep.subr.mxu0 0.0
        %2745 = vmatpush1.msra.mxu0 0.0
        %2746 = vmatprep.subr.mxu0 0.0
        %2747 = vmatpush1.msra.mxu0 0.0
        %2748 = vmatprep.subr.mxu0 0.0
        %2749 = vmatpush1.msra.mxu0 0.0
        %2750 = vmatprep.subr.mxu0 0.0
        %2751 = vmatpush1.msra.mxu0 0.0
        %2752 = vmatprep.subr.mxu0 0.0
        %2753 = vmatpush1.msra.mxu0 0.0
        %2754 = vmatprep.subr.mxu0 0.0
        %2755 = vmatpush1.msra.mxu0 0.0
        %2756 = vmatprep.subr.mxu0 %v2731
        %2757 = vmatpush1.msra.mxu0 %v2730
        %2758 = vmatprep.subr.mxu0 %v2729
        %2759 = vmatpush1.msra.mxu0 %v2728
        %2760 = vmatprep.subr.mxu0 %v2727
        %2761 = vmatpush1.msra.mxu0 %v2726
        %2762 = vmatprep.subr.mxu0 %v2725
        %2763 = vmatpush1.msra.mxu0 %v2724
        %2764 = vmatprep.subr.mxu0 0.0
        %2765 = vmatpush2.msra.mxu0 0.0
        %2766 = vmatprep.subr.mxu0 0.0
        %2767 = vmatpush2.msra.mxu0 0.0
        %2768 = vmatprep.subr.mxu0 0.0
        %2769 = vmatpush2.msra.mxu0 0.0
        %2770 = vmatprep.subr.mxu0 0.0
        %2771 = vmatpush2.msra.mxu0 0.0
        %2772 = vmatprep.subr.mxu0 0.0
        %2773 = vmatpush2.msra.mxu0 0.0
        %2774 = vmatprep.subr.mxu0 0.0
        %2775 = vmatpush2.msra.mxu0 0.0
        %2776 = vmatprep.subr.mxu0 0.0
        %2777 = vmatpush2.msra.mxu0 0.0
        %2778 = vmatprep.subr.mxu0 0.0
        %2779 = vmatpush2.msra.mxu0 0.0
        %2780 = vmatprep.subr.mxu0 0.0
        %2781 = vmatpush2.msra.mxu0 0.0
        %2782 = vmatprep.subr.mxu0 0.0
        %2783 = vmatpush2.msra.mxu0 0.0
        %2784 = vmatprep.subr.mxu0 0.0
        %2785 = vmatpush2.msra.mxu0 0.0
        %2786 = vmatprep.subr.mxu0 0.0
        %2787 = vmatpush2.msra.mxu0 0.0
        %2788 = vmatprep.subr.mxu0 0.0
        %2789 = vmatpush2.msra.mxu0 0.0
        %2790 = vmatprep.subr.mxu0 0.0
        %2791 = vmatpush2.msra.mxu0 0.0
        %2792 = vmatprep.subr.mxu0 0.0
        %2793 = vmatpush2.msra.mxu0 0.0
        %2794 = vmatprep.subr.mxu0 0.0
        %2795 = vmatpush2.msra.mxu0 0.0
        %2796 = vmatprep.mubr.f32.mxu0 0.0
        %2797 = vmatmul.mubr.f32.gmra.mxu0 %v970
        %v2798 = vpop.f32.mrf.mxu0
        %v2799 = vadd.f32 0.0, %v2798
        %v2800 = vpop.f32.mrf.mxu0
        %v2801 = vadd.f32 0.0, %v2800
        %2802 = vmatprep.mubr.f32.mxu0 0.0
        %2803 = vmatmul.mubr.f32.gmra.mxu0 %v973
        %v2804 = vpop.f32.mrf.mxu0
        %v2805 = vadd.f32 0.0, %v2804
        %v2806 = vpop.f32.mrf.mxu0
        %v2807 = vadd.f32 0.0, %v2806
        %2808 = vmatprep.mubr.f32.mxu0 0.0
        %2809 = vmatmul.mubr.f32.gmra.mxu0 %v976
        %v2810 = vpop.f32.mrf.mxu0
        %v2811 = vadd.f32 0.0, %v2810
        %v2812 = vpop.f32.mrf.mxu0
        %v2813 = vadd.f32 0.0, %v2812
        %2814 = vmatprep.mubr.f32.mxu0 0.0
        %2815 = vmatmul.mubr.f32.gmra.mxu0 %v979
        %v2816 = vpop.f32.mrf.mxu0
        %v2817 = vadd.f32 0.0, %v2816
        %v2818 = vpop.f32.mrf.mxu0
        %v2819 = vadd.f32 0.0, %v2818
        %2820 = vdwg.mxu0
        %v2821 = vadd.f32 %v2612, %v2799
        %v2822 = vadd.f32 %v2613, %v2801
        %v2823 = vadd.f32 %v2614, %v2805
        %v2824 = vadd.f32 %v2615, %v2807
        %v2825 = vadd.f32 %v2616, %v2811
        %v2826 = vadd.f32 %v2617, %v2813
        %v2827 = vadd.f32 %v2618, %v2817
        %v2828 = vadd.f32 %v2619, %v2819
        %v2829 = vlaneseq
        %v2830 = vshrl.u32 %v2829, 7
        %v2831 = vsub.s32 4, %v2830
        %v2832 = vrot.slane %v2094, %v2831
        %v2833 = vlaneseq
        %v2834 = vshrl.u32 %v2833, 7
        %v2835 = vsub.s32 4, %v2834
        %v2836 = vrot.slane %v2095, %v2835
        %v2837 = vmul.f32 %v2059, %v2832
        %v2838 = vmul.f32 %v2059, %v2836
        %v2839 = vmul.f32 %v2061, %v2832
        %v2840 = vmul.f32 %v2061, %v2836
        %v2841 = vmul.f32 %v2063, %v2832
        %v2842 = vmul.f32 %v2063, %v2836
        %v2843 = vmul.f32 %v2065, %v2832
        %v2844 = vmul.f32 %v2065, %v2836
        %v2845 = vlaneseq
        %v2846 = vshrl.u32 %v2845, 7
        %v2847 = vsub.s32 5, %v2846
        %v2848 = vrot.slane %v2094, %v2847
        %v2849 = vlaneseq
        %v2850 = vshrl.u32 %v2849, 7
        %v2851 = vsub.s32 5, %v2850
        %v2852 = vrot.slane %v2095, %v2851
        %v2853 = vmul.f32 %v2067, %v2848
        %v2854 = vmul.f32 %v2067, %v2852
        %v2855 = vmul.f32 %v2069, %v2848
        %v2856 = vmul.f32 %v2069, %v2852
        %v2857 = vmul.f32 %v2071, %v2848
        %v2858 = vmul.f32 %v2071, %v2852
        %v2859 = vmul.f32 %v2073, %v2848
        %v2860 = vmul.f32 %v2073, %v2852
        %v2861 = vadd.f32 %v2837, %v2853
        %v2862 = vadd.f32 %v2838, %v2854
        %v2863 = vadd.f32 %v2839, %v2855
        %v2864 = vadd.f32 %v2840, %v2856
        %v2865 = vadd.f32 %v2841, %v2857
        %v2866 = vadd.f32 %v2842, %v2858
        %v2867 = vadd.f32 %v2843, %v2859
        %v2868 = vadd.f32 %v2844, %v2860
        %v2869 = vlaneseq
        %v2870 = vshrl.u32 %v2869, 7
        %v2871 = vsub.s32 6, %v2870
        %v2872 = vrot.slane %v2094, %v2871
        %v2873 = vlaneseq
        %v2874 = vshrl.u32 %v2873, 7
        %v2875 = vsub.s32 6, %v2874
        %v2876 = vrot.slane %v2095, %v2875
        %v2877 = vmul.f32 %v2050, %v2872
        %v2878 = vmul.f32 %v2050, %v2876
        %v2879 = vmul.f32 %v2051, %v2872
        %v2880 = vmul.f32 %v2051, %v2876
        %v2881 = vmul.f32 %v2052, %v2872
        %v2882 = vmul.f32 %v2052, %v2876
        %v2883 = vmul.f32 %v2053, %v2872
        %v2884 = vmul.f32 %v2053, %v2876
        %v2885 = vadd.f32 %v2861, %v2877
        %v2886 = vadd.f32 %v2862, %v2878
        %v2887 = vadd.f32 %v2863, %v2879
        %v2888 = vadd.f32 %v2864, %v2880
        %v2889 = vadd.f32 %v2865, %v2881
        %v2890 = vadd.f32 %v2866, %v2882
        %v2891 = vadd.f32 %v2867, %v2883
        %v2892 = vadd.f32 %v2868, %v2884
        %v2893 = vlaneseq
        %v2894 = vshrl.u32 %v2893, 7
        %v2895 = vsub.s32 7, %v2894
        %v2896 = vrot.slane %v2094, %v2895
        %v2897 = vlaneseq
        %v2898 = vshrl.u32 %v2897, 7
        %v2899 = vsub.s32 7, %v2898
        %v2900 = vrot.slane %v2095, %v2899
        %v2901 = vmul.f32 %v2075, %v2896
        %v2902 = vmul.f32 %v2075, %v2900
        %v2903 = vmul.f32 %v2077, %v2896
        %v2904 = vmul.f32 %v2077, %v2900
        %v2905 = vmul.f32 %v2079, %v2896
        %v2906 = vmul.f32 %v2079, %v2900
        %v2907 = vmul.f32 %v2081, %v2896
        %v2908 = vmul.f32 %v2081, %v2900
        %v2909 = vadd.f32 %v2885, %v2901
        %v2910 = vadd.f32 %v2886, %v2902
        %v2911 = vadd.f32 %v2887, %v2903
        %v2912 = vadd.f32 %v2888, %v2904
        %v2913 = vadd.f32 %v2889, %v2905
        %v2914 = vadd.f32 %v2890, %v2906
        %v2915 = vadd.f32 %v2891, %v2907
        %v2916 = vadd.f32 %v2892, %v2908
        %v2917 = vlaneseq
        %v2918 = vshrl.u32 %v2917, 7
        %v2919 = vsub.s32 0, %v2918
        %v2920 = vrot.slane %v2096, %v2919
        %v2921 = vlaneseq
        %v2922 = vshrl.u32 %v2921, 7
        %v2923 = vsub.s32 0, %v2922
        %v2924 = vrot.slane %v2097, %v2923
        %v2925 = vmul.f32 %v2083, %v2920
        %v2926 = vmul.f32 %v2083, %v2924
        %v2927 = vmul.f32 %v2085, %v2920
        %v2928 = vmul.f32 %v2085, %v2924
        %v2929 = vmul.f32 %v2087, %v2920
        %v2930 = vmul.f32 %v2087, %v2924
        %v2931 = vmul.f32 %v2089, %v2920
        %v2932 = vmul.f32 %v2089, %v2924
        %v2933 = vadd.f32 %v2909, %v2925
        %v2934 = vadd.f32 %v2910, %v2926
        %v2935 = vadd.f32 %v2911, %v2927
        %v2936 = vadd.f32 %v2912, %v2928
        %v2937 = vadd.f32 %v2913, %v2929
        %v2938 = vadd.f32 %v2914, %v2930
        %v2939 = vadd.f32 %v2915, %v2931
        %v2940 = vadd.f32 %v2916, %v2932
        %2941 = vmatprep.subr.mxu0 0.0
        %2942 = vmatpush1.msra.mxu0 0.0
        %2943 = vmatprep.subr.mxu0 0.0
        %2944 = vmatpush1.msra.mxu0 0.0
        %2945 = vmatprep.subr.mxu0 0.0
        %2946 = vmatpush1.msra.mxu0 0.0
        %2947 = vmatprep.subr.mxu0 0.0
        %2948 = vmatpush1.msra.mxu0 0.0
        %2949 = vmatprep.subr.mxu0 0.0
        %2950 = vmatpush1.msra.mxu0 0.0
        %2951 = vmatprep.subr.mxu0 0.0
        %2952 = vmatpush1.msra.mxu0 0.0
        %2953 = vmatprep.subr.mxu0 0.0
        %2954 = vmatpush1.msra.mxu0 0.0
        %2955 = vmatprep.subr.mxu0 0.0
        %2956 = vmatpush1.msra.mxu0 0.0
        %2957 = vmatprep.subr.mxu0 0.0
        %2958 = vmatpush1.msra.mxu0 0.0
        %2959 = vmatprep.subr.mxu0 0.0
        %2960 = vmatpush1.msra.mxu0 0.0
        %2961 = vmatprep.subr.mxu0 0.0
        %2962 = vmatpush1.msra.mxu0 0.0
        %2963 = vmatprep.subr.mxu0 0.0
        %2964 = vmatpush1.msra.mxu0 0.0
        %2965 = vmatprep.subr.mxu0 %v2940
        %2966 = vmatpush1.msra.mxu0 %v2939
        %2967 = vmatprep.subr.mxu0 %v2938
        %2968 = vmatpush1.msra.mxu0 %v2937
        %2969 = vmatprep.subr.mxu0 %v2936
        %2970 = vmatpush1.msra.mxu0 %v2935
        %2971 = vmatprep.subr.mxu0 %v2934
        %2972 = vmatpush1.msra.mxu0 %v2933
        %2973 = vmatprep.subr.mxu0 0.0
        %2974 = vmatpush2.msra.mxu0 0.0
        %2975 = vmatprep.subr.mxu0 0.0
        %2976 = vmatpush2.msra.mxu0 0.0
        %2977 = vmatprep.subr.mxu0 0.0
        %2978 = vmatpush2.msra.mxu0 0.0
        %2979 = vmatprep.subr.mxu0 0.0
        %2980 = vmatpush2.msra.mxu0 0.0
        %2981 = vmatprep.subr.mxu0 0.0
        %2982 = vmatpush2.msra.mxu0 0.0
        %2983 = vmatprep.subr.mxu0 0.0
        %2984 = vmatpush2.msra.mxu0 0.0
        %2985 = vmatprep.subr.mxu0 0.0
        %2986 = vmatpush2.msra.mxu0 0.0
        %2987 = vmatprep.subr.mxu0 0.0
        %2988 = vmatpush2.msra.mxu0 0.0
        %2989 = vmatprep.subr.mxu0 0.0
        %2990 = vmatpush2.msra.mxu0 0.0
        %2991 = vmatprep.subr.mxu0 0.0
        %2992 = vmatpush2.msra.mxu0 0.0
        %2993 = vmatprep.subr.mxu0 0.0
        %2994 = vmatpush2.msra.mxu0 0.0
        %2995 = vmatprep.subr.mxu0 0.0
        %2996 = vmatpush2.msra.mxu0 0.0
        %2997 = vmatprep.subr.mxu0 0.0
        %2998 = vmatpush2.msra.mxu0 0.0
        %2999 = vmatprep.subr.mxu0 0.0
        %3000 = vmatpush2.msra.mxu0 0.0
        %3001 = vmatprep.subr.mxu0 0.0
        %3002 = vmatpush2.msra.mxu0 0.0
        %3003 = vmatprep.subr.mxu0 0.0
        %3004 = vmatpush2.msra.mxu0 0.0
        %3005 = vmatprep.mubr.f32.mxu0 0.0
        %3006 = vmatmul.mubr.f32.gmra.mxu0 %v1942
        %v3007 = vpop.f32.mrf.mxu0
        %v3008 = vadd.f32 0.0, %v3007
        %v3009 = vpop.f32.mrf.mxu0
        %v3010 = vadd.f32 0.0, %v3009
        %3011 = vmatprep.mubr.f32.mxu0 0.0
        %3012 = vmatmul.mubr.f32.gmra.mxu0 %v1945
        %v3013 = vpop.f32.mrf.mxu0
        %v3014 = vadd.f32 0.0, %v3013
        %v3015 = vpop.f32.mrf.mxu0
        %v3016 = vadd.f32 0.0, %v3015
        %3017 = vmatprep.mubr.f32.mxu0 0.0
        %3018 = vmatmul.mubr.f32.gmra.mxu0 %v1948
        %v3019 = vpop.f32.mrf.mxu0
        %v3020 = vadd.f32 0.0, %v3019
        %v3021 = vpop.f32.mrf.mxu0
        %v3022 = vadd.f32 0.0, %v3021
        %3023 = vmatprep.mubr.f32.mxu0 0.0
        %3024 = vmatmul.mubr.f32.gmra.mxu0 %v1951
        %v3025 = vpop.f32.mrf.mxu0
        %v3026 = vadd.f32 0.0, %v3025
        %v3027 = vpop.f32.mrf.mxu0
        %v3028 = vadd.f32 0.0, %v3027
        %3029 = vdwg.mxu0
        %v3030 = vadd.f32 %v2821, %v3008
        %v3031 = vadd.f32 %v2822, %v3010
        %v3032 = vadd.f32 %v2823, %v3014
        %v3033 = vadd.f32 %v2824, %v3016
        %v3034 = vadd.f32 %v2825, %v3020
        %v3035 = vadd.f32 %v2826, %v3022
        %v3036 = vadd.f32 %v2827, %v3026
        %v3037 = vadd.f32 %v2828, %v3028
        %3038 = vrot.lane.b32.xlu0 %v2054, 2
        %v3039 = vpop.permute.xlu0 %3038
        %3040 = vrot.lane.b32.xlu0 %v2055, 2
        %v3041 = vpop.permute.xlu0 %3040
        %3042 = vrot.lane.b32.xlu0 %v2056, 2
        %v3043 = vpop.permute.xlu0 %3042
        %3044 = vrot.lane.b32.xlu0 %v2057, 2
        %v3045 = vpop.permute.xlu0 %3044
        %3046 = vrot.lane.b32.xlu0 %v2054, 1
        %v3047 = vpop.permute.xlu0 %3046
        %3048 = vrot.lane.b32.xlu0 %v2055, 1
        %v3049 = vpop.permute.xlu0 %3048
        %3050 = vrot.lane.b32.xlu0 %v2056, 1
        %v3051 = vpop.permute.xlu0 %3050
        %3052 = vrot.lane.b32.xlu0 %v2057, 1
        %v3053 = vpop.permute.xlu0 %3052
        %3054 = vrot.lane.b32.xlu0 %v2054, 127
        %v3055 = vpop.permute.xlu0 %3054
        %3056 = vrot.lane.b32.xlu0 %v2055, 127
        %v3057 = vpop.permute.xlu0 %3056
        %3058 = vrot.lane.b32.xlu0 %v2056, 127
        %v3059 = vpop.permute.xlu0 %3058
        %3060 = vrot.lane.b32.xlu0 %v2057, 127
        %v3061 = vpop.permute.xlu0 %3060
        %3062 = vrot.lane.b32.xlu0 %v2054, 126
        %v3063 = vpop.permute.xlu0 %3062
        %3064 = vrot.lane.b32.xlu0 %v2055, 126
        %v3065 = vpop.permute.xlu0 %3064
        %3066 = vrot.lane.b32.xlu0 %v2056, 126
        %v3067 = vpop.permute.xlu0 %3066
        %3068 = vrot.lane.b32.xlu0 %v2057, 126
        %v3069 = vpop.permute.xlu0 %3068
        %v3070 = vld [vmem:[#allocation11] sm:$0xff]
        %v3071 = vld [vmem:[#allocation11 + $0x8] sm:$0xff]
        %v3072 = vld [vmem:[#allocation11 + $0x10] sm:$0xff]
        %v3073 = vld [vmem:[#allocation11 + $0x18] sm:$0xff]
        %v3074 = vld [vmem:[#allocation11 + $0x20] sm:$0xff]
        %v3075 = vld [vmem:[#allocation11 + $0x28] sm:$0xff]
        %v3076 = vld [vmem:[#allocation11 + $0x30] sm:$0x1]
        %v3077 = vld [vmem:[#allocation11 + $0x38] sm:$0x1]
        %v3078 = vlaneseq
        %v3079 = vshrl.u32 %v3078, 7
        %v3080 = vsub.s32 0, %v3079
        %v3081 = vrot.slane %v3070, %v3080
        %v3082 = vlaneseq
        %v3083 = vshrl.u32 %v3082, 7
        %v3084 = vsub.s32 0, %v3083
        %v3085 = vrot.slane %v3071, %v3084
        %v3086 = vmul.f32 %v3039, %v3081
        %v3087 = vmul.f32 %v3039, %v3085
        %v3088 = vmul.f32 %v3041, %v3081
        %v3089 = vmul.f32 %v3041, %v3085
        %v3090 = vmul.f32 %v3043, %v3081
        %v3091 = vmul.f32 %v3043, %v3085
        %v3092 = vmul.f32 %v3045, %v3081
        %v3093 = vmul.f32 %v3045, %v3085
        %v3094 = vlaneseq
        %v3095 = vshrl.u32 %v3094, 7
        %v3096 = vsub.s32 1, %v3095
        %v3097 = vrot.slane %v3070, %v3096
        %v3098 = vlaneseq
        %v3099 = vshrl.u32 %v3098, 7
        %v3100 = vsub.s32 1, %v3099
        %v3101 = vrot.slane %v3071, %v3100
        %v3102 = vmul.f32 %v3047, %v3097
        %v3103 = vmul.f32 %v3047, %v3101
        %v3104 = vmul.f32 %v3049, %v3097
        %v3105 = vmul.f32 %v3049, %v3101
        %v3106 = vmul.f32 %v3051, %v3097
        %v3107 = vmul.f32 %v3051, %v3101
        %v3108 = vmul.f32 %v3053, %v3097
        %v3109 = vmul.f32 %v3053, %v3101
        %v3110 = vadd.f32 %v3086, %v3102
        %v3111 = vadd.f32 %v3087, %v3103
        %v3112 = vadd.f32 %v3088, %v3104
        %v3113 = vadd.f32 %v3089, %v3105
        %v3114 = vadd.f32 %v3090, %v3106
        %v3115 = vadd.f32 %v3091, %v3107
        %v3116 = vadd.f32 %v3092, %v3108
        %v3117 = vadd.f32 %v3093, %v3109
        %v3118 = vlaneseq
        %v3119 = vshrl.u32 %v3118, 7
        %v3120 = vsub.s32 2, %v3119
        %v3121 = vrot.slane %v3070, %v3120
        %v3122 = vlaneseq
        %v3123 = vshrl.u32 %v3122, 7
        %v3124 = vsub.s32 2, %v3123
        %v3125 = vrot.slane %v3071, %v3124
        %v3126 = vmul.f32 %v2054, %v3121
        %v3127 = vmul.f32 %v2054, %v3125
        %v3128 = vmul.f32 %v2055, %v3121
        %v3129 = vmul.f32 %v2055, %v3125
        %v3130 = vmul.f32 %v2056, %v3121
        %v3131 = vmul.f32 %v2056, %v3125
        %v3132 = vmul.f32 %v2057, %v3121
        %v3133 = vmul.f32 %v2057, %v3125
        %v3134 = vadd.f32 %v3110, %v3126
        %v3135 = vadd.f32 %v3111, %v3127
        %v3136 = vadd.f32 %v3112, %v3128
        %v3137 = vadd.f32 %v3113, %v3129
        %v3138 = vadd.f32 %v3114, %v3130
        %v3139 = vadd.f32 %v3115, %v3131
        %v3140 = vadd.f32 %v3116, %v3132
        %v3141 = vadd.f32 %v3117, %v3133
        %v3142 = vlaneseq
        %v3143 = vshrl.u32 %v3142, 7
        %v3144 = vsub.s32 3, %v3143
        %v3145 = vrot.slane %v3070, %v3144
        %v3146 = vlaneseq
        %v3147 = vshrl.u32 %v3146, 7
        %v3148 = vsub.s32 3, %v3147
        %v3149 = vrot.slane %v3071, %v3148
        %v3150 = vmul.f32 %v3055, %v3145
        %v3151 = vmul.f32 %v3055, %v3149
        %v3152 = vmul.f32 %v3057, %v3145
        %v3153 = vmul.f32 %v3057, %v3149
        %v3154 = vmul.f32 %v3059, %v3145
        %v3155 = vmul.f32 %v3059, %v3149
        %v3156 = vmul.f32 %v3061, %v3145
        %v3157 = vmul.f32 %v3061, %v3149
        %v3158 = vadd.f32 %v3134, %v3150
        %v3159 = vadd.f32 %v3135, %v3151
        %v3160 = vadd.f32 %v3136, %v3152
        %v3161 = vadd.f32 %v3137, %v3153
        %v3162 = vadd.f32 %v3138, %v3154
        %v3163 = vadd.f32 %v3139, %v3155
        %v3164 = vadd.f32 %v3140, %v3156
        %v3165 = vadd.f32 %v3141, %v3157
        %v3166 = vlaneseq
        %v3167 = vshrl.u32 %v3166, 7
        %v3168 = vsub.s32 4, %v3167
        %v3169 = vrot.slane %v3070, %v3168
        %v3170 = vlaneseq
        %v3171 = vshrl.u32 %v3170, 7
        %v3172 = vsub.s32 4, %v3171
        %v3173 = vrot.slane %v3071, %v3172
        %v3174 = vmul.f32 %v3063, %v3169
        %v3175 = vmul.f32 %v3063, %v3173
        %v3176 = vmul.f32 %v3065, %v3169
        %v3177 = vmul.f32 %v3065, %v3173
        %v3178 = vmul.f32 %v3067, %v3169
        %v3179 = vmul.f32 %v3067, %v3173
        %v3180 = vmul.f32 %v3069, %v3169
        %v3181 = vmul.f32 %v3069, %v3173
        %v3182 = vadd.f32 %v3158, %v3174
        %v3183 = vadd.f32 %v3159, %v3175
        %v3184 = vadd.f32 %v3160, %v3176
        %v3185 = vadd.f32 %v3161, %v3177
        %v3186 = vadd.f32 %v3162, %v3178
        %v3187 = vadd.f32 %v3163, %v3179
        %v3188 = vadd.f32 %v3164, %v3180
        %v3189 = vadd.f32 %v3165, %v3181
        %v3190 = vlaneseq
        %v3191 = vshrl.u32 %v3190, 7
        %v3192 = vsub.s32 5, %v3191
        %v3193 = vrot.slane %v3070, %v3192
        %v3194 = vlaneseq
        %v3195 = vshrl.u32 %v3194, 7
        %v3196 = vsub.s32 5, %v3195
        %v3197 = vrot.slane %v3071, %v3196
        %v3198 = vmul.f32 %v3039, %v3193
        %v3199 = vmul.f32 %v3039, %v3197
        %v3200 = vmul.f32 %v3041, %v3193
        %v3201 = vmul.f32 %v3041, %v3197
        %v3202 = vmul.f32 %v3043, %v3193
        %v3203 = vmul.f32 %v3043, %v3197
        %v3204 = vmul.f32 %v3045, %v3193
        %v3205 = vmul.f32 %v3045, %v3197
        %v3206 = vlaneseq
        %v3207 = vshrl.u32 %v3206, 7
        %v3208 = vsub.s32 6, %v3207
        %v3209 = vrot.slane %v3070, %v3208
        %v3210 = vlaneseq
        %v3211 = vshrl.u32 %v3210, 7
        %v3212 = vsub.s32 6, %v3211
        %v3213 = vrot.slane %v3071, %v3212
        %v3214 = vmul.f32 %v3047, %v3209
        %v3215 = vmul.f32 %v3047, %v3213
        %v3216 = vmul.f32 %v3049, %v3209
        %v3217 = vmul.f32 %v3049, %v3213
        %v3218 = vmul.f32 %v3051, %v3209
        %v3219 = vmul.f32 %v3051, %v3213
        %v3220 = vmul.f32 %v3053, %v3209
        %v3221 = vmul.f32 %v3053, %v3213
        %v3222 = vadd.f32 %v3198, %v3214
        %v3223 = vadd.f32 %v3199, %v3215
        %v3224 = vadd.f32 %v3200, %v3216
        %v3225 = vadd.f32 %v3201, %v3217
        %v3226 = vadd.f32 %v3202, %v3218
        %v3227 = vadd.f32 %v3203, %v3219
        %v3228 = vadd.f32 %v3204, %v3220
        %v3229 = vadd.f32 %v3205, %v3221
        %v3230 = vlaneseq
        %v3231 = vshrl.u32 %v3230, 7
        %v3232 = vsub.s32 7, %v3231
        %v3233 = vrot.slane %v3070, %v3232
        %v3234 = vlaneseq
        %v3235 = vshrl.u32 %v3234, 7
        %v3236 = vsub.s32 7, %v3235
        %v3237 = vrot.slane %v3071, %v3236
        %v3238 = vmul.f32 %v2054, %v3233
        %v3239 = vmul.f32 %v2054, %v3237
        %v3240 = vmul.f32 %v2055, %v3233
        %v3241 = vmul.f32 %v2055, %v3237
        %v3242 = vmul.f32 %v2056, %v3233
        %v3243 = vmul.f32 %v2056, %v3237
        %v3244 = vmul.f32 %v2057, %v3233
        %v3245 = vmul.f32 %v2057, %v3237
        %v3246 = vadd.f32 %v3222, %v3238
        %v3247 = vadd.f32 %v3223, %v3239
        %v3248 = vadd.f32 %v3224, %v3240
        %v3249 = vadd.f32 %v3225, %v3241
        %v3250 = vadd.f32 %v3226, %v3242
        %v3251 = vadd.f32 %v3227, %v3243
        %v3252 = vadd.f32 %v3228, %v3244
        %v3253 = vadd.f32 %v3229, %v3245
        %v3254 = vlaneseq
        %v3255 = vshrl.u32 %v3254, 7
        %v3256 = vsub.s32 0, %v3255
        %v3257 = vrot.slane %v3072, %v3256
        %v3258 = vlaneseq
        %v3259 = vshrl.u32 %v3258, 7
        %v3260 = vsub.s32 0, %v3259
        %v3261 = vrot.slane %v3073, %v3260
        %v3262 = vmul.f32 %v3055, %v3257
        %v3263 = vmul.f32 %v3055, %v3261
        %v3264 = vmul.f32 %v3057, %v3257
        %v3265 = vmul.f32 %v3057, %v3261
        %v3266 = vmul.f32 %v3059, %v3257
        %v3267 = vmul.f32 %v3059, %v3261
        %v3268 = vmul.f32 %v3061, %v3257
        %v3269 = vmul.f32 %v3061, %v3261
        %v3270 = vadd.f32 %v3246, %v3262
        %v3271 = vadd.f32 %v3247, %v3263
        %v3272 = vadd.f32 %v3248, %v3264
        %v3273 = vadd.f32 %v3249, %v3265
        %v3274 = vadd.f32 %v3250, %v3266
        %v3275 = vadd.f32 %v3251, %v3267
        %v3276 = vadd.f32 %v3252, %v3268
        %v3277 = vadd.f32 %v3253, %v3269
        %v3278 = vlaneseq
        %v3279 = vshrl.u32 %v3278, 7
        %v3280 = vsub.s32 1, %v3279
        %v3281 = vrot.slane %v3072, %v3280
        %v3282 = vlaneseq
        %v3283 = vshrl.u32 %v3282, 7
        %v3284 = vsub.s32 1, %v3283
        %v3285 = vrot.slane %v3073, %v3284
        %v3286 = vmul.f32 %v3063, %v3281
        %v3287 = vmul.f32 %v3063, %v3285
        %v3288 = vmul.f32 %v3065, %v3281
        %v3289 = vmul.f32 %v3065, %v3285
        %v3290 = vmul.f32 %v3067, %v3281
        %v3291 = vmul.f32 %v3067, %v3285
        %v3292 = vmul.f32 %v3069, %v3281
        %v3293 = vmul.f32 %v3069, %v3285
        %v3294 = vadd.f32 %v3270, %v3286
        %v3295 = vadd.f32 %v3271, %v3287
        %v3296 = vadd.f32 %v3272, %v3288
        %v3297 = vadd.f32 %v3273, %v3289
        %v3298 = vadd.f32 %v3274, %v3290
        %v3299 = vadd.f32 %v3275, %v3291
        %v3300 = vadd.f32 %v3276, %v3292
        %v3301 = vadd.f32 %v3277, %v3293
        %3302 = vmatprep.subr.mxu0 0.0
        %3303 = vmatpush1.msra.mxu0 0.0
        %3304 = vmatprep.subr.mxu0 0.0
        %3305 = vmatpush1.msra.mxu0 0.0
        %3306 = vmatprep.subr.mxu0 0.0
        %3307 = vmatpush1.msra.mxu0 0.0
        %3308 = vmatprep.subr.mxu0 0.0
        %3309 = vmatpush1.msra.mxu0 0.0
        %3310 = vmatprep.subr.mxu0 0.0
        %3311 = vmatpush1.msra.mxu0 0.0
        %3312 = vmatprep.subr.mxu0 0.0
        %3313 = vmatpush1.msra.mxu0 0.0
        %3314 = vmatprep.subr.mxu0 0.0
        %3315 = vmatpush1.msra.mxu0 0.0
        %3316 = vmatprep.subr.mxu0 0.0
        %3317 = vmatpush1.msra.mxu0 0.0
        %3318 = vmatprep.subr.mxu0 0.0
        %3319 = vmatpush1.msra.mxu0 0.0
        %3320 = vmatprep.subr.mxu0 0.0
        %3321 = vmatpush1.msra.mxu0 0.0
        %3322 = vmatprep.subr.mxu0 0.0
        %3323 = vmatpush1.msra.mxu0 0.0
        %3324 = vmatprep.subr.mxu0 0.0
        %3325 = vmatpush1.msra.mxu0 0.0
        %3326 = vmatprep.subr.mxu0 %v3301
        %3327 = vmatpush1.msra.mxu0 %v3300
        %3328 = vmatprep.subr.mxu0 %v3299
        %3329 = vmatpush1.msra.mxu0 %v3298
        %3330 = vmatprep.subr.mxu0 %v3297
        %3331 = vmatpush1.msra.mxu0 %v3296
        %3332 = vmatprep.subr.mxu0 %v3295
        %3333 = vmatpush1.msra.mxu0 %v3294
        %3334 = vmatprep.subr.mxu0 0.0
        %3335 = vmatpush2.msra.mxu0 0.0
        %3336 = vmatprep.subr.mxu0 0.0
        %3337 = vmatpush2.msra.mxu0 0.0
        %3338 = vmatprep.subr.mxu0 0.0
        %3339 = vmatpush2.msra.mxu0 0.0
        %3340 = vmatprep.subr.mxu0 0.0
        %3341 = vmatpush2.msra.mxu0 0.0
        %3342 = vmatprep.subr.mxu0 0.0
        %3343 = vmatpush2.msra.mxu0 0.0
        %3344 = vmatprep.subr.mxu0 0.0
        %3345 = vmatpush2.msra.mxu0 0.0
        %3346 = vmatprep.subr.mxu0 0.0
        %3347 = vmatpush2.msra.mxu0 0.0
        %3348 = vmatprep.subr.mxu0 0.0
        %3349 = vmatpush2.msra.mxu0 0.0
        %3350 = vmatprep.subr.mxu0 0.0
        %3351 = vmatpush2.msra.mxu0 0.0
        %3352 = vmatprep.subr.mxu0 0.0
        %3353 = vmatpush2.msra.mxu0 0.0
        %3354 = vmatprep.subr.mxu0 0.0
        %3355 = vmatpush2.msra.mxu0 0.0
        %3356 = vmatprep.subr.mxu0 0.0
        %3357 = vmatpush2.msra.mxu0 0.0
        %3358 = vmatprep.subr.mxu0 0.0
        %3359 = vmatpush2.msra.mxu0 0.0
        %3360 = vmatprep.subr.mxu0 0.0
        %3361 = vmatpush2.msra.mxu0 0.0
        %3362 = vmatprep.subr.mxu0 0.0
        %3363 = vmatpush2.msra.mxu0 0.0
        %3364 = vmatprep.subr.mxu0 0.0
        %3365 = vmatpush2.msra.mxu0 0.0
        %3366 = vmatprep.mubr.f32.mxu0 0.0
        %3367 = vmatmul.mubr.f32.gmra.mxu0 %v805
        %v3368 = vpop.f32.mrf.mxu0
        %v3369 = vadd.f32 0.0, %v3368
        %v3370 = vpop.f32.mrf.mxu0
        %v3371 = vadd.f32 0.0, %v3370
        %3372 = vmatprep.mubr.f32.mxu0 0.0
        %3373 = vmatmul.mubr.f32.gmra.mxu0 %v808
        %v3374 = vpop.f32.mrf.mxu0
        %v3375 = vadd.f32 0.0, %v3374
        %v3376 = vpop.f32.mrf.mxu0
        %v3377 = vadd.f32 0.0, %v3376
        %3378 = vmatprep.mubr.f32.mxu0 0.0
        %3379 = vmatmul.mubr.f32.gmra.mxu0 %v811
        %v3380 = vpop.f32.mrf.mxu0
        %v3381 = vadd.f32 0.0, %v3380
        %v3382 = vpop.f32.mrf.mxu0
        %v3383 = vadd.f32 0.0, %v3382
        %3384 = vmatprep.mubr.f32.mxu0 0.0
        %3385 = vmatmul.mubr.f32.gmra.mxu0 %v814
        %v3386 = vpop.f32.mrf.mxu0
        %v3387 = vadd.f32 0.0, %v3386
        %v3388 = vpop.f32.mrf.mxu0
        %v3389 = vadd.f32 0.0, %v3388
        %3390 = vdwg.mxu0
        %3391 = vmatprep.subr.mxu0 0.0
        %3392 = vmatpush1.msra.mxu0 0.0
        %3393 = vmatprep.subr.mxu0 0.0
        %3394 = vmatpush1.msra.mxu0 0.0
        %3395 = vmatprep.subr.mxu0 0.0
        %3396 = vmatpush1.msra.mxu0 0.0
        %3397 = vmatprep.subr.mxu0 0.0
        %3398 = vmatpush1.msra.mxu0 0.0
        %3399 = vmatprep.subr.mxu0 0.0
        %3400 = vmatpush1.msra.mxu0 0.0
        %3401 = vmatprep.subr.mxu0 0.0
        %3402 = vmatpush1.msra.mxu0 0.0
        %3403 = vmatprep.subr.mxu0 0.0
        %3404 = vmatpush1.msra.mxu0 0.0
        %3405 = vmatprep.subr.mxu0 0.0
        %3406 = vmatpush1.msra.mxu0 0.0
        %3407 = vmatprep.subr.mxu0 0.0
        %3408 = vmatpush1.msra.mxu0 0.0
        %3409 = vmatprep.subr.mxu0 0.0
        %3410 = vmatpush1.msra.mxu0 0.0
        %3411 = vmatprep.subr.mxu0 0.0
        %3412 = vmatpush1.msra.mxu0 0.0
        %3413 = vmatprep.subr.mxu0 0.0
        %3414 = vmatpush1.msra.mxu0 0.0
        %3415 = vmatprep.subr.mxu0 %v3189
        %3416 = vmatpush1.msra.mxu0 %v3188
        %3417 = vmatprep.subr.mxu0 %v3187
        %3418 = vmatpush1.msra.mxu0 %v3186
        %3419 = vmatprep.subr.mxu0 %v3185
        %3420 = vmatpush1.msra.mxu0 %v3184
        %3421 = vmatprep.subr.mxu0 %v3183
        %3422 = vmatpush1.msra.mxu0 %v3182
        %3423 = vmatprep.subr.mxu0 0.0
        %3424 = vmatpush2.msra.mxu0 0.0
        %3425 = vmatprep.subr.mxu0 0.0
        %3426 = vmatpush2.msra.mxu0 0.0
        %3427 = vmatprep.subr.mxu0 0.0
        %3428 = vmatpush2.msra.mxu0 0.0
        %3429 = vmatprep.subr.mxu0 0.0
        %3430 = vmatpush2.msra.mxu0 0.0
        %3431 = vmatprep.subr.mxu0 0.0
        %3432 = vmatpush2.msra.mxu0 0.0
        %3433 = vmatprep.subr.mxu0 0.0
        %3434 = vmatpush2.msra.mxu0 0.0
        %3435 = vmatprep.subr.mxu0 0.0
        %3436 = vmatpush2.msra.mxu0 0.0
        %3437 = vmatprep.subr.mxu0 0.0
        %3438 = vmatpush2.msra.mxu0 0.0
        %3439 = vmatprep.subr.mxu0 0.0
        %3440 = vmatpush2.msra.mxu0 0.0
        %3441 = vmatprep.subr.mxu0 0.0
        %3442 = vmatpush2.msra.mxu0 0.0
        %3443 = vmatprep.subr.mxu0 0.0
        %3444 = vmatpush2.msra.mxu0 0.0
        %3445 = vmatprep.subr.mxu0 0.0
        %3446 = vmatpush2.msra.mxu0 0.0
        %3447 = vmatprep.subr.mxu0 0.0
        %3448 = vmatpush2.msra.mxu0 0.0
        %3449 = vmatprep.subr.mxu0 0.0
        %3450 = vmatpush2.msra.mxu0 0.0
        %3451 = vmatprep.subr.mxu0 0.0
        %3452 = vmatpush2.msra.mxu0 0.0
        %3453 = vmatprep.subr.mxu0 0.0
        %3454 = vmatpush2.msra.mxu0 0.0
        %3455 = vmatprep.mubr.f32.mxu0 0.0
        %3456 = vmatmul.mubr.f32.gmra.mxu0 %v1400
        %v3457 = vpop.f32.mrf.mxu0
        %v3458 = vadd.f32 %v3369, %v3457
        %v3459 = vpop.f32.mrf.mxu0
        %v3460 = vadd.f32 %v3371, %v3459
        %3461 = vmatprep.mubr.f32.mxu0 0.0
        %3462 = vmatmul.mubr.f32.gmra.mxu0 %v1403
        %v3463 = vpop.f32.mrf.mxu0
        %v3464 = vadd.f32 %v3375, %v3463
        %v3465 = vpop.f32.mrf.mxu0
        %v3466 = vadd.f32 %v3377, %v3465
        %3467 = vmatprep.mubr.f32.mxu0 0.0
        %3468 = vmatmul.mubr.f32.gmra.mxu0 %v1406
        %v3469 = vpop.f32.mrf.mxu0
        %v3470 = vadd.f32 %v3381, %v3469
        %v3471 = vpop.f32.mrf.mxu0
        %v3472 = vadd.f32 %v3383, %v3471
        %3473 = vmatprep.mubr.f32.mxu0 0.0
        %3474 = vmatmul.mubr.f32.gmra.mxu0 %v1409
        %v3475 = vpop.f32.mrf.mxu0
        %v3476 = vadd.f32 %v3387, %v3475
        %v3477 = vpop.f32.mrf.mxu0
        %v3478 = vadd.f32 %v3389, %v3477
        %3479 = vdwg.mxu0
        %v3480 = vlaneseq
        %v3481 = vshrl.u32 %v3480, 7
        %v3482 = vsub.s32 2, %v3481
        %v3483 = vrot.slane %v3072, %v3482
        %v3484 = vlaneseq
        %v3485 = vshrl.u32 %v3484, 7
        %v3486 = vsub.s32 2, %v3485
        %v3487 = vrot.slane %v3073, %v3486
        %v3488 = vmul.f32 %v3039, %v3483
        %v3489 = vmul.f32 %v3039, %v3487
        %v3490 = vmul.f32 %v3041, %v3483
        %v3491 = vmul.f32 %v3041, %v3487
        %v3492 = vmul.f32 %v3043, %v3483
        %v3493 = vmul.f32 %v3043, %v3487
        %v3494 = vmul.f32 %v3045, %v3483
        %v3495 = vmul.f32 %v3045, %v3487
        %v3496 = vlaneseq
        %v3497 = vshrl.u32 %v3496, 7
        %v3498 = vsub.s32 3, %v3497
        %v3499 = vrot.slane %v3072, %v3498
        %v3500 = vlaneseq
        %v3501 = vshrl.u32 %v3500, 7
        %v3502 = vsub.s32 3, %v3501
        %v3503 = vrot.slane %v3073, %v3502
        %v3504 = vmul.f32 %v3047, %v3499
        %v3505 = vmul.f32 %v3047, %v3503
        %v3506 = vmul.f32 %v3049, %v3499
        %v3507 = vmul.f32 %v3049, %v3503
        %v3508 = vmul.f32 %v3051, %v3499
        %v3509 = vmul.f32 %v3051, %v3503
        %v3510 = vmul.f32 %v3053, %v3499
        %v3511 = vmul.f32 %v3053, %v3503
        %v3512 = vadd.f32 %v3488, %v3504
        %v3513 = vadd.f32 %v3489, %v3505
        %v3514 = vadd.f32 %v3490, %v3506
        %v3515 = vadd.f32 %v3491, %v3507
        %v3516 = vadd.f32 %v3492, %v3508
        %v3517 = vadd.f32 %v3493, %v3509
        %v3518 = vadd.f32 %v3494, %v3510
        %v3519 = vadd.f32 %v3495, %v3511
        %v3520 = vlaneseq
        %v3521 = vshrl.u32 %v3520, 7
        %v3522 = vsub.s32 4, %v3521
        %v3523 = vrot.slane %v3072, %v3522
        %v3524 = vlaneseq
        %v3525 = vshrl.u32 %v3524, 7
        %v3526 = vsub.s32 4, %v3525
        %v3527 = vrot.slane %v3073, %v3526
        %v3528 = vmul.f32 %v2054, %v3523
        %v3529 = vmul.f32 %v2054, %v3527
        %v3530 = vmul.f32 %v2055, %v3523
        %v3531 = vmul.f32 %v2055, %v3527
        %v3532 = vmul.f32 %v2056, %v3523
        %v3533 = vmul.f32 %v2056, %v3527
        %v3534 = vmul.f32 %v2057, %v3523
        %v3535 = vmul.f32 %v2057, %v3527
        %v3536 = vadd.f32 %v3512, %v3528
        %v3537 = vadd.f32 %v3513, %v3529
        %v3538 = vadd.f32 %v3514, %v3530
        %v3539 = vadd.f32 %v3515, %v3531
        %v3540 = vadd.f32 %v3516, %v3532
        %v3541 = vadd.f32 %v3517, %v3533
        %v3542 = vadd.f32 %v3518, %v3534
        %v3543 = vadd.f32 %v3519, %v3535
        %v3544 = vlaneseq
        %v3545 = vshrl.u32 %v3544, 7
        %v3546 = vsub.s32 5, %v3545
        %v3547 = vrot.slane %v3072, %v3546
        %v3548 = vlaneseq
        %v3549 = vshrl.u32 %v3548, 7
        %v3550 = vsub.s32 5, %v3549
        %v3551 = vrot.slane %v3073, %v3550
        %v3552 = vmul.f32 %v3055, %v3547
        %v3553 = vmul.f32 %v3055, %v3551
        %v3554 = vmul.f32 %v3057, %v3547
        %v3555 = vmul.f32 %v3057, %v3551
        %v3556 = vmul.f32 %v3059, %v3547
        %v3557 = vmul.f32 %v3059, %v3551
        %v3558 = vmul.f32 %v3061, %v3547
        %v3559 = vmul.f32 %v3061, %v3551
        %v3560 = vadd.f32 %v3536, %v3552
        %v3561 = vadd.f32 %v3537, %v3553
        %v3562 = vadd.f32 %v3538, %v3554
        %v3563 = vadd.f32 %v3539, %v3555
        %v3564 = vadd.f32 %v3540, %v3556
        %v3565 = vadd.f32 %v3541, %v3557
        %v3566 = vadd.f32 %v3542, %v3558
        %v3567 = vadd.f32 %v3543, %v3559
        %v3568 = vlaneseq
        %v3569 = vshrl.u32 %v3568, 7
        %v3570 = vsub.s32 6, %v3569
        %v3571 = vrot.slane %v3072, %v3570
        %v3572 = vlaneseq
        %v3573 = vshrl.u32 %v3572, 7
        %v3574 = vsub.s32 6, %v3573
        %v3575 = vrot.slane %v3073, %v3574
        %v3576 = vmul.f32 %v3063, %v3571
        %v3577 = vmul.f32 %v3063, %v3575
        %v3578 = vmul.f32 %v3065, %v3571
        %v3579 = vmul.f32 %v3065, %v3575
        %v3580 = vmul.f32 %v3067, %v3571
        %v3581 = vmul.f32 %v3067, %v3575
        %v3582 = vmul.f32 %v3069, %v3571
        %v3583 = vmul.f32 %v3069, %v3575
        %v3584 = vadd.f32 %v3560, %v3576
        %v3585 = vadd.f32 %v3561, %v3577
        %v3586 = vadd.f32 %v3562, %v3578
        %v3587 = vadd.f32 %v3563, %v3579
        %v3588 = vadd.f32 %v3564, %v3580
        %v3589 = vadd.f32 %v3565, %v3581
        %v3590 = vadd.f32 %v3566, %v3582
        %v3591 = vadd.f32 %v3567, %v3583
        %v3592 = vadd.f32 %v3458, %v3584
        %v3593 = vadd.f32 %v3460, %v3585
        %v3594 = vadd.f32 %v3464, %v3586
        %v3595 = vadd.f32 %v3466, %v3587
        %v3596 = vadd.f32 %v3470, %v3588
        %v3597 = vadd.f32 %v3472, %v3589
        %v3598 = vadd.f32 %v3476, %v3590
        %v3599 = vadd.f32 %v3478, %v3591
        %v3600 = vlaneseq
        %v3601 = vshrl.u32 %v3600, 7
        %v3602 = vsub.s32 7, %v3601
        %v3603 = vrot.slane %v3072, %v3602
        %v3604 = vlaneseq
        %v3605 = vshrl.u32 %v3604, 7
        %v3606 = vsub.s32 7, %v3605
        %v3607 = vrot.slane %v3073, %v3606
        %v3608 = vmul.f32 %v3039, %v3603
        %v3609 = vmul.f32 %v3039, %v3607
        %v3610 = vmul.f32 %v3041, %v3603
        %v3611 = vmul.f32 %v3041, %v3607
        %v3612 = vmul.f32 %v3043, %v3603
        %v3613 = vmul.f32 %v3043, %v3607
        %v3614 = vmul.f32 %v3045, %v3603
        %v3615 = vmul.f32 %v3045, %v3607
        %v3616 = vlaneseq
        %v3617 = vshrl.u32 %v3616, 7
        %v3618 = vsub.s32 0, %v3617
        %v3619 = vrot.slane %v3074, %v3618
        %v3620 = vlaneseq
        %v3621 = vshrl.u32 %v3620, 7
        %v3622 = vsub.s32 0, %v3621
        %v3623 = vrot.slane %v3075, %v3622
        %v3624 = vmul.f32 %v3047, %v3619
        %v3625 = vmul.f32 %v3047, %v3623
        %v3626 = vmul.f32 %v3049, %v3619
        %v3627 = vmul.f32 %v3049, %v3623
        %v3628 = vmul.f32 %v3051, %v3619
        %v3629 = vmul.f32 %v3051, %v3623
        %v3630 = vmul.f32 %v3053, %v3619
        %v3631 = vmul.f32 %v3053, %v3623
        %v3632 = vadd.f32 %v3608, %v3624
        %v3633 = vadd.f32 %v3609, %v3625
        %v3634 = vadd.f32 %v3610, %v3626
        %v3635 = vadd.f32 %v3611, %v3627
        %v3636 = vadd.f32 %v3612, %v3628
        %v3637 = vadd.f32 %v3613, %v3629
        %v3638 = vadd.f32 %v3614, %v3630
        %v3639 = vadd.f32 %v3615, %v3631
        %v3640 = vlaneseq
        %v3641 = vshrl.u32 %v3640, 7
        %v3642 = vsub.s32 1, %v3641
        %v3643 = vrot.slane %v3074, %v3642
        %v3644 = vlaneseq
        %v3645 = vshrl.u32 %v3644, 7
        %v3646 = vsub.s32 1, %v3645
        %v3647 = vrot.slane %v3075, %v3646
        %v3648 = vmul.f32 %v2054, %v3643
        %v3649 = vmul.f32 %v2054, %v3647
        %v3650 = vmul.f32 %v2055, %v3643
        %v3651 = vmul.f32 %v2055, %v3647
        %v3652 = vmul.f32 %v2056, %v3643
        %v3653 = vmul.f32 %v2056, %v3647
        %v3654 = vmul.f32 %v2057, %v3643
        %v3655 = vmul.f32 %v2057, %v3647
        %v3656 = vadd.f32 %v3632, %v3648
        %v3657 = vadd.f32 %v3633, %v3649
        %v3658 = vadd.f32 %v3634, %v3650
        %v3659 = vadd.f32 %v3635, %v3651
        %v3660 = vadd.f32 %v3636, %v3652
        %v3661 = vadd.f32 %v3637, %v3653
        %v3662 = vadd.f32 %v3638, %v3654
        %v3663 = vadd.f32 %v3639, %v3655
        %v3664 = vlaneseq
        %v3665 = vshrl.u32 %v3664, 7
        %v3666 = vsub.s32 2, %v3665
        %v3667 = vrot.slane %v3074, %v3666
        %v3668 = vlaneseq
        %v3669 = vshrl.u32 %v3668, 7
        %v3670 = vsub.s32 2, %v3669
        %v3671 = vrot.slane %v3075, %v3670
        %v3672 = vmul.f32 %v3055, %v3667
        %v3673 = vmul.f32 %v3055, %v3671
        %v3674 = vmul.f32 %v3057, %v3667
        %v3675 = vmul.f32 %v3057, %v3671
        %v3676 = vmul.f32 %v3059, %v3667
        %v3677 = vmul.f32 %v3059, %v3671
        %v3678 = vmul.f32 %v3061, %v3667
        %v3679 = vmul.f32 %v3061, %v3671
        %v3680 = vadd.f32 %v3656, %v3672
        %v3681 = vadd.f32 %v3657, %v3673
        %v3682 = vadd.f32 %v3658, %v3674
        %v3683 = vadd.f32 %v3659, %v3675
        %v3684 = vadd.f32 %v3660, %v3676
        %v3685 = vadd.f32 %v3661, %v3677
        %v3686 = vadd.f32 %v3662, %v3678
        %v3687 = vadd.f32 %v3663, %v3679
        %v3688 = vlaneseq
        %v3689 = vshrl.u32 %v3688, 7
        %v3690 = vsub.s32 3, %v3689
        %v3691 = vrot.slane %v3074, %v3690
        %v3692 = vlaneseq
        %v3693 = vshrl.u32 %v3692, 7
        %v3694 = vsub.s32 3, %v3693
        %v3695 = vrot.slane %v3075, %v3694
        %v3696 = vmul.f32 %v3063, %v3691
        %v3697 = vmul.f32 %v3063, %v3695
        %v3698 = vmul.f32 %v3065, %v3691
        %v3699 = vmul.f32 %v3065, %v3695
        %v3700 = vmul.f32 %v3067, %v3691
        %v3701 = vmul.f32 %v3067, %v3695
        %v3702 = vmul.f32 %v3069, %v3691
        %v3703 = vmul.f32 %v3069, %v3695
        %v3704 = vadd.f32 %v3680, %v3696
        %v3705 = vadd.f32 %v3681, %v3697
        %v3706 = vadd.f32 %v3682, %v3698
        %v3707 = vadd.f32 %v3683, %v3699
        %v3708 = vadd.f32 %v3684, %v3700
        %v3709 = vadd.f32 %v3685, %v3701
        %v3710 = vadd.f32 %v3686, %v3702
        %v3711 = vadd.f32 %v3687, %v3703
        %3712 = vmatprep.subr.mxu0 0.0
        %3713 = vmatpush1.msra.mxu0 0.0
        %3714 = vmatprep.subr.mxu0 0.0
        %3715 = vmatpush1.msra.mxu0 0.0
        %3716 = vmatprep.subr.mxu0 0.0
        %3717 = vmatpush1.msra.mxu0 0.0
        %3718 = vmatprep.subr.mxu0 0.0
        %3719 = vmatpush1.msra.mxu0 0.0
        %3720 = vmatprep.subr.mxu0 0.0
        %3721 = vmatpush1.msra.mxu0 0.0
        %3722 = vmatprep.subr.mxu0 0.0
        %3723 = vmatpush1.msra.mxu0 0.0
        %3724 = vmatprep.subr.mxu0 0.0
        %3725 = vmatpush1.msra.mxu0 0.0
        %3726 = vmatprep.subr.mxu0 0.0
        %3727 = vmatpush1.msra.mxu0 0.0
        %3728 = vmatprep.subr.mxu0 0.0
        %3729 = vmatpush1.msra.mxu0 0.0
        %3730 = vmatprep.subr.mxu0 0.0
        %3731 = vmatpush1.msra.mxu0 0.0
        %3732 = vmatprep.subr.mxu0 0.0
        %3733 = vmatpush1.msra.mxu0 0.0
        %3734 = vmatprep.subr.mxu0 0.0
        %3735 = vmatpush1.msra.mxu0 0.0
        %3736 = vmatprep.subr.mxu0 %v3711
        %3737 = vmatpush1.msra.mxu0 %v3710
        %3738 = vmatprep.subr.mxu0 %v3709
        %3739 = vmatpush1.msra.mxu0 %v3708
        %3740 = vmatprep.subr.mxu0 %v3707
        %3741 = vmatpush1.msra.mxu0 %v3706
        %3742 = vmatprep.subr.mxu0 %v3705
        %3743 = vmatpush1.msra.mxu0 %v3704
        %3744 = vmatprep.subr.mxu0 0.0
        %3745 = vmatpush2.msra.mxu0 0.0
        %3746 = vmatprep.subr.mxu0 0.0
        %3747 = vmatpush2.msra.mxu0 0.0
        %3748 = vmatprep.subr.mxu0 0.0
        %3749 = vmatpush2.msra.mxu0 0.0
        %3750 = vmatprep.subr.mxu0 0.0
        %3751 = vmatpush2.msra.mxu0 0.0
        %3752 = vmatprep.subr.mxu0 0.0
        %3753 = vmatpush2.msra.mxu0 0.0
        %3754 = vmatprep.subr.mxu0 0.0
        %3755 = vmatpush2.msra.mxu0 0.0
        %3756 = vmatprep.subr.mxu0 0.0
        %3757 = vmatpush2.msra.mxu0 0.0
        %3758 = vmatprep.subr.mxu0 0.0
        %3759 = vmatpush2.msra.mxu0 0.0
        %3760 = vmatprep.subr.mxu0 0.0
        %3761 = vmatpush2.msra.mxu0 0.0
        %3762 = vmatprep.subr.mxu0 0.0
        %3763 = vmatpush2.msra.mxu0 0.0
        %3764 = vmatprep.subr.mxu0 0.0
        %3765 = vmatpush2.msra.mxu0 0.0
        %3766 = vmatprep.subr.mxu0 0.0
        %3767 = vmatpush2.msra.mxu0 0.0
        %3768 = vmatprep.subr.mxu0 0.0
        %3769 = vmatpush2.msra.mxu0 0.0
        %3770 = vmatprep.subr.mxu0 0.0
        %3771 = vmatpush2.msra.mxu0 0.0
        %3772 = vmatprep.subr.mxu0 0.0
        %3773 = vmatpush2.msra.mxu0 0.0
        %3774 = vmatprep.subr.mxu0 0.0
        %3775 = vmatpush2.msra.mxu0 0.0
        %3776 = vmatprep.mubr.f32.mxu0 0.0
        %3777 = vmatmul.mubr.f32.gmra.mxu0 %v970
        %v3778 = vpop.f32.mrf.mxu0
        %v3779 = vadd.f32 0.0, %v3778
        %v3780 = vpop.f32.mrf.mxu0
        %v3781 = vadd.f32 0.0, %v3780
        %3782 = vmatprep.mubr.f32.mxu0 0.0
        %3783 = vmatmul.mubr.f32.gmra.mxu0 %v973
        %v3784 = vpop.f32.mrf.mxu0
        %v3785 = vadd.f32 0.0, %v3784
        %v3786 = vpop.f32.mrf.mxu0
        %v3787 = vadd.f32 0.0, %v3786
        %3788 = vmatprep.mubr.f32.mxu0 0.0
        %3789 = vmatmul.mubr.f32.gmra.mxu0 %v976
        %v3790 = vpop.f32.mrf.mxu0
        %v3791 = vadd.f32 0.0, %v3790
        %v3792 = vpop.f32.mrf.mxu0
        %v3793 = vadd.f32 0.0, %v3792
        %3794 = vmatprep.mubr.f32.mxu0 0.0
        %3795 = vmatmul.mubr.f32.gmra.mxu0 %v979
        %v3796 = vpop.f32.mrf.mxu0
        %v3797 = vadd.f32 0.0, %v3796
        %v3798 = vpop.f32.mrf.mxu0
        %v3799 = vadd.f32 0.0, %v3798
        %3800 = vdwg.mxu0
        %v3801 = vadd.f32 %v3592, %v3779
        %v3802 = vadd.f32 %v3593, %v3781
        %v3803 = vadd.f32 %v3594, %v3785
        %v3804 = vadd.f32 %v3595, %v3787
        %v3805 = vadd.f32 %v3596, %v3791
        %v3806 = vadd.f32 %v3597, %v3793
        %v3807 = vadd.f32 %v3598, %v3797
        %v3808 = vadd.f32 %v3599, %v3799
        %v3809 = vlaneseq
        %v3810 = vshrl.u32 %v3809, 7
        %v3811 = vsub.s32 4, %v3810
        %v3812 = vrot.slane %v3074, %v3811
        %v3813 = vlaneseq
        %v3814 = vshrl.u32 %v3813, 7
        %v3815 = vsub.s32 4, %v3814
        %v3816 = vrot.slane %v3075, %v3815
        %v3817 = vmul.f32 %v3039, %v3812
        %v3818 = vmul.f32 %v3039, %v3816
        %v3819 = vmul.f32 %v3041, %v3812
        %v3820 = vmul.f32 %v3041, %v3816
        %v3821 = vmul.f32 %v3043, %v3812
        %v3822 = vmul.f32 %v3043, %v3816
        %v3823 = vmul.f32 %v3045, %v3812
        %v3824 = vmul.f32 %v3045, %v3816
        %v3825 = vlaneseq
        %v3826 = vshrl.u32 %v3825, 7
        %v3827 = vsub.s32 5, %v3826
        %v3828 = vrot.slane %v3074, %v3827
        %v3829 = vlaneseq
        %v3830 = vshrl.u32 %v3829, 7
        %v3831 = vsub.s32 5, %v3830
        %v3832 = vrot.slane %v3075, %v3831
        %v3833 = vmul.f32 %v3047, %v3828
        %v3834 = vmul.f32 %v3047, %v3832
        %v3835 = vmul.f32 %v3049, %v3828
        %v3836 = vmul.f32 %v3049, %v3832
        %v3837 = vmul.f32 %v3051, %v3828
        %v3838 = vmul.f32 %v3051, %v3832
        %v3839 = vmul.f32 %v3053, %v3828
        %v3840 = vmul.f32 %v3053, %v3832
        %v3841 = vadd.f32 %v3817, %v3833
        %v3842 = vadd.f32 %v3818, %v3834
        %v3843 = vadd.f32 %v3819, %v3835
        %v3844 = vadd.f32 %v3820, %v3836
        %v3845 = vadd.f32 %v3821, %v3837
        %v3846 = vadd.f32 %v3822, %v3838
        %v3847 = vadd.f32 %v3823, %v3839
        %v3848 = vadd.f32 %v3824, %v3840
        %v3849 = vlaneseq
        %v3850 = vshrl.u32 %v3849, 7
        %v3851 = vsub.s32 6, %v3850
        %v3852 = vrot.slane %v3074, %v3851
        %v3853 = vlaneseq
        %v3854 = vshrl.u32 %v3853, 7
        %v3855 = vsub.s32 6, %v3854
        %v3856 = vrot.slane %v3075, %v3855
        %v3857 = vmul.f32 %v2054, %v3852
        %v3858 = vmul.f32 %v2054, %v3856
        %v3859 = vmul.f32 %v2055, %v3852
        %v3860 = vmul.f32 %v2055, %v3856
        %v3861 = vmul.f32 %v2056, %v3852
        %v3862 = vmul.f32 %v2056, %v3856
        %v3863 = vmul.f32 %v2057, %v3852
        %v3864 = vmul.f32 %v2057, %v3856
        %v3865 = vadd.f32 %v3841, %v3857
        %v3866 = vadd.f32 %v3842, %v3858
        %v3867 = vadd.f32 %v3843, %v3859
        %v3868 = vadd.f32 %v3844, %v3860
        %v3869 = vadd.f32 %v3845, %v3861
        %v3870 = vadd.f32 %v3846, %v3862
        %v3871 = vadd.f32 %v3847, %v3863
        %v3872 = vadd.f32 %v3848, %v3864
        %v3873 = vlaneseq
        %v3874 = vshrl.u32 %v3873, 7
        %v3875 = vsub.s32 7, %v3874
        %v3876 = vrot.slane %v3074, %v3875
        %v3877 = vlaneseq
        %v3878 = vshrl.u32 %v3877, 7
        %v3879 = vsub.s32 7, %v3878
        %v3880 = vrot.slane %v3075, %v3879
        %v3881 = vmul.f32 %v3055, %v3876
        %v3882 = vmul.f32 %v3055, %v3880
        %v3883 = vmul.f32 %v3057, %v3876
        %v3884 = vmul.f32 %v3057, %v3880
        %v3885 = vmul.f32 %v3059, %v3876
        %v3886 = vmul.f32 %v3059, %v3880
        %v3887 = vmul.f32 %v3061, %v3876
        %v3888 = vmul.f32 %v3061, %v3880
        %v3889 = vadd.f32 %v3865, %v3881
        %v3890 = vadd.f32 %v3866, %v3882
        %v3891 = vadd.f32 %v3867, %v3883
        %v3892 = vadd.f32 %v3868, %v3884
        %v3893 = vadd.f32 %v3869, %v3885
        %v3894 = vadd.f32 %v3870, %v3886
        %v3895 = vadd.f32 %v3871, %v3887
        %v3896 = vadd.f32 %v3872, %v3888
        %v3897 = vlaneseq
        %v3898 = vshrl.u32 %v3897, 7
        %v3899 = vsub.s32 0, %v3898
        %v3900 = vrot.slane %v3076, %v3899
        %v3901 = vlaneseq
        %v3902 = vshrl.u32 %v3901, 7
        %v3903 = vsub.s32 0, %v3902
        %v3904 = vrot.slane %v3077, %v3903
        %v3905 = vmul.f32 %v3063, %v3900
        %v3906 = vmul.f32 %v3063, %v3904
        %v3907 = vmul.f32 %v3065, %v3900
        %v3908 = vmul.f32 %v3065, %v3904
        %v3909 = vmul.f32 %v3067, %v3900
        %v3910 = vmul.f32 %v3067, %v3904
        %v3911 = vmul.f32 %v3069, %v3900
        %v3912 = vmul.f32 %v3069, %v3904
        %v3913 = vadd.f32 %v3889, %v3905
        %v3914 = vadd.f32 %v3890, %v3906
        %v3915 = vadd.f32 %v3891, %v3907
        %v3916 = vadd.f32 %v3892, %v3908
        %v3917 = vadd.f32 %v3893, %v3909
        %v3918 = vadd.f32 %v3894, %v3910
        %v3919 = vadd.f32 %v3895, %v3911
        %v3920 = vadd.f32 %v3896, %v3912
        %3921 = vmatprep.subr.mxu0 0.0
        %3922 = vmatpush1.msra.mxu0 0.0
        %3923 = vmatprep.subr.mxu0 0.0
        %3924 = vmatpush1.msra.mxu0 0.0
        %3925 = vmatprep.subr.mxu0 0.0
        %3926 = vmatpush1.msra.mxu0 0.0
        %3927 = vmatprep.subr.mxu0 0.0
        %3928 = vmatpush1.msra.mxu0 0.0
        %3929 = vmatprep.subr.mxu0 0.0
        %3930 = vmatpush1.msra.mxu0 0.0
        %3931 = vmatprep.subr.mxu0 0.0
        %3932 = vmatpush1.msra.mxu0 0.0
        %3933 = vmatprep.subr.mxu0 0.0
        %3934 = vmatpush1.msra.mxu0 0.0
        %3935 = vmatprep.subr.mxu0 0.0
        %3936 = vmatpush1.msra.mxu0 0.0
        %3937 = vmatprep.subr.mxu0 0.0
        %3938 = vmatpush1.msra.mxu0 0.0
        %3939 = vmatprep.subr.mxu0 0.0
        %3940 = vmatpush1.msra.mxu0 0.0
        %3941 = vmatprep.subr.mxu0 0.0
        %3942 = vmatpush1.msra.mxu0 0.0
        %3943 = vmatprep.subr.mxu0 0.0
        %3944 = vmatpush1.msra.mxu0 0.0
        %3945 = vmatprep.subr.mxu0 %v3920
        %3946 = vmatpush1.msra.mxu0 %v3919
        %3947 = vmatprep.subr.mxu0 %v3918
        %3948 = vmatpush1.msra.mxu0 %v3917
        %3949 = vmatprep.subr.mxu0 %v3916
        %3950 = vmatpush1.msra.mxu0 %v3915
        %3951 = vmatprep.subr.mxu0 %v3914
        %3952 = vmatpush1.msra.mxu0 %v3913
        %3953 = vmatprep.subr.mxu0 0.0
        %3954 = vmatpush2.msra.mxu0 0.0
        %3955 = vmatprep.subr.mxu0 0.0
        %3956 = vmatpush2.msra.mxu0 0.0
        %3957 = vmatprep.subr.mxu0 0.0
        %3958 = vmatpush2.msra.mxu0 0.0
        %3959 = vmatprep.subr.mxu0 0.0
        %3960 = vmatpush2.msra.mxu0 0.0
        %3961 = vmatprep.subr.mxu0 0.0
        %3962 = vmatpush2.msra.mxu0 0.0
        %3963 = vmatprep.subr.mxu0 0.0
        %3964 = vmatpush2.msra.mxu0 0.0
        %3965 = vmatprep.subr.mxu0 0.0
        %3966 = vmatpush2.msra.mxu0 0.0
        %3967 = vmatprep.subr.mxu0 0.0
        %3968 = vmatpush2.msra.mxu0 0.0
        %3969 = vmatprep.subr.mxu0 0.0
        %3970 = vmatpush2.msra.mxu0 0.0
        %3971 = vmatprep.subr.mxu0 0.0
        %3972 = vmatpush2.msra.mxu0 0.0
        %3973 = vmatprep.subr.mxu0 0.0
        %3974 = vmatpush2.msra.mxu0 0.0
        %3975 = vmatprep.subr.mxu0 0.0
        %3976 = vmatpush2.msra.mxu0 0.0
        %3977 = vmatprep.subr.mxu0 0.0
        %3978 = vmatpush2.msra.mxu0 0.0
        %3979 = vmatprep.subr.mxu0 0.0
        %3980 = vmatpush2.msra.mxu0 0.0
        %3981 = vmatprep.subr.mxu0 0.0
        %3982 = vmatpush2.msra.mxu0 0.0
        %3983 = vmatprep.subr.mxu0 0.0
        %3984 = vmatpush2.msra.mxu0 0.0
        %3985 = vmatprep.mubr.f32.mxu0 0.0
        %3986 = vmatmul.mubr.f32.gmra.mxu0 %v1942
        %v3987 = vpop.f32.mrf.mxu0
        %v3988 = vadd.f32 0.0, %v3987
        %v3989 = vpop.f32.mrf.mxu0
        %v3990 = vadd.f32 0.0, %v3989
        %3991 = vmatprep.mubr.f32.mxu0 0.0
        %3992 = vmatmul.mubr.f32.gmra.mxu0 %v1945
        %v3993 = vpop.f32.mrf.mxu0
        %v3994 = vadd.f32 0.0, %v3993
        %v3995 = vpop.f32.mrf.mxu0
        %v3996 = vadd.f32 0.0, %v3995
        %3997 = vmatprep.mubr.f32.mxu0 0.0
        %3998 = vmatmul.mubr.f32.gmra.mxu0 %v1948
        %v3999 = vpop.f32.mrf.mxu0
        %v4000 = vadd.f32 0.0, %v3999
        %v4001 = vpop.f32.mrf.mxu0
        %v4002 = vadd.f32 0.0, %v4001
        %4003 = vmatprep.mubr.f32.mxu0 0.0
        %4004 = vmatmul.mubr.f32.gmra.mxu0 %v1951
        %v4005 = vpop.f32.mrf.mxu0
        %v4006 = vadd.f32 0.0, %v4005
        %v4007 = vpop.f32.mrf.mxu0
        %v4008 = vadd.f32 0.0, %v4007
        %4009 = vdwg.mxu0
        %v4010 = vadd.f32 %v3801, %v3988
        %v4011 = vadd.f32 %v3802, %v3990
        %v4012 = vadd.f32 %v3803, %v3994
        %v4013 = vadd.f32 %v3804, %v3996
        %v4014 = vadd.f32 %v3805, %v4000
        %v4015 = vadd.f32 %v3806, %v4002
        %v4016 = vadd.f32 %v3807, %v4006
        %v4017 = vadd.f32 %v3808, %v4008
        %v4018 = vmul.f32 %v3030, %v4010
        %v4019 = vmul.f32 %v3031, %v4011
        %v4020 = vmul.f32 %v3032, %v4012
        %v4021 = vmul.f32 %v3033, %v4013
        %v4022 = vmul.f32 %v3034, %v4014
        %v4023 = vmul.f32 %v3035, %v4015
        %v4024 = vmul.f32 %v3036, %v4016
        %v4025 = vmul.f32 %v3037, %v4017
        %v4026 = vld [vmem:[#allocation13] sm:$0xff]
        %v4027 = vld [vmem:[#allocation13 + $0x8] sm:$0xff]
        %v4028 = vld [vmem:[#allocation13 + $0x10] sm:$0xff]
        %v4029 = vld [vmem:[#allocation13 + $0x18] sm:$0xff]
        %v4030 = vld [vmem:[#allocation13 + $0x20] sm:$0xff]
        %v4031 = vld [vmem:[#allocation13 + $0x28] sm:$0xff]
        %v4032 = vld [vmem:[#allocation13 + $0x30] sm:$0xff]
        %v4033 = vld [vmem:[#allocation13 + $0x38] sm:$0xff]
        %v4034 = vld [vmem:[#allocation13 + $0x40] sm:$0xff]
        %v4035 = vld [vmem:[#allocation13 + $0x48] sm:$0xff]
        %v4036 = vld [vmem:[#allocation13 + $0x50] sm:$0xff]
        %v4037 = vld [vmem:[#allocation13 + $0x58] sm:$0xff]
        %v4038 = vld [vmem:[#allocation13 + $0x60] sm:$0xff]
        %v4039 = vld [vmem:[#allocation13 + $0x68] sm:$0xff]
        %v4040 = vld [vmem:[#allocation13 + $0x70] sm:$0xff]
        %v4041 = vld [vmem:[#allocation13 + $0x78] sm:$0xff]
        %v4042 = vld [vmem:[#allocation13 + $0x80] sm:$0xff]
        %v4043 = vld [vmem:[#allocation13 + $0x88] sm:$0xff]
        %v4044 = vld [vmem:[#allocation13 + $0x90] sm:$0xff]
        %v4045 = vld [vmem:[#allocation13 + $0x98] sm:$0xff]
        %v4046 = vld [vmem:[#allocation13 + $0xa0] sm:$0xff]
        %v4047 = vld [vmem:[#allocation13 + $0xa8] sm:$0xff]
        %v4048 = vld [vmem:[#allocation13 + $0xb0] sm:$0xff]
        %v4049 = vld [vmem:[#allocation13 + $0xb8] sm:$0xff]
        %v4050 = vld [vmem:[#allocation13 + $0xc0] sm:$0xff]
        %v4051 = vld [vmem:[#allocation13 + $0xc8] sm:$0xff]
        %v4052 = vld [vmem:[#allocation13 + $0xd0] sm:$0xff]
        %v4053 = vld [vmem:[#allocation13 + $0xd8] sm:$0xff]
        %v4054 = vld [vmem:[#allocation13 + $0xe0] sm:$0xff]
        %v4055 = vld [vmem:[#allocation13 + $0xe8] sm:$0xff]
        %v4056 = vld [vmem:[#allocation13 + $0xf0] sm:$0xff]
        %v4057 = vld [vmem:[#allocation13 + $0xf8] sm:$0xff]
        %4058 = vmatprep.subr.mxu0 0.0
        %4059 = vmatpush1.msra.mxu0 %v4041
        %4060 = vmatprep.subr.mxu0 0.0
        %4061 = vmatpush1.msra.mxu0 %v4040
        %4062 = vmatprep.subr.mxu0 0.0
        %4063 = vmatpush1.msra.mxu0 %v4039
        %4064 = vmatprep.subr.mxu0 0.0
        %4065 = vmatpush1.msra.mxu0 %v4038
        %4066 = vmatprep.subr.mxu0 0.0
        %4067 = vmatpush1.msra.mxu0 %v4037
        %4068 = vmatprep.subr.mxu0 0.0
        %4069 = vmatpush1.msra.mxu0 %v4036
        %4070 = vmatprep.subr.mxu0 0.0
        %4071 = vmatpush1.msra.mxu0 %v4035
        %4072 = vmatprep.subr.mxu0 0.0
        %4073 = vmatpush1.msra.mxu0 %v4034
        %4074 = vmatprep.subr.mxu0 0.0
        %4075 = vmatpush1.msra.mxu0 %v4033
        %4076 = vmatprep.subr.mxu0 0.0
        %4077 = vmatpush1.msra.mxu0 %v4032
        %4078 = vmatprep.subr.mxu0 0.0
        %4079 = vmatpush1.msra.mxu0 %v4031
        %4080 = vmatprep.subr.mxu0 0.0
        %4081 = vmatpush1.msra.mxu0 %v4030
        %4082 = vmatprep.subr.mxu0 0.0
        %4083 = vmatpush1.msra.mxu0 %v4029
        %4084 = vmatprep.subr.mxu0 0.0
        %4085 = vmatpush1.msra.mxu0 %v4028
        %4086 = vmatprep.subr.mxu0 0.0
        %4087 = vmatpush1.msra.mxu0 %v4027
        %4088 = vmatprep.subr.mxu0 0.0
        %4089 = vmatpush1.msra.mxu0 %v4026
        %4090 = vmatprep.subr.mxu0 0.0
        %4091 = vmatpush2.msra.mxu0 %v4057
        %4092 = vmatprep.subr.mxu0 0.0
        %4093 = vmatpush2.msra.mxu0 %v4056
        %4094 = vmatprep.subr.mxu0 0.0
        %4095 = vmatpush2.msra.mxu0 %v4055
        %4096 = vmatprep.subr.mxu0 0.0
        %4097 = vmatpush2.msra.mxu0 %v4054
        %4098 = vmatprep.subr.mxu0 0.0
        %4099 = vmatpush2.msra.mxu0 %v4053
        %4100 = vmatprep.subr.mxu0 0.0
        %4101 = vmatpush2.msra.mxu0 %v4052
        %4102 = vmatprep.subr.mxu0 0.0
        %4103 = vmatpush2.msra.mxu0 %v4051
        %4104 = vmatprep.subr.mxu0 0.0
        %4105 = vmatpush2.msra.mxu0 %v4050
        %4106 = vmatprep.subr.mxu0 0.0
        %4107 = vmatpush2.msra.mxu0 %v4049
        %4108 = vmatprep.subr.mxu0 0.0
        %4109 = vmatpush2.msra.mxu0 %v4048
        %4110 = vmatprep.subr.mxu0 0.0
        %4111 = vmatpush2.msra.mxu0 %v4047
        %4112 = vmatprep.subr.mxu0 0.0
        %4113 = vmatpush2.msra.mxu0 %v4046
        %4114 = vmatprep.subr.mxu0 0.0
        %4115 = vmatpush2.msra.mxu0 %v4045
        %4116 = vmatprep.subr.mxu0 0.0
        %4117 = vmatpush2.msra.mxu0 %v4044
        %4118 = vmatprep.subr.mxu0 0.0
        %4119 = vmatpush2.msra.mxu0 %v4043
        %4120 = vmatprep.subr.mxu0 0.0
        %4121 = vmatpush2.msra.mxu0 %v4042
        %4122 = vmatprep.mubr.f32.mxu0 %v4019
        %4123 = vmatmul.mubr.f32.gmra.mxu0 %v4018
        %v4124 = vpop.f32.mrf.mxu0
        %v4125 = vadd.f32 0.0, %v4124
        %v4126 = vpop.f32.mrf.mxu0
        %4127 = vmatprep.mubr.f32.mxu0 %v4021
        %4128 = vmatmul.mubr.f32.gmra.mxu0 %v4020
        %v4129 = vpop.f32.mrf.mxu0
        %v4130 = vadd.f32 0.0, %v4129
        %v4131 = vpop.f32.mrf.mxu0
        %4132 = vmatprep.mubr.f32.mxu0 %v4023
        %4133 = vmatmul.mubr.f32.gmra.mxu0 %v4022
        %v4134 = vpop.f32.mrf.mxu0
        %v4135 = vadd.f32 0.0, %v4134
        %v4136 = vpop.f32.mrf.mxu0
        %4137 = vmatprep.mubr.f32.mxu0 %v4025
        %4138 = vmatmul.mubr.f32.gmra.mxu0 %v4024
        %v4139 = vpop.f32.mrf.mxu0
        %v4140 = vadd.f32 0.0, %v4139
        %v4141 = vpop.f32.mrf.mxu0
        %4142 = vdwg.mxu0
        %4143 = vst [vmem:[%s425] sm:$0xff] %v4125
        %4144 = vst [vmem:[%s425 + $0x8] sm:$0xff] %v4130
        %4145 = vst [vmem:[%s425 + $0x10] sm:$0xff] %v4135
        %4146 = vst [vmem:[%s425 + $0x18] sm:$0xff] %v4140
        %s4147 = sand.u32 %s210, 1
        %s4148 = scalar_lea.sflag [#allocation4], %s4147
        %s4149 = sand.u32 %s210, 1
        %s4150 = smul.addr %s4149, 32
        %s4151 = scalar_lea.vmem [#allocation16], %s4150
        // Predicated region
        $region85: #{tpu_custom_call.1} parent=51 // pred_check
          %p4152 = pneg %p220
        $region86: #{tpu_custom_call.1} parent=51 // pred_check_branch
          %4154 = sbr.rel (%p4152) target = $region88
        $region87: #{tpu_custom_call.1} parent=51 // pred_region
          %s4155 = smul.u32 4, %s29
          %s4157 = ssub.s32 512, 512
          %4158 = vsyncadd %s4148, %s4157
          %s4159 = smul.addr %s4155, 128
          %s4160 = scalar_lea.hbm %s8, %s4159
          %s4161 = sshll.u32 %s4151, 4
          %s4162 = int_to_ptr.vmem [resolvable:$true] %s4161
          %4167 = dma.vmem_to_hbm [thread:$0]  %s4162, 512, %s4160, %s4148, 128, 128, 8
        $region88: #{tpu_custom_call.1} parent=51 // pred_fallthru
          _
      $region52: #{tpu_custom_call.1} parent=5 // pred_fallthru
        _
      %p4168 = scmp.le.s32.totalorder 2, %s24
      // Predicated region
      $region89: #{tpu_custom_call.1} parent=5 // pred_check
        %p4169 = pneg %p4168
      $region90: #{tpu_custom_call.1} parent=5 // pred_check_branch
        %4171 = sbr.rel (%p4169) target = $region92
      $region91: #{tpu_custom_call.1} parent=5 // pred_region
        %s4172 = ssub.s32 %s24, 2
        // Predicated region
        $region93: #{tpu_custom_call.1} parent=91 // pred_check
          %p4173 = pneg %p226
        $region94: #{tpu_custom_call.1} parent=91 // pred_check_branch
          %4175 = sbr.rel (%p4173) target = $region96
        $region95: #{tpu_custom_call.1} parent=91 // pred_region
          %s4176 = sand.u32 %s211, 1
          %s4177 = scalar_lea.sflag [#allocation4], %s4176
          %s4178 = sand.u32 %s211, 1
          %s4179 = smul.addr %s4178, 32
          %s4180 = scalar_lea.vmem [#allocation16], %s4179
          %4181 = dma.done %s4177, 512
        $region96: #{tpu_custom_call.1} parent=91 // pred_fallthru
          _
      $region92: #{tpu_custom_call.1} parent=5 // pred_fallthru
        _
    $region6: #{tpu_custom_call.1} parent=1 // loop_footer
      %s28 = sadd.s32 1, %s24
    $region7: #{tpu_custom_call.1} parent=1 // loop_footer_branch
      %23 = sbr.rel target = $region3
    $region8: #{tpu_custom_call.1} parent=1 // loop_exit
      _
    %4182 = vsyncpa [#allocation3], 1
    %s4183 = scalar_lea.sflag [#allocation3], 1
    %4184 = vsyncpa %s4183, 1
    %4185 = vsyncpa [#allocation6], 1
    %4186 = vsyncpa [#allocation9], 1
    %4187 = vsyncpa [#allocation12], 1
    %4188 = vsyncpa [#allocation15], 1
    %4189 = vsyncpa [#allocation4], 1
    %s4190 = scalar_lea.sflag [#allocation4], 1
    %4191 = vsyncpa %s4190, 1

</llo_original>
